<compile_context>
chip_gen: v5e
topology: v5e:2x2
jax: 0.10.0
libtpu: 0.0.40
codegen_flags: <defaults>
</compile_context>

<pallas_src>
import jax
import jax.numpy as jnp
import numpy as np
from jax.experimental import pallas as pl
from jax.experimental.pallas import tpu as pltpu


# ----------------------------- static geometry ------------------------------

K = 5                         # conv kernel size
H_IN, W_IN = 20, 32           # input spatial size implied by fc1=Linear(200,50)
O1, O2 = 10, 20               # conv1 / conv2 output channels
F1 = 50                       # fc1 width
H1, W1 = H_IN - K + 1, W_IN - K + 1     # 16, 28  (conv1 output)
HP1, WP1 = H1 // 2, W1 // 2             # 8, 14   (after 2x2 pool)
H2, W2 = HP1 - K + 1, WP1 - K + 1       # 4, 10   (conv2 output)
HP2, WP2 = H2 // 2, W2 // 2             # 2, 5    (after 2x2 pool)

P1 = 256                      # padded lane width of one conv1 pool-parity block (>= WP1*O1=140)
P2H = 128                     # padded lane width of one conv2 pool-parity block (>= WP2*O2=100)
P2BLK = 2 * P2H               # one conv2 kh-block (both w-parities)
F1P = 128                     # padded fc1 width (>= 50)
NCP = 128                     # padded, lane-dense fc2/output width (>= num_classes)

B = 8                         # images per grid step  -> conv1 matmul M = 128
R1 = B * 2 * HP1              # 128 conv1 rows per step (parity-major, image, pooled-h)
RY = B * HP1                  # 64  pooled conv1 rows per step (image, pooled-h)
RPAD = RY + 8                 # 72  rows after zero-pad so row shifts stay in-bounds
RC2 = 68                      # conv2-accumulated rows kept (>= 67 needed downstream)
RH = 66                       # rows kept after conv2 h-pool (>= RY + 2)

assert HP2 * WP2 * O2 == 200  # must match fc1 in-features


# ------------------------------ fused kernel --------------------------------

def _cnn_fused_kernel(lhs1_ref, a1_ref, b1_ref, a2_ref, b2_ref,
                      wf1_ref, bf1_ref, wf2_ref, bf2_ref, out_ref):
    """Whole CNNMnist forward for B images (one grid step)."""
    # ---- conv1: single wide-Toeplitz matmul (M=128) + 2x2 max-pool + bias + relu
    c1 = jnp.dot(lhs1_ref[...], a1_ref[...],
                 preferred_element_type=jnp.float32)              # (128, 2*P1) f32
    # rows 0:64 are h-parity 0, rows 64:128 h-parity 1 (both ordered (img, hp)).
    hpool1 = jnp.maximum(c1[0:RY, :], c1[RY:R1, :])               # (64, 2*P1)  pool over h
    pooled1 = jnp.maximum(hpool1[:, 0:P1], hpool1[:, P1:2 * P1])  # (64, P1)    pool over w
    y1 = jnp.maximum(pooled1 + b1_ref[...], 0.0)                  # rows=(img,hp), lanes=(wp1,ch)
    y1 = y1.astype(jnp.bfloat16)
    y1p = jnp.concatenate(
        [y1, jnp.zeros((RPAD - RY, P1), jnp.bfloat16)], axis=0)   # (72, P1)

    # ---- conv2: one wide matmul + kh-diagonal row accumulation, pool, bias, relu
    big = jnp.dot(y1p, a2_ref[...],
                  preferred_element_type=jnp.float32)             # (72, K*P2BLK)
    c2 = big[0:RC2, 0:P2BLK]
    for kh in range(1, K):                                        # static unroll
        c2 = c2 + big[kh:kh + RC2, kh * P2BLK:(kh + 1) * P2BLK]   # (68, P2BLK)
    wpool2 = jnp.maximum(c2[:, 0:P2H], c2[:, P2H:P2BLK])          # (68, P2H)  pool over w
    hpool2 = jnp.maximum(wpool2[0:RH, :], wpool2[1:RH + 1, :])    # (66, P2H)  pool over h
    y2 = jnp.maximum(hpool2 + b2_ref[...], 0.0)                   # (66, P2H); valid rows img*8+{0,2}

    # ---- fc1 as ONE fused matmul over [hp2=0 | hp2=1] lane blocks + relu
    #      (dropout = identity, eval)
    y2cat = jnp.concatenate([y2[0:RY, :], y2[2:RY + 2, :]],
                            axis=1).astype(jnp.bfloat16)          # (64, 2*P2H); valid rows img*8
    h = jnp.dot(y2cat, wf1_ref[...],
                preferred_element_type=jnp.float32) + bf1_ref[...]
    h = jnp.maximum(h, 0.0).astype(jnp.bfloat16)                  # (64, F1P)

    # ---- fc2 + log_softmax; lane-dense 128-wide store (padded bias = -1e30)
    logits = jnp.dot(h, wf2_ref[...],
                     preferred_element_type=jnp.float32) + bf2_ref[...]   # (64, NCP)
    m = jnp.max(logits, axis=-1, keepdims=True)
    s = logits - m
    lse = jnp.log(jnp.sum(jnp.exp(s), axis=-1, keepdims=True))
    out_ref[...] = s - lse                                        # valid rows: img*HP1


# --------------------- one-time host-side weight repack ----------------------

def prepare_params(params):
    """Repack PyTorch-layout weights into the bf16, MXU-friendly matrices used
    by the fused kernel (folds im2col, layout transposes, pool-parity split and
    the fc1 fuse / fc2 lane-padding into a one-time permutation/expansion)."""
    w1, b1, w2, b2, wf1, bf1, wf2, bf2 = [np.asarray(p, np.float32) for p in params]
    c_in = w1.shape[1]
    nc = wf2.shape[1]
    wc = W_IN * c_in

    # conv1 -> a1: rows (kh, w_in, c_in); cols = 2 w-parity blocks of width P1,
    # each holding (wp1, out_ch) in its first WP1*O1 lanes (rest zero-padded).
    a1 = np.zeros((K * wc, 2 * P1), np.float32)
    for kh in range(K):
        for kw in range(K):
            for wo in range(W1):
                pj, wp = wo % 2, wo // 2
                r0 = kh * wc + (wo + kw) * c_in
                c0 = pj * P1 + wp * O1
                a1[r0:r0 + c_in, c0:c0 + O1] = w1[:, :, kh, kw].T
    b1w = np.zeros((1, P1), np.float32)
    b1w[0, :WP1 * O1] = np.tile(b1, WP1)

    # conv2 -> a2: rows (wp1, c1) padded to P1; cols = K kh-blocks of width
    # P2BLK, each split into 2 w-parity sub-blocks of width P2H with (wp2, o).
    a2 = np.zeros((P1, K * P2BLK), np.float32)
    for kh in range(K):
        for kw in range(K):
            for wo in range(W2):
                pj, wp = wo % 2, wo // 2
                r0 = (wo + kw) * O1
                c0 = kh * P2BLK + pj * P2H + wp * O2
                a2[r0:r0 + O1, c0:c0 + O2] = w2[:, :, kh, kw].T
    b2w = np.zeros((1, P2H), np.float32)
    b2w[0, :WP2 * O2] = np.tile(b2, WP2)

    # fc1: permute torch's (c, h, w) flatten order to the kernel's (wp2, c) lane
    # order, stack the hp2=0 block over the hp2=1 block (one fused K=256 matmul),
    # pad out-features to F1P lanes.
    t = wf1.reshape(O2, HP2, WP2, F1).transpose(1, 2, 0, 3).reshape(HP2, WP2 * O2, F1)
    wf1s = np.zeros((2 * P2H, F1P), np.float32)
    wf1s[0:WP2 * O2, :F1] = t[0]
    wf1s[P2H:P2H + WP2 * O2, :F1] = t[1]
    bf1p = np.zeros((1, F1P), np.float32)
    bf1p[0, :F1] = bf1

    # fc2: pad to a lane-dense 128-wide output; padded bias lanes carry -1e30 so
    # they vanish under the log_softmax max / logsumexp.
    wf2p = np.zeros((F1P, NCP), np.float32)
    wf2p[:F1, :nc] = wf2
    bf2p = np.full((1, NCP), -1e30, np.float32)
    bf2p[0, :nc] = bf2

    return (jnp.asarray(a1).astype(jnp.bfloat16), jnp.asarray(b1w),
            jnp.asarray(a2).astype(jnp.bfloat16), jnp.asarray(b2w),
            jnp.asarray(wf1s).astype(jnp.bfloat16), jnp.asarray(bf1p),
            jnp.asarray(wf2p).astype(jnp.bfloat16), jnp.asarray(bf2p))


# ------------------------------- forward pass --------------------------------

def _build_lhs1(x, n_pad):
    """im2row along H for conv1, flattened so each grid block of 128 rows is
    ordered (h-parity, image-in-block, pooled-h).

    Per image:  lhs1[pi, hp, kh*(W*C) + w*C + c] = x[c, 2*hp + pi + kh, w]
    Built from static (strided) slices / concats / reshapes only -- no gathers.
    """
    n, c, h, w = x.shape
    xw = jnp.transpose(x, (0, 2, 3, 1)).reshape(n, h, w * c)       # rows=h, lanes=(w, c)
    par = []
    for pi in range(2):
        lanes = [xw[:, pi + kh::2, :][:, :HP1, :] for kh in range(K)]
        par.append(jnp.concatenate(lanes, axis=2))                 # (n, HP1, K*W*C)
    lhs = jnp.stack(par, axis=0)                                   # (2, n, HP1, kwin)
    if n_pad != n:
        lhs = jnp.pad(lhs, ((0, 0), (0, n_pad - n), (0, 0), (0, 0)))
    kwin = lhs.shape[-1]
    lhs = lhs.reshape(2, n_pad // B, B, HP1, kwin).transpose(1, 0, 2, 3, 4)
    return lhs.reshape(n_pad * 2 * HP1, kwin)                      # (n_pad*16, kwin)


def cnn_mnist_forward(x, prepared, num_classes):
    (a1, b1w, a2, b2w, wf1s, bf1p, wf2p, bf2p) = prepared
    n = x.shape[0]
    num_blocks = pl.cdiv(n, B)
    n_pad = num_blocks * B

    lhs1 = _build_lhs1(x, n_pad).astype(jnp.bfloat16)              # (n_pad*16, kwin)
    kwin = lhs1.shape[-1]
    operands = (lhs1, a1, b1w, a2, b2w, wf1s, bf1p, wf2p, bf2p)

    # Advisory cost: real conv/fc arithmetic, not the zero-padded Toeplitz.
    flops = 2 * n * (O1 * H1 * W1 * (x.shape[1] * K * K)
                     + O2 * H2 * W2 * (O1 * K * K)
                     + (HP2 * WP2 * O2) * F1 + F1 * NCP)
    bytes_accessed = (sum(int(np.prod(o.shape)) * o.dtype.itemsize for o in operands)
                      + n_pad * HP1 * NCP * 4)

    def _whole(arr):
        nd = arr.ndim
        return pl.BlockSpec(arr.shape, lambda i: (0,) * nd)

    out = pl.pallas_call(
        _cnn_fused_kernel,
        out_shape=jax.ShapeDtypeStruct((n_pad * HP1, NCP), jnp.float32),
        grid=(num_blocks,),
        in_specs=[pl.BlockSpec((R1, kwin), lambda i: (i, 0))]
                 + [_whole(a) for a in operands[1:]],
        out_specs=pl.BlockSpec((B * HP1, NCP), lambda i: (i, 0)),
        compiler_params=pltpu.CompilerParams(
            dimension_semantics=("parallel",)),
        cost_estimate=pl.CostEstimate(flops=int(flops),
                                      transcendentals=int(n_pad * HP1 * (NCP + 1)),
                                      bytes_accessed=int(bytes_accessed)),
    )(*operands)
    # One valid row per image (local row 0 of each HP1-row group); real classes
    # live in the first `num_classes` of the 128 lane-dense output lanes.
    return out.reshape(n_pad, HP1, NCP)[:n, 0, :num_classes]


# --------------------------- reference (pure JAX) ----------------------------

def reference_forward(x, params):
    (w1, b1, w2, b2, wf1, bf1, wf2, bf2) = params
    dn = ("NCHW", "OIHW", "NCHW")
    y = jax.lax.conv_general_dilated(x, w1, (1, 1), "VALID", dimension_numbers=dn)
    y = y + b1[None, :, None, None]
    y = jax.lax.reduce_window(y, -jnp.inf, jax.lax.max,
                              (1, 1, 2, 2), (1, 1, 2, 2), "VALID")
    y = jnp.maximum(y, 0.0)
    y = jax.lax.conv_general_dilated(y, w2, (1, 1), "VALID", dimension_numbers=dn)
    y = y + b2[None, :, None, None]
    y = jax.lax.reduce_window(y, -jnp.inf, jax.lax.max,
                              (1, 1, 2, 2), (1, 1, 2, 2), "VALID")
    y = jnp.maximum(y, 0.0)
    y = y.reshape(y.shape[0], -1)
    y = jnp.maximum(y @ wf1 + bf1, 0.0)
    logits = y @ wf2 + bf2
    return jax.nn.log_softmax(logits, axis=1)


# ---------------------------------- main -------------------------------------

def _init_params(key, num_channels, num_classes):
    """Deterministic synthetic params (PyTorch-like uniform +/- 1/sqrt(fan_in))."""
    ks = jax.random.split(key, 8)

    def u(k, shape, fan_in):
        b = 1.0 / np.sqrt(fan_in)
        return jax.random.uniform(k, shape, jnp.float32, -b, b)

    w1 = u(ks[0], (O1, num_channels, K, K), num_channels * K * K)
    b1 = u(ks[1], (O1,), num_channels * K * K)
    w2 = u(ks[2], (O2, O1, K, K), O1 * K * K)
    b2 = u(ks[3], (O2,), O1 * K * K)
    wf1 = u(ks[4], (HP2 * WP2 * O2, F1), HP2 * WP2 * O2)   # stored (in, out)
    bf1 = u(ks[5], (F1,), HP2 * WP2 * O2)
    wf2 = u(ks[6], (F1, num_classes), F1)
    bf2 = u(ks[7], (num_classes,), F1)
    return (w1, b1, w2, b2, wf1, bf1, wf2, bf2)


if __name__ == "__main__":
    num_channels, num_classes = 1, 10
    key = jax.random.PRNGKey(0)
    kx, kp = jax.random.split(key)

    # NCHW input; (20, 32) spatial so the flattened conv features == 200.
    # n=10 exercises two grid steps plus the batch-padding path (10 -> 16).
    n = 10
    x = jax.random.normal(kx, (n, num_channels, H_IN, W_IN), dtype=jnp.float32)
    params = _init_params(kp, num_channels, num_classes)

    prepared = prepare_params(params)                 # one-time weight repack
    fwd = jax.jit(cnn_mnist_forward, static_argnums=2)

    out = jax.block_until_ready(fwd(x, prepared, num_classes))
    ref = jax.block_until_ready(reference_forward(x, params))

    assert out.shape == (n, num_classes), out.shape
    # bf16 MXU inputs with f32 accumulation -> relaxed tolerance.
    np.testing.assert_allclose(np.asarray(out), np.asarray(ref),
                               rtol=3e-2, atol=3e-2)
    print("KERNEL_OK")
</pallas_src>

<mosaic_0001>
module attributes {stable_mosaic.version = 11 : i64} {
  func.func @_cnn_fused_kernel(%arg0: i32, %arg1: memref<128x160xbf16, #tpu.memory_space<vmem>>, %arg2: memref<160x512xbf16, #tpu.memory_space<vmem>>, %arg3: memref<1x256xf32, #tpu.memory_space<vmem>>, %arg4: memref<256x1280xbf16, #tpu.memory_space<vmem>>, %arg5: memref<1x128xf32, #tpu.memory_space<vmem>>, %arg6: memref<256x128xbf16, #tpu.memory_space<vmem>>, %arg7: memref<1x128xf32, #tpu.memory_space<vmem>>, %arg8: memref<128x128xbf16, #tpu.memory_space<vmem>>, %arg9: memref<1x128xf32, #tpu.memory_space<vmem>>, %arg10: memref<64x128xf32, #tpu.memory_space<vmem>>) attributes {dimension_semantics = [#tpu.dimension_semantics<parallel>], iteration_bounds = array<i64: 2>, scalar_prefetch = 0 : i64, scratch_operands = 0 : i64, tpu.core_type = #tpu.core_type<tc>, window_params = [{transform_indices = @transform_0, window_bounds = array<i64: 128, 160>}, {pipeline_mode = #tpu.pipeline_mode<synchronous>, transform_indices = @transform_1, window_bounds = array<i64: 160, 512>}, {pipeline_mode = #tpu.pipeline_mode<synchronous>, transform_indices = @transform_2, window_bounds = array<i64: 1, 256>}, {pipeline_mode = #tpu.pipeline_mode<synchronous>, transform_indices = @transform_3, window_bounds = array<i64: 256, 1280>}, {pipeline_mode = #tpu.pipeline_mode<synchronous>, transform_indices = @transform_4, window_bounds = array<i64: 1, 128>}, {pipeline_mode = #tpu.pipeline_mode<synchronous>, transform_indices = @transform_5, window_bounds = array<i64: 256, 128>}, {pipeline_mode = #tpu.pipeline_mode<synchronous>, transform_indices = @transform_6, window_bounds = array<i64: 1, 128>}, {pipeline_mode = #tpu.pipeline_mode<synchronous>, transform_indices = @transform_7, window_bounds = array<i64: 128, 128>}, {pipeline_mode = #tpu.pipeline_mode<synchronous>, transform_indices = @transform_8, window_bounds = array<i64: 1, 128>}, {transform_indices = @transform_9, window_bounds = array<i64: 64, 128>}]} {
    %c0 = arith.constant 0 : index
    %c0_0 = arith.constant 0 : index
    %0 = vector.load %arg1[%c0, %c0_0] : memref<128x160xbf16, #tpu.memory_space<vmem>>, vector<128x160xbf16>
    %c0_1 = arith.constant 0 : index
    %c0_2 = arith.constant 0 : index
    %1 = vector.load %arg2[%c0_1, %c0_2] : memref<160x512xbf16, #tpu.memory_space<vmem>>, vector<160x512xbf16>
    %cst = arith.constant dense<0.000000e+00> : vector<128x512xf32>
    %2 = tpu.matmul %0, %1, %cst {dimension_numbers = #tpu.dot_dimension_numbers<[1], [0], [0], [1], [0, 0, 1, 1], [], []>} : vector<128x160xbf16>, vector<160x512xbf16>, vector<128x512xf32> -> vector<128x512xf32>
    %3 = vector.extract_strided_slice %2 {offsets = [0, 0], sizes = [64, 512], strides = [1, 1]} : vector<128x512xf32> to vector<64x512xf32>
    %4 = vector.extract_strided_slice %2 {offsets = [64, 0], sizes = [64, 512], strides = [1, 1]} : vector<128x512xf32> to vector<64x512xf32>
    %5 = arith.maximumf %3, %4 : vector<64x512xf32>
    %6 = vector.extract_strided_slice %5 {offsets = [0, 0], sizes = [64, 256], strides = [1, 1]} : vector<64x512xf32> to vector<64x256xf32>
    %7 = vector.extract_strided_slice %5 {offsets = [0, 256], sizes = [64, 256], strides = [1, 1]} : vector<64x512xf32> to vector<64x256xf32>
    %8 = arith.maximumf %6, %7 : vector<64x256xf32>
    %c0_3 = arith.constant 0 : index
    %c0_4 = arith.constant 0 : index
    %9 = vector.load %arg3[%c0_3, %c0_4] : memref<1x256xf32, #tpu.memory_space<vmem>>, vector<1x256xf32>
    %10 = vector.broadcast %9 : vector<1x256xf32> to vector<64x256xf32>
    %11 = arith.addf %8, %10 : vector<64x256xf32>
    %cst_5 = arith.constant 0.000000e+00 : f32
    %12 = vector.broadcast %cst_5 : f32 to vector<64x256xf32>
    %13 = arith.maximumf %11, %12 : vector<64x256xf32>
    %14 = arith.truncf %13 : vector<64x256xf32> to vector<64x256xbf16>
    %cst_6 = arith.constant 0.000000e+00 : bf16
    %15 = vector.broadcast %cst_6 : bf16 to vector<8x256xbf16>
    %16 = tpu.concatenate %14, %15 in 0 : vector<64x256xbf16>, vector<8x256xbf16> -> vector<72x256xbf16>
    %c0_7 = arith.constant 0 : index
    %c0_8 = arith.constant 0 : index
    %17 = vector.load %arg4[%c0_7, %c0_8] : memref<256x1280xbf16, #tpu.memory_space<vmem>>, vector<256x1280xbf16>
    %cst_9 = arith.constant dense<0.000000e+00> : vector<72x1280xf32>
    %18 = tpu.matmul %16, %17, %cst_9 {dimension_numbers = #tpu.dot_dimension_numbers<[1], [0], [0], [1], [0, 0, 1, 1], [], []>} : vector<72x256xbf16>, vector<256x1280xbf16>, vector<72x1280xf32> -> vector<72x1280xf32>
    %19 = vector.extract_strided_slice %18 {offsets = [0, 0], sizes = [68, 256], strides = [1, 1]} : vector<72x1280xf32> to vector<68x256xf32>
    %20 = vector.extract_strided_slice %18 {offsets = [1, 256], sizes = [68, 256], strides = [1, 1]} : vector<72x1280xf32> to vector<68x256xf32>
    %21 = arith.addf %19, %20 : vector<68x256xf32>
    %22 = vector.extract_strided_slice %18 {offsets = [2, 512], sizes = [68, 256], strides = [1, 1]} : vector<72x1280xf32> to vector<68x256xf32>
    %23 = arith.addf %21, %22 : vector<68x256xf32>
    %24 = vector.extract_strided_slice %18 {offsets = [3, 768], sizes = [68, 256], strides = [1, 1]} : vector<72x1280xf32> to vector<68x256xf32>
    %25 = arith.addf %23, %24 : vector<68x256xf32>
    %26 = vector.extract_strided_slice %18 {offsets = [4, 1024], sizes = [68, 256], strides = [1, 1]} : vector<72x1280xf32> to vector<68x256xf32>
    %27 = arith.addf %25, %26 : vector<68x256xf32>
    %28 = vector.extract_strided_slice %27 {offsets = [0, 0], sizes = [68, 128], strides = [1, 1]} : vector<68x256xf32> to vector<68x128xf32>
    %29 = vector.extract_strided_slice %27 {offsets = [0, 128], sizes = [68, 128], strides = [1, 1]} : vector<68x256xf32> to vector<68x128xf32>
    %30 = arith.maximumf %28, %29 : vector<68x128xf32>
    %31 = vector.extract_strided_slice %30 {offsets = [0, 0], sizes = [66, 128], strides = [1, 1]} : vector<68x128xf32> to vector<66x128xf32>
    %32 = vector.extract_strided_slice %30 {offsets = [1, 0], sizes = [66, 128], strides = [1, 1]} : vector<68x128xf32> to vector<66x128xf32>
    %33 = arith.maximumf %31, %32 : vector<66x128xf32>
    %c0_10 = arith.constant 0 : index
    %c0_11 = arith.constant 0 : index
    %34 = vector.load %arg5[%c0_10, %c0_11] : memref<1x128xf32, #tpu.memory_space<vmem>>, vector<1x128xf32>
    %35 = vector.broadcast %34 : vector<1x128xf32> to vector<66x128xf32>
    %36 = arith.addf %33, %35 : vector<66x128xf32>
    %cst_12 = arith.constant 0.000000e+00 : f32
    %37 = vector.broadcast %cst_12 : f32 to vector<66x128xf32>
    %38 = arith.maximumf %36, %37 : vector<66x128xf32>
    %39 = vector.extract_strided_slice %38 {offsets = [0, 0], sizes = [64, 128], strides = [1, 1]} : vector<66x128xf32> to vector<64x128xf32>
    %40 = vector.extract_strided_slice %38 {offsets = [2, 0], sizes = [64, 128], strides = [1, 1]} : vector<66x128xf32> to vector<64x128xf32>
    %41 = tpu.concatenate %39, %40 in 1 : vector<64x128xf32>, vector<64x128xf32> -> vector<64x256xf32>
    %42 = arith.truncf %41 : vector<64x256xf32> to vector<64x256xbf16>
    %c0_13 = arith.constant 0 : index
    %c0_14 = arith.constant 0 : index
    %43 = vector.load %arg6[%c0_13, %c0_14] : memref<256x128xbf16, #tpu.memory_space<vmem>>, vector<256x128xbf16>
    %cst_15 = arith.constant dense<0.000000e+00> : vector<64x128xf32>
    %44 = tpu.matmul %42, %43, %cst_15 {dimension_numbers = #tpu.dot_dimension_numbers<[1], [0], [0], [1], [0, 0, 1, 1], [], []>} : vector<64x256xbf16>, vector<256x128xbf16>, vector<64x128xf32> -> vector<64x128xf32>
    %c0_16 = arith.constant 0 : index
    %c0_17 = arith.constant 0 : index
    %45 = vector.load %arg7[%c0_16, %c0_17] : memref<1x128xf32, #tpu.memory_space<vmem>>, vector<1x128xf32>
    %46 = vector.broadcast %45 : vector<1x128xf32> to vector<64x128xf32>
    %47 = arith.addf %44, %46 : vector<64x128xf32>
    %cst_18 = arith.constant 0.000000e+00 : f32
    %48 = vector.broadcast %cst_18 : f32 to vector<64x128xf32>
    %49 = arith.maximumf %47, %48 : vector<64x128xf32>
    %50 = arith.truncf %49 : vector<64x128xf32> to vector<64x128xbf16>
    %c0_19 = arith.constant 0 : index
    %c0_20 = arith.constant 0 : index
    %51 = vector.load %arg8[%c0_19, %c0_20] : memref<128x128xbf16, #tpu.memory_space<vmem>>, vector<128x128xbf16>
    %cst_21 = arith.constant dense<0.000000e+00> : vector<64x128xf32>
    %52 = tpu.matmul %50, %51, %cst_21 {dimension_numbers = #tpu.dot_dimension_numbers<[1], [0], [0], [1], [0, 0, 1, 1], [], []>} : vector<64x128xbf16>, vector<128x128xbf16>, vector<64x128xf32> -> vector<64x128xf32>
    %c0_22 = arith.constant 0 : index
    %c0_23 = arith.constant 0 : index
    %53 = vector.load %arg9[%c0_22, %c0_23] : memref<1x128xf32, #tpu.memory_space<vmem>>, vector<1x128xf32>
    %54 = vector.broadcast %53 : vector<1x128xf32> to vector<64x128xf32>
    %55 = arith.addf %52, %54 : vector<64x128xf32>
    %cst_24 = arith.constant dense<0xFF800000> : vector<64xf32>
    %56 = vector.multi_reduction <maximumf>, %55, %cst_24 [1] : vector<64x128xf32> to vector<64xf32>
    %57 = vector.shape_cast %56 : vector<64xf32> to vector<64x1xf32>
    %58 = vector.broadcast %57 : vector<64x1xf32> to vector<64x128xf32>
    %59 = arith.subf %55, %58 : vector<64x128xf32>
    %60 = math.exp %59 : vector<64x128xf32>
    %cst_25 = arith.constant dense<0.000000e+00> : vector<64xf32>
    %61 = vector.multi_reduction <add>, %60, %cst_25 [1] : vector<64x128xf32> to vector<64xf32>
    %62 = vector.shape_cast %61 : vector<64xf32> to vector<64x1xf32>
    %63 = math.log %62 : vector<64x1xf32>
    %64 = vector.broadcast %63 : vector<64x1xf32> to vector<64x128xf32>
    %65 = arith.subf %59, %64 : vector<64x128xf32>
    %c0_26 = arith.constant 0 : index
    %c0_27 = arith.constant 0 : index
    %66 = vector.load %arg10[%c0_26, %c0_27] : memref<64x128xf32, #tpu.memory_space<vmem>>, vector<64x128xf32>
    tpu.vector_store %arg10[%c0_26, %c0_27], %65 {strides = array<i32>} : memref<64x128xf32, #tpu.memory_space<vmem>>, vector<64x128xf32>,
    return
  }
  func.func @transform_0(%arg0: i32) -> (i32, i32) {
    %c0_i32 = arith.constant 0 : i32
    %c0_i32_0 = arith.constant 0 : i32
    return %arg0, %c0_i32 : i32, i32
  }
  func.func @transform_1(%arg0: i32) -> (i32, i32) {
    %c0_i32 = arith.constant 0 : i32
    %c0_i32_0 = arith.constant 0 : i32
    %c0_i32_1 = arith.constant 0 : i32
    return %c0_i32, %c0_i32_0 : i32, i32
  }
  func.func @transform_2(%arg0: i32) -> (i32, i32) {
    %c0_i32 = arith.constant 0 : i32
    %c0_i32_0 = arith.constant 0 : i32
    %c0_i32_1 = arith.constant 0 : i32
    return %c0_i32, %c0_i32_0 : i32, i32
  }
  func.func @transform_3(%arg0: i32) -> (i32, i32) {
    %c0_i32 = arith.constant 0 : i32
    %c0_i32_0 = arith.constant 0 : i32
    %c0_i32_1 = arith.constant 0 : i32
    return %c0_i32, %c0_i32_0 : i32, i32
  }
  func.func @transform_4(%arg0: i32) -> (i32, i32) {
    %c0_i32 = arith.constant 0 : i32
    %c0_i32_0 = arith.constant 0 : i32
    %c0_i32_1 = arith.constant 0 : i32
    return %c0_i32, %c0_i32_0 : i32, i32
  }
  func.func @transform_5(%arg0: i32) -> (i32, i32) {
    %c0_i32 = arith.constant 0 : i32
    %c0_i32_0 = arith.constant 0 : i32
    %c0_i32_1 = arith.constant 0 : i32
    return %c0_i32, %c0_i32_0 : i32, i32
  }
  func.func @transform_6(%arg0: i32) -> (i32, i32) {
    %c0_i32 = arith.constant 0 : i32
    %c0_i32_0 = arith.constant 0 : i32
    %c0_i32_1 = arith.constant 0 : i32
    return %c0_i32, %c0_i32_0 : i32, i32
  }
  func.func @transform_7(%arg0: i32) -> (i32, i32) {
    %c0_i32 = arith.constant 0 : i32
    %c0_i32_0 = arith.constant 0 : i32
    %c0_i32_1 = arith.constant 0 : i32
    return %c0_i32, %c0_i32_0 : i32, i32
  }
  func.func @transform_8(%arg0: i32) -> (i32, i32) {
    %c0_i32 = arith.constant 0 : i32
    %c0_i32_0 = arith.constant 0 : i32
    %c0_i32_1 = arith.constant 0 : i32
    return %c0_i32, %c0_i32_0 : i32, i32
  }
  func.func @transform_9(%arg0: i32) -> (i32, i32) {
    %c0_i32 = arith.constant 0 : i32
    %c0_i32_0 = arith.constant 0 : i32
    return %arg0, %c0_i32 : i32, i32
  }
}

</mosaic_0001>

<llo_original>
// kernel: cnn_mnist_forward.1
$region0: #{cnn_mnist_forward.1}
  #allocation0 [shape = 'u32[]', space=smem, size = 0x4, offset = 0x4, fixed_abs, tag = 'smem constant byte address 0x4 - core index']
  #allocation1 [shape = 'u32[72,128]{1,0:T(1,128)}', space=vmem, size = 0x9000, scoped, tag = 'internal scratch']
  %s0 = inlined_call_operand.vmem [shape: bf16[256,160], index: 0, kind: input, shape index: {}]
  %s1 = inlined_call_operand.vmem [shape: bf16[160,512], index: 1, kind: input, shape index: {}]
  %s2 = inlined_call_operand.vmem [shape: f32[1,256], index: 2, kind: input, shape index: {}]
  %s3 = inlined_call_operand.vmem [shape: bf16[256,1280], index: 3, kind: input, shape index: {}]
  %s4 = inlined_call_operand.vmem [shape: f32[1,128], index: 4, kind: input, shape index: {}]
  %s5 = inlined_call_operand.vmem [shape: bf16[256,128], index: 5, kind: input, shape index: {}]
  %s6 = inlined_call_operand.vmem [shape: f32[1,128], index: 6, kind: input, shape index: {}]
  %s7 = inlined_call_operand.vmem [shape: bf16[128,128], index: 7, kind: input, shape index: {}]
  %s8 = inlined_call_operand.vmem [shape: f32[1,128], index: 8, kind: input, shape index: {}]
  %s9 = inlined_call_operand.vmem [shape: f32[128,128], index: 9, kind: output, shape index: {}]
  %s10 = sld [smem:[#allocation0]]
  $region69: #{cnn_mnist_forward.1} parent=0
    _
  %s12 = ssub.s32 1, %s10
  %s13 = scalar_select 0, %s12, %s10
  loop: start=0, step=1, limit=4
  $region2: #{cnn_mnist_forward.1} parent=0 // loop_pre_header
    _
  $region3: #{cnn_mnist_forward.1} parent=0 // loop_header
    %s15 = sphi 0, %s19
    %p16 = scmp.ge.s32.totalorder %s15, 4
    %s25 = sphi 0, %s27
    %s28 = sphi 0, %s25
    %s29 = sphi 0, %s28
    %s45 = sphi 0, %s29
    %s49 = sphi 0, %s49
    %s51 = sphi 0, %s49
    %s52 = sphi 0, %s51
    %s66 = sphi 0, %s52
    %s70 = sphi 0, %s70
    %s72 = sphi 0, %s70
    %s73 = sphi 0, %s72
    %s87 = sphi 0, %s73
    %s91 = sphi 0, %s91
    %s93 = sphi 0, %s91
    %s94 = sphi 0, %s93
    %s108 = sphi 0, %s94
    %s112 = sphi 0, %s112
    %s114 = sphi 0, %s112
    %s115 = sphi 0, %s114
    %s129 = sphi 0, %s115
    %s133 = sphi 0, %s133
    %s135 = sphi 0, %s133
    %s136 = sphi 0, %s135
    %s150 = sphi 0, %s136
    %s154 = sphi 0, %s154
    %s156 = sphi 0, %s154
    %s157 = sphi 0, %s156
    %s171 = sphi 0, %s157
    %s175 = sphi 0, %s175
    %s177 = sphi 0, %s175
    %s178 = sphi 0, %s177
    %s192 = sphi 0, %s178
    %s196 = sphi 0, %s196
    %s198 = sphi 0, %s196
    %s199 = sphi 0, %s198
    %s213 = sphi 0, %s199
    %s219 = sphi 0, %s221
    %s222 = sphi 0, %s219
    %s223 = sphi 0, %s222
    %s239 = sphi 0, %s223
  $region4: #{cnn_mnist_forward.1} parent=0 // loop_header_branch
    %18 = sbr.rel (%p16) target = $region8
  $region5: #{cnn_mnist_forward.1} parent=0 // loop_body
    %s20 = ssub.s32 %s15, 1
    %s21 = ssub.s32 %s15, 2
    %s22 = sadd.s32 %s15, 1
    %s23 = ssub.s32 %s15, %s22
    %p24 = scmp.eq.s32.totalorder %s23, 0
    %s26 = sadd.s32 %s25, 1
    %s27 = scalar_select %p24, %s25, %s26
    %p30 = pneg %p24
    %p31 = scmp.eq.s32.totalorder %s15, 1
    %p32 = por %p30, %p31
    %p33 = scmp.ne.s32.totalorder %s25, %s28
    %p34 = scmp.eq.s32.totalorder %s15, 0
    %p35 = por %p33, %p34
    %p36 = scmp.ne.s32.totalorder %s25, %s28
    %p37 = scmp.eq.s32.totalorder %s20, 1
    %p38 = por %p36, %p37
    %p39 = scmp.ne.s32.totalorder %s28, %s29
    %p40 = scmp.eq.s32.totalorder %s20, 0
    %p41 = por %p39, %p40
    %p42 = scmp.ne.s32.totalorder %s28, %s29
    %p43 = scmp.eq.s32.totalorder %s21, 1
    %p44 = por %p42, %p43
    %p46 = scmp.ne.s32.totalorder %s29, %s45
    %p47 = scmp.eq.s32.totalorder %s21, 0
    %p48 = por %p46, %p47
    %s50 = sadd.s32 %s49, 1
    %p53 = scmp.eq.s32.totalorder %s15, 1
    %p54 = scmp.ne.s32.totalorder %s49, %s51
    %p55 = scmp.eq.s32.totalorder %s15, 0
    %p56 = por %p54, %p55
    %p57 = scmp.ne.s32.totalorder %s49, %s51
    %p58 = scmp.eq.s32.totalorder %s20, 1
    %p59 = por %p57, %p58
    %p60 = scmp.ne.s32.totalorder %s51, %s52
    %p61 = scmp.eq.s32.totalorder %s20, 0
    %p62 = por %p60, %p61
    %p63 = scmp.ne.s32.totalorder %s51, %s52
    %p64 = scmp.eq.s32.totalorder %s21, 1
    %p65 = por %p63, %p64
    %p67 = scmp.ne.s32.totalorder %s52, %s66
    %p68 = scmp.eq.s32.totalorder %s21, 0
    %p69 = por %p67, %p68
    %s71 = sadd.s32 %s70, 1
    %p74 = scmp.eq.s32.totalorder %s15, 1
    %p75 = scmp.ne.s32.totalorder %s70, %s72
    %p76 = scmp.eq.s32.totalorder %s15, 0
    %p77 = por %p75, %p76
    %p78 = scmp.ne.s32.totalorder %s70, %s72
    %p79 = scmp.eq.s32.totalorder %s20, 1
    %p80 = por %p78, %p79
    %p81 = scmp.ne.s32.totalorder %s72, %s73
    %p82 = scmp.eq.s32.totalorder %s20, 0
    %p83 = por %p81, %p82
    %p84 = scmp.ne.s32.totalorder %s72, %s73
    %p85 = scmp.eq.s32.totalorder %s21, 1
    %p86 = por %p84, %p85
    %p88 = scmp.ne.s32.totalorder %s73, %s87
    %p89 = scmp.eq.s32.totalorder %s21, 0
    %p90 = por %p88, %p89
    %s92 = sadd.s32 %s91, 1
    %p95 = scmp.eq.s32.totalorder %s15, 1
    %p96 = scmp.ne.s32.totalorder %s91, %s93
    %p97 = scmp.eq.s32.totalorder %s15, 0
    %p98 = por %p96, %p97
    %p99 = scmp.ne.s32.totalorder %s91, %s93
    %p100 = scmp.eq.s32.totalorder %s20, 1
    %p101 = por %p99, %p100
    %p102 = scmp.ne.s32.totalorder %s93, %s94
    %p103 = scmp.eq.s32.totalorder %s20, 0
    %p104 = por %p102, %p103
    %p105 = scmp.ne.s32.totalorder %s93, %s94
    %p106 = scmp.eq.s32.totalorder %s21, 1
    %p107 = por %p105, %p106
    %p109 = scmp.ne.s32.totalorder %s94, %s108
    %p110 = scmp.eq.s32.totalorder %s21, 0
    %p111 = por %p109, %p110
    %s113 = sadd.s32 %s112, 1
    %p116 = scmp.eq.s32.totalorder %s15, 1
    %p117 = scmp.ne.s32.totalorder %s112, %s114
    %p118 = scmp.eq.s32.totalorder %s15, 0
    %p119 = por %p117, %p118
    %p120 = scmp.ne.s32.totalorder %s112, %s114
    %p121 = scmp.eq.s32.totalorder %s20, 1
    %p122 = por %p120, %p121
    %p123 = scmp.ne.s32.totalorder %s114, %s115
    %p124 = scmp.eq.s32.totalorder %s20, 0
    %p125 = por %p123, %p124
    %p126 = scmp.ne.s32.totalorder %s114, %s115
    %p127 = scmp.eq.s32.totalorder %s21, 1
    %p128 = por %p126, %p127
    %p130 = scmp.ne.s32.totalorder %s115, %s129
    %p131 = scmp.eq.s32.totalorder %s21, 0
    %p132 = por %p130, %p131
    %s134 = sadd.s32 %s133, 1
    %p137 = scmp.eq.s32.totalorder %s15, 1
    %p138 = scmp.ne.s32.totalorder %s133, %s135
    %p139 = scmp.eq.s32.totalorder %s15, 0
    %p140 = por %p138, %p139
    %p141 = scmp.ne.s32.totalorder %s133, %s135
    %p142 = scmp.eq.s32.totalorder %s20, 1
    %p143 = por %p141, %p142
    %p144 = scmp.ne.s32.totalorder %s135, %s136
    %p145 = scmp.eq.s32.totalorder %s20, 0
    %p146 = por %p144, %p145
    %p147 = scmp.ne.s32.totalorder %s135, %s136
    %p148 = scmp.eq.s32.totalorder %s21, 1
    %p149 = por %p147, %p148
    %p151 = scmp.ne.s32.totalorder %s136, %s150
    %p152 = scmp.eq.s32.totalorder %s21, 0
    %p153 = por %p151, %p152
    %s155 = sadd.s32 %s154, 1
    %p158 = scmp.eq.s32.totalorder %s15, 1
    %p159 = scmp.ne.s32.totalorder %s154, %s156
    %p160 = scmp.eq.s32.totalorder %s15, 0
    %p161 = por %p159, %p160
    %p162 = scmp.ne.s32.totalorder %s154, %s156
    %p163 = scmp.eq.s32.totalorder %s20, 1
    %p164 = por %p162, %p163
    %p165 = scmp.ne.s32.totalorder %s156, %s157
    %p166 = scmp.eq.s32.totalorder %s20, 0
    %p167 = por %p165, %p166
    %p168 = scmp.ne.s32.totalorder %s156, %s157
    %p169 = scmp.eq.s32.totalorder %s21, 1
    %p170 = por %p168, %p169
    %p172 = scmp.ne.s32.totalorder %s157, %s171
    %p173 = scmp.eq.s32.totalorder %s21, 0
    %p174 = por %p172, %p173
    %s176 = sadd.s32 %s175, 1
    %p179 = scmp.eq.s32.totalorder %s15, 1
    %p180 = scmp.ne.s32.totalorder %s175, %s177
    %p181 = scmp.eq.s32.totalorder %s15, 0
    %p182 = por %p180, %p181
    %p183 = scmp.ne.s32.totalorder %s175, %s177
    %p184 = scmp.eq.s32.totalorder %s20, 1
    %p185 = por %p183, %p184
    %p186 = scmp.ne.s32.totalorder %s177, %s178
    %p187 = scmp.eq.s32.totalorder %s20, 0
    %p188 = por %p186, %p187
    %p189 = scmp.ne.s32.totalorder %s177, %s178
    %p190 = scmp.eq.s32.totalorder %s21, 1
    %p191 = por %p189, %p190
    %p193 = scmp.ne.s32.totalorder %s178, %s192
    %p194 = scmp.eq.s32.totalorder %s21, 0
    %p195 = por %p193, %p194
    %s197 = sadd.s32 %s196, 1
    %p200 = scmp.eq.s32.totalorder %s15, 1
    %p201 = scmp.ne.s32.totalorder %s196, %s198
    %p202 = scmp.eq.s32.totalorder %s15, 0
    %p203 = por %p201, %p202
    %p204 = scmp.ne.s32.totalorder %s196, %s198
    %p205 = scmp.eq.s32.totalorder %s20, 1
    %p206 = por %p204, %p205
    %p207 = scmp.ne.s32.totalorder %s198, %s199
    %p208 = scmp.eq.s32.totalorder %s20, 0
    %p209 = por %p207, %p208
    %p210 = scmp.ne.s32.totalorder %s198, %s199
    %p211 = scmp.eq.s32.totalorder %s21, 1
    %p212 = por %p210, %p211
    %p214 = scmp.ne.s32.totalorder %s199, %s213
    %p215 = scmp.eq.s32.totalorder %s21, 0
    %p216 = por %p214, %p215
    %s217 = ssub.s32 %s15, %s22
    %p218 = scmp.eq.s32.totalorder %s217, 0
    %s220 = sadd.s32 %s219, 1
    %s221 = scalar_select %p218, %s219, %s220
    %p224 = pneg %p218
    %p225 = scmp.eq.s32.totalorder %s15, 1
    %p226 = por %p224, %p225
    %p227 = scmp.ne.s32.totalorder %s219, %s222
    %p228 = scmp.eq.s32.totalorder %s15, 0
    %p229 = por %p227, %p228
    %p230 = scmp.ne.s32.totalorder %s219, %s222
    %p231 = scmp.eq.s32.totalorder %s20, 1
    %p232 = por %p230, %p231
    %p233 = scmp.ne.s32.totalorder %s222, %s223
    %p234 = scmp.eq.s32.totalorder %s20, 0
    %p235 = por %p233, %p234
    %p236 = scmp.ne.s32.totalorder %s222, %s223
    %p237 = scmp.eq.s32.totalorder %s21, 1
    %p238 = por %p236, %p237
    %p240 = scmp.ne.s32.totalorder %s223, %s239
    %p241 = scmp.eq.s32.totalorder %s21, 0
    %p242 = por %p240, %p241
    %p243 = scmp.le.s32.totalorder 1, %s15
    %p244 = scmp.lt.s32.totalorder %s15, 3
    %p245 = pnand %p243, %p244
    %p246 = pneg %p245
    // Predicated region
    $region9: #{cnn_mnist_forward.1} parent=5 // pred_check
      _
    $region10: #{cnn_mnist_forward.1} parent=5 // pred_check_branch
      %248 = sbr.rel (%p245) target = $region12
    $region11: #{cnn_mnist_forward.1} parent=5 // pred_region
      %s249 = ssub.s32 %s15, 1
      // Predicated region
      $region13: #{cnn_mnist_forward.1} parent=11 // pred_check
        %p250 = pneg %p62
      $region14: #{cnn_mnist_forward.1} parent=11 // pred_check_branch
        %252 = sbr.rel (%p250) target = $region16
      $region15: #{cnn_mnist_forward.1} parent=11 // pred_region
        _
      $region16: #{cnn_mnist_forward.1} parent=11 // pred_fallthru
        _
      // Predicated region
      $region17: #{cnn_mnist_forward.1} parent=11 // pred_check
        %p253 = pneg %p83
      $region18: #{cnn_mnist_forward.1} parent=11 // pred_check_branch
        %255 = sbr.rel (%p253) target = $region20
      $region19: #{cnn_mnist_forward.1} parent=11 // pred_region
        _
      $region20: #{cnn_mnist_forward.1} parent=11 // pred_fallthru
        _
      // Predicated region
      $region21: #{cnn_mnist_forward.1} parent=11 // pred_check
        %p256 = pneg %p104
      $region22: #{cnn_mnist_forward.1} parent=11 // pred_check_branch
        %258 = sbr.rel (%p256) target = $region24
      $region23: #{cnn_mnist_forward.1} parent=11 // pred_region
        _
      $region24: #{cnn_mnist_forward.1} parent=11 // pred_fallthru
        _
      // Predicated region
      $region25: #{cnn_mnist_forward.1} parent=11 // pred_check
        %p259 = pneg %p125
      $region26: #{cnn_mnist_forward.1} parent=11 // pred_check_branch
        %261 = sbr.rel (%p259) target = $region28
      $region27: #{cnn_mnist_forward.1} parent=11 // pred_region
        _
      $region28: #{cnn_mnist_forward.1} parent=11 // pred_fallthru
        _
      // Predicated region
      $region29: #{cnn_mnist_forward.1} parent=11 // pred_check
        %p262 = pneg %p146
      $region30: #{cnn_mnist_forward.1} parent=11 // pred_check_branch
        %264 = sbr.rel (%p262) target = $region32
      $region31: #{cnn_mnist_forward.1} parent=11 // pred_region
        _
      $region32: #{cnn_mnist_forward.1} parent=11 // pred_fallthru
        _
      // Predicated region
      $region33: #{cnn_mnist_forward.1} parent=11 // pred_check
        %p265 = pneg %p167
      $region34: #{cnn_mnist_forward.1} parent=11 // pred_check_branch
        %267 = sbr.rel (%p265) target = $region36
      $region35: #{cnn_mnist_forward.1} parent=11 // pred_region
        _
      $region36: #{cnn_mnist_forward.1} parent=11 // pred_fallthru
        _
      // Predicated region
      $region37: #{cnn_mnist_forward.1} parent=11 // pred_check
        %p268 = pneg %p188
      $region38: #{cnn_mnist_forward.1} parent=11 // pred_check_branch
        %270 = sbr.rel (%p268) target = $region40
      $region39: #{cnn_mnist_forward.1} parent=11 // pred_region
        _
      $region40: #{cnn_mnist_forward.1} parent=11 // pred_fallthru
        _
      // Predicated region
      $region41: #{cnn_mnist_forward.1} parent=11 // pred_check
        %p271 = pneg %p209
      $region42: #{cnn_mnist_forward.1} parent=11 // pred_check_branch
        %273 = sbr.rel (%p271) target = $region44
      $region43: #{cnn_mnist_forward.1} parent=11 // pred_region
        _
      $region44: #{cnn_mnist_forward.1} parent=11 // pred_fallthru
        _
    $region12: #{cnn_mnist_forward.1} parent=5 // pred_fallthru
      _
    %p274 = scmp.lt.s32.totalorder %s15, 2
    // Predicated region
    $region45: #{cnn_mnist_forward.1} parent=5 // pred_check
      %p275 = pneg %p274
    $region46: #{cnn_mnist_forward.1} parent=5 // pred_check_branch
      %277 = sbr.rel (%p275) target = $region48
    $region47: #{cnn_mnist_forward.1} parent=5 // pred_region
      // Predicated region
      $region49: #{cnn_mnist_forward.1} parent=47 // pred_check
        %p278 = pneg %p35
      $region50: #{cnn_mnist_forward.1} parent=47 // pred_check_branch
        %280 = sbr.rel (%p278) target = $region52
      $region51: #{cnn_mnist_forward.1} parent=47 // pred_region
        %s281 = smul.u32 16, %s15
        %p282 = scmp.lt.s32.totalorder %s281, 31
        %s283 = scalar_select %p282, %s281, 31
        %s284 = smul.addr %s283, 2
        %s285 = smul.addr %s284, 4
        %s286 = scalar_lea.vmem %s0, %s285
        %s287 = smul.u32 16, %s15
      $region52: #{cnn_mnist_forward.1} parent=47 // pred_fallthru
        _
    $region48: #{cnn_mnist_forward.1} parent=5 // pred_fallthru
      _
    %p288 = scmp.le.s32.totalorder 1, %s15
    %p289 = scmp.lt.s32.totalorder %s15, 3
    %p290 = pnand %p288, %p289
    %p291 = pneg %p290
    // Predicated region
    $region53: #{cnn_mnist_forward.1} parent=5 // pred_check
      _
    $region54: #{cnn_mnist_forward.1} parent=5 // pred_check_branch
      %293 = sbr.rel (%p290) target = $region56
    $region55: #{cnn_mnist_forward.1} parent=5 // pred_region
      %s294 = ssub.s32 %s15, 1
      %s295 = smul.u32 16, %s20
      %p296 = scmp.lt.s32.totalorder %s295, 31
      %s297 = scalar_select %p296, %s295, 31
      %s298 = smul.addr %s297, 2
      %s299 = smul.addr %s298, 4
      %s300 = scalar_lea.vmem %s0, %s299
      %p301 = pneg %p41
      %p302 = pneg %p38
      %p303 = pneg %p62
      %p304 = pneg %p59
      %p305 = pneg %p83
      %p306 = pneg %p80
      %p307 = pneg %p104
      %p308 = pneg %p101
      %p309 = pneg %p125
      %p310 = pneg %p122
      %p311 = pneg %p146
      %p312 = pneg %p143
      %p313 = pneg %p167
      %p314 = pneg %p164
      %p315 = pneg %p188
      %p316 = pneg %p185
      %p317 = pneg %p209
      %p318 = pneg %p206
      %p319 = pneg %p235
      %p320 = pneg %p232
      %s321 = smul.u32 8, %s20
      %p322 = scmp.lt.s32.totalorder %s321, 15
      %s323 = scalar_select %p322, %s321, 15
      %s324 = smul.addr %s323, 8
      %s325 = scalar_lea.vmem %s9, %s324
      %s326 = smul.u32 16, %s20
      %p327 = scmp.lt.s32.totalorder %s326, 31
      %s328 = scalar_select %p327, %s326, 31
      %s329 = smul.addr %s328, 2
      %s330 = smul.addr %s329, 4
      %s331 = scalar_lea.vmem %s0, %s330
      %s332 = smul.u32 16, %s20
      %s333 = smul.u32 8, %s20
      %p334 = scmp.lt.s32.totalorder %s333, 15
      %s335 = scalar_select %p334, %s333, 15
      %s336 = smul.addr %s335, 8
      %s337 = scalar_lea.vmem %s9, %s336
      %s338 = smul.u32 8, %s20
      %v340 = vld [vmem:[%s331] sm:$0xff]
      %v341 = vld [vmem:[%s331 + $0x8] sm:$0xff]
      %v342 = vld [vmem:[%s331 + $0x10] sm:$0xff]
      %v343 = vld [vmem:[%s331 + $0x18] sm:$0xff]
      %v344 = vld [vmem:[%s331 + $0x20] sm:$0xff]
      %v345 = vld [vmem:[%s331 + $0x28] sm:$0xff]
      %v346 = vld [vmem:[%s331 + $0x30] sm:$0xff]
      %v347 = vld [vmem:[%s331 + $0x38] sm:$0xff]
      %v348 = vld [vmem:[%s331 + $0x40] sm:$0xff]
      %v349 = vld [vmem:[%s331 + $0x48] sm:$0xff]
      %v350 = vld [vmem:[%s331 + $0x50] sm:$0xff]
      %v351 = vld [vmem:[%s331 + $0x58] sm:$0xff]
      %v352 = vld [vmem:[%s331 + $0x60] sm:$0xff]
      %v353 = vld [vmem:[%s331 + $0x68] sm:$0xff]
      %v354 = vld [vmem:[%s331 + $0x70] sm:$0xff]
      %v355 = vld [vmem:[%s331 + $0x78] sm:$0xff]
      %v356 = vld [vmem:[%s1] sm:$0xff]
      %v357 = vld [vmem:[%s1 + $0x8] sm:$0xff]
      %v358 = vld [vmem:[%s1 + $0x10] sm:$0xff]
      %v359 = vld [vmem:[%s1 + $0x18] sm:$0xff]
      %v360 = vld [vmem:[%s1 + $0x20] sm:$0xff]
      %v361 = vld [vmem:[%s1 + $0x28] sm:$0xff]
      %v362 = vld [vmem:[%s1 + $0x30] sm:$0xff]
      %v363 = vld [vmem:[%s1 + $0x38] sm:$0xff]
      %v364 = vld [vmem:[%s1 + $0x40] sm:$0xff]
      %v365 = vld [vmem:[%s1 + $0x48] sm:$0xff]
      %v366 = vld [vmem:[%s1 + $0x50] sm:$0xff]
      %v367 = vld [vmem:[%s1 + $0x58] sm:$0xff]
      %v368 = vld [vmem:[%s1 + $0x60] sm:$0xff]
      %v369 = vld [vmem:[%s1 + $0x68] sm:$0xff]
      %v370 = vld [vmem:[%s1 + $0x70] sm:$0xff]
      %v371 = vld [vmem:[%s1 + $0x78] sm:$0xff]
      %v372 = vld [vmem:[%s1 + $0x80] sm:$0xff]
      %v373 = vld [vmem:[%s1 + $0x88] sm:$0xff]
      %v374 = vld [vmem:[%s1 + $0x90] sm:$0xff]
      %v375 = vld [vmem:[%s1 + $0x98] sm:$0xff]
      %v376 = vld [vmem:[%s1 + $0xa0] sm:$0xff]
      %v377 = vld [vmem:[%s1 + $0xa8] sm:$0xff]
      %v378 = vld [vmem:[%s1 + $0xb0] sm:$0xff]
      %v379 = vld [vmem:[%s1 + $0xb8] sm:$0xff]
      %v380 = vld [vmem:[%s1 + $0xc0] sm:$0xff]
      %v381 = vld [vmem:[%s1 + $0xc8] sm:$0xff]
      %v382 = vld [vmem:[%s1 + $0xd0] sm:$0xff]
      %v383 = vld [vmem:[%s1 + $0xd8] sm:$0xff]
      %v384 = vld [vmem:[%s1 + $0xe0] sm:$0xff]
      %v385 = vld [vmem:[%s1 + $0xe8] sm:$0xff]
      %v386 = vld [vmem:[%s1 + $0xf0] sm:$0xff]
      %v387 = vld [vmem:[%s1 + $0xf8] sm:$0xff]
      %v388 = vld [vmem:[%s1 + $0x100] sm:$0xff]
      %v389 = vld [vmem:[%s1 + $0x108] sm:$0xff]
      %v390 = vld [vmem:[%s1 + $0x110] sm:$0xff]
      %v391 = vld [vmem:[%s1 + $0x118] sm:$0xff]
      %v392 = vld [vmem:[%s1 + $0x120] sm:$0xff]
      %v393 = vld [vmem:[%s1 + $0x128] sm:$0xff]
      %v394 = vld [vmem:[%s1 + $0x130] sm:$0xff]
      %v395 = vld [vmem:[%s1 + $0x138] sm:$0xff]
      %v412 = vunpack.c.l.b16 %v340
      %v413 = vunpack.c.h.b16 %v340
      %v414 = vunpack.c.l.b16 %v341
      %v415 = vunpack.c.h.b16 %v341
      %v416 = vunpack.c.l.b16 %v342
      %v417 = vunpack.c.h.b16 %v342
      %v418 = vunpack.c.l.b16 %v343
      %v419 = vunpack.c.h.b16 %v343
      %v420 = vunpack.c.l.b16 %v344
      %v421 = vunpack.c.h.b16 %v344
      %v422 = vunpack.c.l.b16 %v345
      %v423 = vunpack.c.h.b16 %v345
      %v424 = vunpack.c.l.b16 %v346
      %v425 = vunpack.c.h.b16 %v346
      %v426 = vunpack.c.l.b16 %v347
      %v427 = vunpack.c.h.b16 %v347
      %v428 = vunpack.c.l.b16 %v348
      %v429 = vunpack.c.h.b16 %v348
      %v430 = vunpack.c.l.b16 %v349
      %v431 = vunpack.c.h.b16 %v349
      %v432 = vunpack.c.l.b16 %v350
      %v433 = vunpack.c.h.b16 %v350
      %v434 = vunpack.c.l.b16 %v351
      %v435 = vunpack.c.h.b16 %v351
      %v436 = vunpack.c.l.b16 %v352
      %v437 = vunpack.c.h.b16 %v352
      %v438 = vunpack.c.l.b16 %v353
      %v439 = vunpack.c.h.b16 %v353
      %v440 = vunpack.c.l.b16 %v354
      %v441 = vunpack.c.h.b16 %v354
      %v442 = vunpack.c.l.b16 %v355
      %v443 = vunpack.c.h.b16 %v355
      %v444 = vpack.c.b16 %v414, %v412
      %v445 = vpack.c.b16 %v415, %v413
      %v446 = vpack.c.b16 %v418, %v416
      %v447 = vpack.c.b16 %v419, %v417
      %v448 = vpack.c.b16 %v422, %v420
      %v449 = vpack.c.b16 %v423, %v421
      %v450 = vpack.c.b16 %v426, %v424
      %v451 = vpack.c.b16 %v427, %v425
      %v452 = vpack.c.b16 %v430, %v428
      %v453 = vpack.c.b16 %v431, %v429
      %v454 = vpack.c.b16 %v434, %v432
      %v455 = vpack.c.b16 %v435, %v433
      %v456 = vpack.c.b16 %v438, %v436
      %v457 = vpack.c.b16 %v439, %v437
      %v458 = vpack.c.b16 %v442, %v440
      %v459 = vpack.c.b16 %v443, %v441
      %v508 = vunpack.c.l.b16 %v356
      %v509 = vunpack.c.h.b16 %v356
      %v510 = vunpack.c.l.b16 %v357
      %v511 = vunpack.c.h.b16 %v357
      %v512 = vunpack.c.l.b16 %v358
      %v513 = vunpack.c.h.b16 %v358
      %v514 = vunpack.c.l.b16 %v359
      %v515 = vunpack.c.h.b16 %v359
      %v516 = vunpack.c.l.b16 %v360
      %v517 = vunpack.c.h.b16 %v360
      %v518 = vunpack.c.l.b16 %v361
      %v519 = vunpack.c.h.b16 %v361
      %v520 = vunpack.c.l.b16 %v362
      %v521 = vunpack.c.h.b16 %v362
      %v522 = vunpack.c.l.b16 %v363
      %v523 = vunpack.c.h.b16 %v363
      %v524 = vunpack.c.l.b16 %v364
      %v525 = vunpack.c.h.b16 %v364
      %v526 = vunpack.c.l.b16 %v365
      %v527 = vunpack.c.h.b16 %v365
      %v528 = vunpack.c.l.b16 %v366
      %v529 = vunpack.c.h.b16 %v366
      %v530 = vunpack.c.l.b16 %v367
      %v531 = vunpack.c.h.b16 %v367
      %v532 = vunpack.c.l.b16 %v368
      %v533 = vunpack.c.h.b16 %v368
      %v534 = vunpack.c.l.b16 %v369
      %v535 = vunpack.c.h.b16 %v369
      %v536 = vunpack.c.l.b16 %v370
      %v537 = vunpack.c.h.b16 %v370
      %v538 = vunpack.c.l.b16 %v371
      %v539 = vunpack.c.h.b16 %v371
      %v540 = vunpack.c.l.b16 %v372
      %v541 = vunpack.c.h.b16 %v372
      %v542 = vunpack.c.l.b16 %v373
      %v543 = vunpack.c.h.b16 %v373
      %v544 = vunpack.c.l.b16 %v374
      %v545 = vunpack.c.h.b16 %v374
      %v546 = vunpack.c.l.b16 %v375
      %v547 = vunpack.c.h.b16 %v375
      %v548 = vunpack.c.l.b16 %v376
      %v549 = vunpack.c.h.b16 %v376
      %v550 = vunpack.c.l.b16 %v377
      %v551 = vunpack.c.h.b16 %v377
      %v552 = vunpack.c.l.b16 %v378
      %v553 = vunpack.c.h.b16 %v378
      %v554 = vunpack.c.l.b16 %v379
      %v555 = vunpack.c.h.b16 %v379
      %v556 = vunpack.c.l.b16 %v380
      %v557 = vunpack.c.h.b16 %v380
      %v558 = vunpack.c.l.b16 %v381
      %v559 = vunpack.c.h.b16 %v381
      %v560 = vunpack.c.l.b16 %v382
      %v561 = vunpack.c.h.b16 %v382
      %v562 = vunpack.c.l.b16 %v383
      %v563 = vunpack.c.h.b16 %v383
      %v564 = vunpack.c.l.b16 %v384
      %v565 = vunpack.c.h.b16 %v384
      %v566 = vunpack.c.l.b16 %v385
      %v567 = vunpack.c.h.b16 %v385
      %v568 = vunpack.c.l.b16 %v386
      %v569 = vunpack.c.h.b16 %v386
      %v570 = vunpack.c.l.b16 %v387
      %v571 = vunpack.c.h.b16 %v387
      %v572 = vunpack.c.l.b16 %v388
      %v573 = vunpack.c.h.b16 %v388
      %v574 = vunpack.c.l.b16 %v389
      %v575 = vunpack.c.h.b16 %v389
      %v576 = vunpack.c.l.b16 %v390
      %v577 = vunpack.c.h.b16 %v390
      %v578 = vunpack.c.l.b16 %v391
      %v579 = vunpack.c.h.b16 %v391
      %v580 = vunpack.c.l.b16 %v392
      %v581 = vunpack.c.h.b16 %v392
      %v582 = vunpack.c.l.b16 %v393
      %v583 = vunpack.c.h.b16 %v393
      %v584 = vunpack.c.l.b16 %v394
      %v585 = vunpack.c.h.b16 %v394
      %v586 = vunpack.c.l.b16 %v395
      %v587 = vunpack.c.h.b16 %v395
      %v588 = vpack.c.b16 %v512, %v508
      %v589 = vpack.c.b16 %v513, %v509
      %v590 = vpack.c.b16 %v514, %v510
      %v591 = vpack.c.b16 %v515, %v511
      %v592 = vpack.c.b16 %v520, %v516
      %v593 = vpack.c.b16 %v521, %v517
      %v594 = vpack.c.b16 %v522, %v518
      %v595 = vpack.c.b16 %v523, %v519
      %v596 = vpack.c.b16 %v528, %v524
      %v597 = vpack.c.b16 %v529, %v525
      %v598 = vpack.c.b16 %v530, %v526
      %v599 = vpack.c.b16 %v531, %v527
      %v600 = vpack.c.b16 %v536, %v532
      %v601 = vpack.c.b16 %v537, %v533
      %v602 = vpack.c.b16 %v538, %v534
      %v603 = vpack.c.b16 %v539, %v535
      %v604 = vpack.c.b16 %v544, %v540
      %v605 = vpack.c.b16 %v545, %v541
      %v606 = vpack.c.b16 %v546, %v542
      %v607 = vpack.c.b16 %v547, %v543
      %v608 = vpack.c.b16 %v552, %v548
      %v609 = vpack.c.b16 %v553, %v549
      %v610 = vpack.c.b16 %v554, %v550
      %v611 = vpack.c.b16 %v555, %v551
      %v612 = vpack.c.b16 %v560, %v556
      %v613 = vpack.c.b16 %v561, %v557
      %v614 = vpack.c.b16 %v562, %v558
      %v615 = vpack.c.b16 %v563, %v559
      %v616 = vpack.c.b16 %v568, %v564
      %v617 = vpack.c.b16 %v569, %v565
      %v618 = vpack.c.b16 %v570, %v566
      %v619 = vpack.c.b16 %v571, %v567
      %v620 = vpack.c.b16 %v576, %v572
      %v621 = vpack.c.b16 %v577, %v573
      %v622 = vpack.c.b16 %v578, %v574
      %v623 = vpack.c.b16 %v579, %v575
      %v624 = vpack.c.b16 %v584, %v580
      %v625 = vpack.c.b16 %v585, %v581
      %v626 = vpack.c.b16 %v586, %v582
      %v627 = vpack.c.b16 %v587, %v583
      %vm668 = vcmask 261120
      %v670 = vsel %vm668, %v445, 0
      %v673 = vsel %vm668, %v447, 0
      %v676 = vsel %vm668, %v449, 0
      %v679 = vsel %vm668, %v451, 0
      %v682 = vsel %vm668, %v453, 0
      %v685 = vsel %vm668, %v455, 0
      %v688 = vsel %vm668, %v457, 0
      %v691 = vsel %vm668, %v459, 0
      %693 = vmatpush.bf16.msra.mxu0 %v616
      %694 = vmatpush.bf16.msra.mxu0 %v612
      %695 = vmatpush.bf16.msra.mxu0 %v608
      %696 = vmatpush.bf16.msra.mxu0 %v604
      %697 = vmatpush.bf16.msra.mxu0 %v600
      %698 = vmatpush.bf16.msra.mxu0 %v596
      %699 = vmatpush.bf16.msra.mxu0 %v592
      %700 = vmatpush.bf16.msra.mxu0 %v588
      %701 = vmatmul.bf16.gmra.mxu0 %v444
      %v702 = vpop.f32.mrf.mxu0
      %v703 = vadd.f32 0.0, %v702
      %v704 = vpop.f32.mrf.mxu0
      %v705 = vadd.f32 0.0, %v704
      %706 = vmatmul.bf16.gmra.mxu0 %v446
      %v707 = vpop.f32.mrf.mxu0
      %v708 = vadd.f32 0.0, %v707
      %v709 = vpop.f32.mrf.mxu0
      %v710 = vadd.f32 0.0, %v709
      %711 = vmatmul.bf16.gmra.mxu0 %v448
      %v712 = vpop.f32.mrf.mxu0
      %v713 = vadd.f32 0.0, %v712
      %v714 = vpop.f32.mrf.mxu0
      %v715 = vadd.f32 0.0, %v714
      %716 = vmatmul.bf16.gmra.mxu0 %v450
      %v717 = vpop.f32.mrf.mxu0
      %v718 = vadd.f32 0.0, %v717
      %v719 = vpop.f32.mrf.mxu0
      %v720 = vadd.f32 0.0, %v719
      %721 = vmatmul.bf16.gmra.mxu0 %v452
      %v722 = vpop.f32.mrf.mxu0
      %v723 = vadd.f32 0.0, %v722
      %v724 = vpop.f32.mrf.mxu0
      %v725 = vadd.f32 0.0, %v724
      %726 = vmatmul.bf16.gmra.mxu0 %v454
      %v727 = vpop.f32.mrf.mxu0
      %v728 = vadd.f32 0.0, %v727
      %v729 = vpop.f32.mrf.mxu0
      %v730 = vadd.f32 0.0, %v729
      %731 = vmatmul.bf16.gmra.mxu0 %v456
      %v732 = vpop.f32.mrf.mxu0
      %v733 = vadd.f32 0.0, %v732
      %v734 = vpop.f32.mrf.mxu0
      %v735 = vadd.f32 0.0, %v734
      %736 = vmatmul.bf16.gmra.mxu0 %v458
      %v737 = vpop.f32.mrf.mxu0
      %v738 = vadd.f32 0.0, %v737
      %v739 = vpop.f32.mrf.mxu0
      %v740 = vadd.f32 0.0, %v739
      %741 = vdwg.mxu0
      %742 = vmatpush.bf16.msra.mxu0 0
      %743 = vmatpush.bf16.msra.mxu0 0
      %744 = vmatpush.bf16.msra.mxu0 0
      %745 = vmatpush.bf16.msra.mxu0 0
      %746 = vmatpush.bf16.msra.mxu0 0
      %747 = vmatpush.bf16.msra.mxu0 0
      %748 = vmatpush.bf16.msra.mxu0 %v624
      %749 = vmatpush.bf16.msra.mxu0 %v620
      %750 = vmatmul.bf16.gmra.mxu0 %v670
      %v751 = vpop.f32.mrf.mxu0
      %v752 = vadd.f32 %v703, %v751
      %v753 = vpop.f32.mrf.mxu0
      %v754 = vadd.f32 %v705, %v753
      %755 = vmatmul.bf16.gmra.mxu0 %v673
      %v756 = vpop.f32.mrf.mxu0
      %v757 = vadd.f32 %v708, %v756
      %v758 = vpop.f32.mrf.mxu0
      %v759 = vadd.f32 %v710, %v758
      %760 = vmatmul.bf16.gmra.mxu0 %v676
      %v761 = vpop.f32.mrf.mxu0
      %v762 = vadd.f32 %v713, %v761
      %v763 = vpop.f32.mrf.mxu0
      %v764 = vadd.f32 %v715, %v763
      %765 = vmatmul.bf16.gmra.mxu0 %v679
      %v766 = vpop.f32.mrf.mxu0
      %v767 = vadd.f32 %v718, %v766
      %v768 = vpop.f32.mrf.mxu0
      %v769 = vadd.f32 %v720, %v768
      %770 = vmatmul.bf16.gmra.mxu0 %v682
      %v771 = vpop.f32.mrf.mxu0
      %v772 = vadd.f32 %v723, %v771
      %v773 = vpop.f32.mrf.mxu0
      %v774 = vadd.f32 %v725, %v773
      %775 = vmatmul.bf16.gmra.mxu0 %v685
      %v776 = vpop.f32.mrf.mxu0
      %v777 = vadd.f32 %v728, %v776
      %v778 = vpop.f32.mrf.mxu0
      %v779 = vadd.f32 %v730, %v778
      %780 = vmatmul.bf16.gmra.mxu0 %v688
      %v781 = vpop.f32.mrf.mxu0
      %v782 = vadd.f32 %v733, %v781
      %v783 = vpop.f32.mrf.mxu0
      %v784 = vadd.f32 %v735, %v783
      %785 = vmatmul.bf16.gmra.mxu0 %v691
      %v786 = vpop.f32.mrf.mxu0
      %v787 = vadd.f32 %v738, %v786
      %v788 = vpop.f32.mrf.mxu0
      %v789 = vadd.f32 %v740, %v788
      %790 = vdwg.mxu0
      %791 = vmatpush.bf16.msra.mxu0 %v617
      %792 = vmatpush.bf16.msra.mxu0 %v613
      %793 = vmatpush.bf16.msra.mxu0 %v609
      %794 = vmatpush.bf16.msra.mxu0 %v605
      %795 = vmatpush.bf16.msra.mxu0 %v601
      %796 = vmatpush.bf16.msra.mxu0 %v597
      %797 = vmatpush.bf16.msra.mxu0 %v593
      %798 = vmatpush.bf16.msra.mxu0 %v589
      %799 = vmatmul.bf16.gmra.mxu0 %v444
      %v800 = vpop.f32.mrf.mxu0
      %v801 = vadd.f32 0.0, %v800
      %v802 = vpop.f32.mrf.mxu0
      %v803 = vadd.f32 0.0, %v802
      %804 = vmatmul.bf16.gmra.mxu0 %v446
      %v805 = vpop.f32.mrf.mxu0
      %v806 = vadd.f32 0.0, %v805
      %v807 = vpop.f32.mrf.mxu0
      %v808 = vadd.f32 0.0, %v807
      %809 = vmatmul.bf16.gmra.mxu0 %v448
      %v810 = vpop.f32.mrf.mxu0
      %v811 = vadd.f32 0.0, %v810
      %v812 = vpop.f32.mrf.mxu0
      %v813 = vadd.f32 0.0, %v812
      %814 = vmatmul.bf16.gmra.mxu0 %v450
      %v815 = vpop.f32.mrf.mxu0
      %v816 = vadd.f32 0.0, %v815
      %v817 = vpop.f32.mrf.mxu0
      %v818 = vadd.f32 0.0, %v817
      %819 = vmatmul.bf16.gmra.mxu0 %v452
      %v820 = vpop.f32.mrf.mxu0
      %v821 = vadd.f32 0.0, %v820
      %v822 = vpop.f32.mrf.mxu0
      %v823 = vadd.f32 0.0, %v822
      %824 = vmatmul.bf16.gmra.mxu0 %v454
      %v825 = vpop.f32.mrf.mxu0
      %v826 = vadd.f32 0.0, %v825
      %v827 = vpop.f32.mrf.mxu0
      %v828 = vadd.f32 0.0, %v827
      %829 = vmatmul.bf16.gmra.mxu0 %v456
      %v830 = vpop.f32.mrf.mxu0
      %v831 = vadd.f32 0.0, %v830
      %v832 = vpop.f32.mrf.mxu0
      %v833 = vadd.f32 0.0, %v832
      %834 = vmatmul.bf16.gmra.mxu0 %v458
      %v835 = vpop.f32.mrf.mxu0
      %v836 = vadd.f32 0.0, %v835
      %v837 = vpop.f32.mrf.mxu0
      %v838 = vadd.f32 0.0, %v837
      %839 = vdwg.mxu0
      %840 = vmatpush.bf16.msra.mxu0 0
      %841 = vmatpush.bf16.msra.mxu0 0
      %842 = vmatpush.bf16.msra.mxu0 0
      %843 = vmatpush.bf16.msra.mxu0 0
      %844 = vmatpush.bf16.msra.mxu0 0
      %845 = vmatpush.bf16.msra.mxu0 0
      %846 = vmatpush.bf16.msra.mxu0 %v625
      %847 = vmatpush.bf16.msra.mxu0 %v621
      %848 = vmatmul.bf16.gmra.mxu0 %v670
      %v849 = vpop.f32.mrf.mxu0
      %v850 = vadd.f32 %v801, %v849
      %v851 = vpop.f32.mrf.mxu0
      %v852 = vadd.f32 %v803, %v851
      %853 = vmatmul.bf16.gmra.mxu0 %v673
      %v854 = vpop.f32.mrf.mxu0
      %v855 = vadd.f32 %v806, %v854
      %v856 = vpop.f32.mrf.mxu0
      %v857 = vadd.f32 %v808, %v856
      %858 = vmatmul.bf16.gmra.mxu0 %v676
      %v859 = vpop.f32.mrf.mxu0
      %v860 = vadd.f32 %v811, %v859
      %v861 = vpop.f32.mrf.mxu0
      %v862 = vadd.f32 %v813, %v861
      %863 = vmatmul.bf16.gmra.mxu0 %v679
      %v864 = vpop.f32.mrf.mxu0
      %v865 = vadd.f32 %v816, %v864
      %v866 = vpop.f32.mrf.mxu0
      %v867 = vadd.f32 %v818, %v866
      %868 = vmatmul.bf16.gmra.mxu0 %v682
      %v869 = vpop.f32.mrf.mxu0
      %v870 = vadd.f32 %v821, %v869
      %v871 = vpop.f32.mrf.mxu0
      %v872 = vadd.f32 %v823, %v871
      %873 = vmatmul.bf16.gmra.mxu0 %v685
      %v874 = vpop.f32.mrf.mxu0
      %v875 = vadd.f32 %v826, %v874
      %v876 = vpop.f32.mrf.mxu0
      %v877 = vadd.f32 %v828, %v876
      %878 = vmatmul.bf16.gmra.mxu0 %v688
      %v879 = vpop.f32.mrf.mxu0
      %v880 = vadd.f32 %v831, %v879
      %v881 = vpop.f32.mrf.mxu0
      %v882 = vadd.f32 %v833, %v881
      %883 = vmatmul.bf16.gmra.mxu0 %v691
      %v884 = vpop.f32.mrf.mxu0
      %v885 = vadd.f32 %v836, %v884
      %v886 = vpop.f32.mrf.mxu0
      %v887 = vadd.f32 %v838, %v886
      %888 = vdwg.mxu0
      %889 = vmatpush.bf16.msra.mxu0 %v618
      %890 = vmatpush.bf16.msra.mxu0 %v614
      %891 = vmatpush.bf16.msra.mxu0 %v610
      %892 = vmatpush.bf16.msra.mxu0 %v606
      %893 = vmatpush.bf16.msra.mxu0 %v602
      %894 = vmatpush.bf16.msra.mxu0 %v598
      %895 = vmatpush.bf16.msra.mxu0 %v594
      %896 = vmatpush.bf16.msra.mxu0 %v590
      %897 = vmatmul.bf16.gmra.mxu0 %v444
      %v898 = vpop.f32.mrf.mxu0
      %v899 = vadd.f32 0.0, %v898
      %v900 = vpop.f32.mrf.mxu0
      %v901 = vadd.f32 0.0, %v900
      %902 = vmatmul.bf16.gmra.mxu0 %v446
      %v903 = vpop.f32.mrf.mxu0
      %v904 = vadd.f32 0.0, %v903
      %v905 = vpop.f32.mrf.mxu0
      %v906 = vadd.f32 0.0, %v905
      %907 = vmatmul.bf16.gmra.mxu0 %v448
      %v908 = vpop.f32.mrf.mxu0
      %v909 = vadd.f32 0.0, %v908
      %v910 = vpop.f32.mrf.mxu0
      %v911 = vadd.f32 0.0, %v910
      %912 = vmatmul.bf16.gmra.mxu0 %v450
      %v913 = vpop.f32.mrf.mxu0
      %v914 = vadd.f32 0.0, %v913
      %v915 = vpop.f32.mrf.mxu0
      %v916 = vadd.f32 0.0, %v915
      %917 = vmatmul.bf16.gmra.mxu0 %v452
      %v918 = vpop.f32.mrf.mxu0
      %v919 = vadd.f32 0.0, %v918
      %v920 = vpop.f32.mrf.mxu0
      %v921 = vadd.f32 0.0, %v920
      %922 = vmatmul.bf16.gmra.mxu0 %v454
      %v923 = vpop.f32.mrf.mxu0
      %v924 = vadd.f32 0.0, %v923
      %v925 = vpop.f32.mrf.mxu0
      %v926 = vadd.f32 0.0, %v925
      %927 = vmatmul.bf16.gmra.mxu0 %v456
      %v928 = vpop.f32.mrf.mxu0
      %v929 = vadd.f32 0.0, %v928
      %v930 = vpop.f32.mrf.mxu0
      %v931 = vadd.f32 0.0, %v930
      %932 = vmatmul.bf16.gmra.mxu0 %v458
      %v933 = vpop.f32.mrf.mxu0
      %v934 = vadd.f32 0.0, %v933
      %v935 = vpop.f32.mrf.mxu0
      %v936 = vadd.f32 0.0, %v935
      %937 = vdwg.mxu0
      %938 = vmatpush.bf16.msra.mxu0 0
      %939 = vmatpush.bf16.msra.mxu0 0
      %940 = vmatpush.bf16.msra.mxu0 0
      %941 = vmatpush.bf16.msra.mxu0 0
      %942 = vmatpush.bf16.msra.mxu0 0
      %943 = vmatpush.bf16.msra.mxu0 0
      %944 = vmatpush.bf16.msra.mxu0 %v626
      %945 = vmatpush.bf16.msra.mxu0 %v622
      %946 = vmatmul.bf16.gmra.mxu0 %v670
      %v947 = vpop.f32.mrf.mxu0
      %v948 = vadd.f32 %v899, %v947
      %v949 = vpop.f32.mrf.mxu0
      %v950 = vadd.f32 %v901, %v949
      %951 = vmatmul.bf16.gmra.mxu0 %v673
      %v952 = vpop.f32.mrf.mxu0
      %v953 = vadd.f32 %v904, %v952
      %v954 = vpop.f32.mrf.mxu0
      %v955 = vadd.f32 %v906, %v954
      %956 = vmatmul.bf16.gmra.mxu0 %v676
      %v957 = vpop.f32.mrf.mxu0
      %v958 = vadd.f32 %v909, %v957
      %v959 = vpop.f32.mrf.mxu0
      %v960 = vadd.f32 %v911, %v959
      %961 = vmatmul.bf16.gmra.mxu0 %v679
      %v962 = vpop.f32.mrf.mxu0
      %v963 = vadd.f32 %v914, %v962
      %v964 = vpop.f32.mrf.mxu0
      %v965 = vadd.f32 %v916, %v964
      %966 = vmatmul.bf16.gmra.mxu0 %v682
      %v967 = vpop.f32.mrf.mxu0
      %v968 = vadd.f32 %v919, %v967
      %v969 = vpop.f32.mrf.mxu0
      %v970 = vadd.f32 %v921, %v969
      %971 = vmatmul.bf16.gmra.mxu0 %v685
      %v972 = vpop.f32.mrf.mxu0
      %v973 = vadd.f32 %v924, %v972
      %v974 = vpop.f32.mrf.mxu0
      %v975 = vadd.f32 %v926, %v974
      %976 = vmatmul.bf16.gmra.mxu0 %v688
      %v977 = vpop.f32.mrf.mxu0
      %v978 = vadd.f32 %v929, %v977
      %v979 = vpop.f32.mrf.mxu0
      %v980 = vadd.f32 %v931, %v979
      %981 = vmatmul.bf16.gmra.mxu0 %v691
      %v982 = vpop.f32.mrf.mxu0
      %v983 = vadd.f32 %v934, %v982
      %v984 = vpop.f32.mrf.mxu0
      %v985 = vadd.f32 %v936, %v984
      %986 = vdwg.mxu0
      %987 = vmatpush.bf16.msra.mxu0 %v619
      %988 = vmatpush.bf16.msra.mxu0 %v615
      %989 = vmatpush.bf16.msra.mxu0 %v611
      %990 = vmatpush.bf16.msra.mxu0 %v607
      %991 = vmatpush.bf16.msra.mxu0 %v603
      %992 = vmatpush.bf16.msra.mxu0 %v599
      %993 = vmatpush.bf16.msra.mxu0 %v595
      %994 = vmatpush.bf16.msra.mxu0 %v591
      %995 = vmatmul.bf16.gmra.mxu0 %v444
      %v996 = vpop.f32.mrf.mxu0
      %v997 = vadd.f32 0.0, %v996
      %v998 = vpop.f32.mrf.mxu0
      %v999 = vadd.f32 0.0, %v998
      %1000 = vmatmul.bf16.gmra.mxu0 %v446
      %v1001 = vpop.f32.mrf.mxu0
      %v1002 = vadd.f32 0.0, %v1001
      %v1003 = vpop.f32.mrf.mxu0
      %v1004 = vadd.f32 0.0, %v1003
      %1005 = vmatmul.bf16.gmra.mxu0 %v448
      %v1006 = vpop.f32.mrf.mxu0
      %v1007 = vadd.f32 0.0, %v1006
      %v1008 = vpop.f32.mrf.mxu0
      %v1009 = vadd.f32 0.0, %v1008
      %1010 = vmatmul.bf16.gmra.mxu0 %v450
      %v1011 = vpop.f32.mrf.mxu0
      %v1012 = vadd.f32 0.0, %v1011
      %v1013 = vpop.f32.mrf.mxu0
      %v1014 = vadd.f32 0.0, %v1013
      %1015 = vmatmul.bf16.gmra.mxu0 %v452
      %v1016 = vpop.f32.mrf.mxu0
      %v1017 = vadd.f32 0.0, %v1016
      %v1018 = vpop.f32.mrf.mxu0
      %v1019 = vadd.f32 0.0, %v1018
      %1020 = vmatmul.bf16.gmra.mxu0 %v454
      %v1021 = vpop.f32.mrf.mxu0
      %v1022 = vadd.f32 0.0, %v1021
      %v1023 = vpop.f32.mrf.mxu0
      %v1024 = vadd.f32 0.0, %v1023
      %1025 = vmatmul.bf16.gmra.mxu0 %v456
      %v1026 = vpop.f32.mrf.mxu0
      %v1027 = vadd.f32 0.0, %v1026
      %v1028 = vpop.f32.mrf.mxu0
      %v1029 = vadd.f32 0.0, %v1028
      %1030 = vmatmul.bf16.gmra.mxu0 %v458
      %v1031 = vpop.f32.mrf.mxu0
      %v1032 = vadd.f32 0.0, %v1031
      %v1033 = vpop.f32.mrf.mxu0
      %v1034 = vadd.f32 0.0, %v1033
      %1035 = vdwg.mxu0
      %1036 = vmatpush.bf16.msra.mxu0 0
      %1037 = vmatpush.bf16.msra.mxu0 0
      %1038 = vmatpush.bf16.msra.mxu0 0
      %1039 = vmatpush.bf16.msra.mxu0 0
      %1040 = vmatpush.bf16.msra.mxu0 0
      %1041 = vmatpush.bf16.msra.mxu0 0
      %1042 = vmatpush.bf16.msra.mxu0 %v627
      %1043 = vmatpush.bf16.msra.mxu0 %v623
      %1044 = vmatmul.bf16.gmra.mxu0 %v670
      %v1045 = vpop.f32.mrf.mxu0
      %v1046 = vadd.f32 %v997, %v1045
      %v1047 = vpop.f32.mrf.mxu0
      %v1048 = vadd.f32 %v999, %v1047
      %1049 = vmatmul.bf16.gmra.mxu0 %v673
      %v1050 = vpop.f32.mrf.mxu0
      %v1051 = vadd.f32 %v1002, %v1050
      %v1052 = vpop.f32.mrf.mxu0
      %v1053 = vadd.f32 %v1004, %v1052
      %1054 = vmatmul.bf16.gmra.mxu0 %v676
      %v1055 = vpop.f32.mrf.mxu0
      %v1056 = vadd.f32 %v1007, %v1055
      %v1057 = vpop.f32.mrf.mxu0
      %v1058 = vadd.f32 %v1009, %v1057
      %1059 = vmatmul.bf16.gmra.mxu0 %v679
      %v1060 = vpop.f32.mrf.mxu0
      %v1061 = vadd.f32 %v1012, %v1060
      %v1062 = vpop.f32.mrf.mxu0
      %v1063 = vadd.f32 %v1014, %v1062
      %1064 = vmatmul.bf16.gmra.mxu0 %v682
      %v1065 = vpop.f32.mrf.mxu0
      %v1066 = vadd.f32 %v1017, %v1065
      %v1067 = vpop.f32.mrf.mxu0
      %v1068 = vadd.f32 %v1019, %v1067
      %1069 = vmatmul.bf16.gmra.mxu0 %v685
      %v1070 = vpop.f32.mrf.mxu0
      %v1071 = vadd.f32 %v1022, %v1070
      %v1072 = vpop.f32.mrf.mxu0
      %v1073 = vadd.f32 %v1024, %v1072
      %1074 = vmatmul.bf16.gmra.mxu0 %v688
      %v1075 = vpop.f32.mrf.mxu0
      %v1076 = vadd.f32 %v1027, %v1075
      %v1077 = vpop.f32.mrf.mxu0
      %v1078 = vadd.f32 %v1029, %v1077
      %1079 = vmatmul.bf16.gmra.mxu0 %v691
      %v1080 = vpop.f32.mrf.mxu0
      %v1081 = vadd.f32 %v1032, %v1080
      %v1082 = vpop.f32.mrf.mxu0
      %v1083 = vadd.f32 %v1034, %v1082
      %1084 = vdwg.mxu0
      %v1085 = vmax.f32 %v752, %v772
      %v1086 = vmax.f32 %v850, %v870
      %v1087 = vmax.f32 %v948, %v968
      %v1088 = vmax.f32 %v1046, %v1066
      %v1089 = vmax.f32 %v754, %v774
      %v1090 = vmax.f32 %v852, %v872
      %v1091 = vmax.f32 %v950, %v970
      %v1092 = vmax.f32 %v1048, %v1068
      %v1093 = vmax.f32 %v757, %v777
      %v1094 = vmax.f32 %v855, %v875
      %v1095 = vmax.f32 %v953, %v973
      %v1096 = vmax.f32 %v1051, %v1071
      %v1097 = vmax.f32 %v759, %v779
      %v1098 = vmax.f32 %v857, %v877
      %v1099 = vmax.f32 %v955, %v975
      %v1100 = vmax.f32 %v1053, %v1073
      %v1101 = vmax.f32 %v762, %v782
      %v1102 = vmax.f32 %v860, %v880
      %v1103 = vmax.f32 %v958, %v978
      %v1104 = vmax.f32 %v1056, %v1076
      %v1105 = vmax.f32 %v764, %v784
      %v1106 = vmax.f32 %v862, %v882
      %v1107 = vmax.f32 %v960, %v980
      %v1108 = vmax.f32 %v1058, %v1078
      %v1109 = vmax.f32 %v767, %v787
      %v1110 = vmax.f32 %v865, %v885
      %v1111 = vmax.f32 %v963, %v983
      %v1112 = vmax.f32 %v1061, %v1081
      %v1113 = vmax.f32 %v769, %v789
      %v1114 = vmax.f32 %v867, %v887
      %v1115 = vmax.f32 %v965, %v985
      %v1116 = vmax.f32 %v1063, %v1083
      %v1117 = vmax.f32 %v1085, %v1087
      %v1118 = vmax.f32 %v1086, %v1088
      %v1119 = vmax.f32 %v1089, %v1091
      %v1120 = vmax.f32 %v1090, %v1092
      %v1121 = vmax.f32 %v1093, %v1095
      %v1122 = vmax.f32 %v1094, %v1096
      %v1123 = vmax.f32 %v1097, %v1099
      %v1124 = vmax.f32 %v1098, %v1100
      %v1125 = vmax.f32 %v1101, %v1103
      %v1126 = vmax.f32 %v1102, %v1104
      %v1127 = vmax.f32 %v1105, %v1107
      %v1128 = vmax.f32 %v1106, %v1108
      %v1129 = vmax.f32 %v1109, %v1111
      %v1130 = vmax.f32 %v1110, %v1112
      %v1131 = vmax.f32 %v1113, %v1115
      %v1132 = vmax.f32 %v1114, %v1116
      %v1133 = vld [vmem:[%s2] sm:$0x3]
      %v1135 = vperm.slane %v1133, 0
      %v1136 = vperm.slane %v1133, 1
      %v1139 = vadd.f32 %v1117, %v1135
      %v1140 = vadd.f32 %v1118, %v1136
      %v1141 = vadd.f32 %v1119, %v1135
      %v1142 = vadd.f32 %v1120, %v1136
      %v1143 = vadd.f32 %v1121, %v1135
      %v1144 = vadd.f32 %v1122, %v1136
      %v1145 = vadd.f32 %v1123, %v1135
      %v1146 = vadd.f32 %v1124, %v1136
      %v1147 = vadd.f32 %v1125, %v1135
      %v1148 = vadd.f32 %v1126, %v1136
      %v1149 = vadd.f32 %v1127, %v1135
      %v1150 = vadd.f32 %v1128, %v1136
      %v1151 = vadd.f32 %v1129, %v1135
      %v1152 = vadd.f32 %v1130, %v1136
      %v1153 = vadd.f32 %v1131, %v1135
      %v1154 = vadd.f32 %v1132, %v1136
      %v1155 = vmax.f32 %v1139, 0.0
      %v1156 = vmax.f32 %v1140, 0.0
      %v1157 = vmax.f32 %v1141, 0.0
      %v1158 = vmax.f32 %v1142, 0.0
      %v1159 = vmax.f32 %v1143, 0.0
      %v1160 = vmax.f32 %v1144, 0.0
      %v1161 = vmax.f32 %v1145, 0.0
      %v1162 = vmax.f32 %v1146, 0.0
      %v1163 = vmax.f32 %v1147, 0.0
      %v1164 = vmax.f32 %v1148, 0.0
      %v1165 = vmax.f32 %v1149, 0.0
      %v1166 = vmax.f32 %v1150, 0.0
      %v1167 = vmax.f32 %v1151, 0.0
      %v1168 = vmax.f32 %v1152, 0.0
      %v1169 = vmax.f32 %v1153, 0.0
      %v1170 = vmax.f32 %v1154, 0.0
      %v1171 = vpack.c.bf16 %v1156, %v1155
      %v1172 = vpack.c.bf16 %v1158, %v1157
      %v1173 = vpack.c.bf16 %v1160, %v1159
      %v1174 = vpack.c.bf16 %v1162, %v1161
      %v1175 = vpack.c.bf16 %v1164, %v1163
      %v1176 = vpack.c.bf16 %v1166, %v1165
      %v1177 = vpack.c.bf16 %v1168, %v1167
      %v1178 = vpack.c.bf16 %v1170, %v1169
      %v1187 = vunpack.c.l.b16 %v1171
      %v1188 = vunpack.c.h.b16 %v1171
      %v1189 = vunpack.c.l.b16 %v1172
      %v1190 = vunpack.c.h.b16 %v1172
      %v1191 = vunpack.c.l.b16 %v1173
      %v1192 = vunpack.c.h.b16 %v1173
      %v1193 = vunpack.c.l.b16 %v1174
      %v1194 = vunpack.c.h.b16 %v1174
      %v1195 = vunpack.c.l.b16 %v1175
      %v1196 = vunpack.c.h.b16 %v1175
      %v1197 = vunpack.c.l.b16 %v1176
      %v1198 = vunpack.c.h.b16 %v1176
      %v1199 = vunpack.c.l.b16 %v1177
      %v1200 = vunpack.c.h.b16 %v1177
      %v1201 = vunpack.c.l.b16 %v1178
      %v1202 = vunpack.c.h.b16 %v1178
      %v1203 = vpack.c.b16 %v1189, %v1187
      %v1204 = vpack.c.b16 %v1190, %v1188
      %v1205 = vpack.c.b16 %v1193, %v1191
      %v1206 = vpack.c.b16 %v1194, %v1192
      %v1207 = vpack.c.b16 %v1197, %v1195
      %v1208 = vpack.c.b16 %v1198, %v1196
      %v1209 = vpack.c.b16 %v1201, %v1199
      %v1210 = vpack.c.b16 %v1202, %v1200
      %v1219 = vld [vmem:[%s3] sm:$0xff]
      %v1220 = vld [vmem:[%s3 + $0x8] sm:$0xff]
      %v1221 = vld [vmem:[%s3 + $0x10] sm:$0xff]
      %v1222 = vld [vmem:[%s3 + $0x18] sm:$0xff]
      %v1223 = vld [vmem:[%s3 + $0x20] sm:$0xff]
      %v1224 = vld [vmem:[%s3 + $0x28] sm:$0xff]
      %v1225 = vld [vmem:[%s3 + $0x30] sm:$0xff]
      %v1226 = vld [vmem:[%s3 + $0x38] sm:$0xff]
      %v1227 = vld [vmem:[%s3 + $0x40] sm:$0xff]
      %v1228 = vld [vmem:[%s3 + $0x48] sm:$0xff]
      %v1229 = vld [vmem:[%s3 + $0x50] sm:$0xff]
      %v1230 = vld [vmem:[%s3 + $0x58] sm:$0xff]
      %v1231 = vld [vmem:[%s3 + $0x60] sm:$0xff]
      %v1232 = vld [vmem:[%s3 + $0x68] sm:$0xff]
      %v1233 = vld [vmem:[%s3 + $0x70] sm:$0xff]
      %v1234 = vld [vmem:[%s3 + $0x78] sm:$0xff]
      %v1235 = vld [vmem:[%s3 + $0x80] sm:$0xff]
      %v1236 = vld [vmem:[%s3 + $0x88] sm:$0xff]
      %v1237 = vld [vmem:[%s3 + $0x90] sm:$0xff]
      %v1238 = vld [vmem:[%s3 + $0x98] sm:$0xff]
      %v1239 = vld [vmem:[%s3 + $0xa0] sm:$0xff]
      %v1240 = vld [vmem:[%s3 + $0xa8] sm:$0xff]
      %v1241 = vld [vmem:[%s3 + $0xb0] sm:$0xff]
      %v1242 = vld [vmem:[%s3 + $0xb8] sm:$0xff]
      %v1243 = vld [vmem:[%s3 + $0xc0] sm:$0xff]
      %v1244 = vld [vmem:[%s3 + $0xc8] sm:$0xff]
      %v1245 = vld [vmem:[%s3 + $0xd0] sm:$0xff]
      %v1246 = vld [vmem:[%s3 + $0xd8] sm:$0xff]
      %v1247 = vld [vmem:[%s3 + $0xe0] sm:$0xff]
      %v1248 = vld [vmem:[%s3 + $0xe8] sm:$0xff]
      %v1249 = vld [vmem:[%s3 + $0xf0] sm:$0xff]
      %v1250 = vld [vmem:[%s3 + $0xf8] sm:$0xff]
      %v1251 = vld [vmem:[%s3 + $0x100] sm:$0xff]
      %v1252 = vld [vmem:[%s3 + $0x108] sm:$0xff]
      %v1253 = vld [vmem:[%s3 + $0x110] sm:$0xff]
      %v1254 = vld [vmem:[%s3 + $0x118] sm:$0xff]
      %v1255 = vld [vmem:[%s3 + $0x120] sm:$0xff]
      %v1256 = vld [vmem:[%s3 + $0x128] sm:$0xff]
      %v1257 = vld [vmem:[%s3 + $0x130] sm:$0xff]
      %v1258 = vld [vmem:[%s3 + $0x138] sm:$0xff]
      %v1259 = vld [vmem:[%s3 + $0x140] sm:$0xff]
      %v1260 = vld [vmem:[%s3 + $0x148] sm:$0xff]
      %v1261 = vld [vmem:[%s3 + $0x150] sm:$0xff]
      %v1262 = vld [vmem:[%s3 + $0x158] sm:$0xff]
      %v1263 = vld [vmem:[%s3 + $0x160] sm:$0xff]
      %v1264 = vld [vmem:[%s3 + $0x168] sm:$0xff]
      %v1265 = vld [vmem:[%s3 + $0x170] sm:$0xff]
      %v1266 = vld [vmem:[%s3 + $0x178] sm:$0xff]
      %v1267 = vld [vmem:[%s3 + $0x180] sm:$0xff]
      %v1268 = vld [vmem:[%s3 + $0x188] sm:$0xff]
      %v1269 = vld [vmem:[%s3 + $0x190] sm:$0xff]
      %v1270 = vld [vmem:[%s3 + $0x198] sm:$0xff]
      %v1271 = vld [vmem:[%s3 + $0x1a0] sm:$0xff]
      %v1272 = vld [vmem:[%s3 + $0x1a8] sm:$0xff]
      %v1273 = vld [vmem:[%s3 + $0x1b0] sm:$0xff]
      %v1274 = vld [vmem:[%s3 + $0x1b8] sm:$0xff]
      %v1275 = vld [vmem:[%s3 + $0x1c0] sm:$0xff]
      %v1276 = vld [vmem:[%s3 + $0x1c8] sm:$0xff]
      %v1277 = vld [vmem:[%s3 + $0x1d0] sm:$0xff]
      %v1278 = vld [vmem:[%s3 + $0x1d8] sm:$0xff]
      %v1279 = vld [vmem:[%s3 + $0x1e0] sm:$0xff]
      %v1280 = vld [vmem:[%s3 + $0x1e8] sm:$0xff]
      %v1281 = vld [vmem:[%s3 + $0x1f0] sm:$0xff]
      %v1282 = vld [vmem:[%s3 + $0x1f8] sm:$0xff]
      %v1283 = vld [vmem:[%s3 + $0x200] sm:$0xff]
      %v1284 = vld [vmem:[%s3 + $0x208] sm:$0xff]
      %v1285 = vld [vmem:[%s3 + $0x210] sm:$0xff]
      %v1286 = vld [vmem:[%s3 + $0x218] sm:$0xff]
      %v1287 = vld [vmem:[%s3 + $0x220] sm:$0xff]
      %v1288 = vld [vmem:[%s3 + $0x228] sm:$0xff]
      %v1289 = vld [vmem:[%s3 + $0x230] sm:$0xff]
      %v1290 = vld [vmem:[%s3 + $0x238] sm:$0xff]
      %v1291 = vld [vmem:[%s3 + $0x240] sm:$0xff]
      %v1292 = vld [vmem:[%s3 + $0x248] sm:$0xff]
      %v1293 = vld [vmem:[%s3 + $0x250] sm:$0xff]
      %v1294 = vld [vmem:[%s3 + $0x258] sm:$0xff]
      %v1295 = vld [vmem:[%s3 + $0x260] sm:$0xff]
      %v1296 = vld [vmem:[%s3 + $0x268] sm:$0xff]
      %v1297 = vld [vmem:[%s3 + $0x270] sm:$0xff]
      %v1298 = vld [vmem:[%s3 + $0x278] sm:$0xff]
      %v1299 = vld [vmem:[%s3 + $0x280] sm:$0xff]
      %v1300 = vld [vmem:[%s3 + $0x288] sm:$0xff]
      %v1301 = vld [vmem:[%s3 + $0x290] sm:$0xff]
      %v1302 = vld [vmem:[%s3 + $0x298] sm:$0xff]
      %v1303 = vld [vmem:[%s3 + $0x2a0] sm:$0xff]
      %v1304 = vld [vmem:[%s3 + $0x2a8] sm:$0xff]
      %v1305 = vld [vmem:[%s3 + $0x2b0] sm:$0xff]
      %v1306 = vld [vmem:[%s3 + $0x2b8] sm:$0xff]
      %v1307 = vld [vmem:[%s3 + $0x2c0] sm:$0xff]
      %v1308 = vld [vmem:[%s3 + $0x2c8] sm:$0xff]
      %v1309 = vld [vmem:[%s3 + $0x2d0] sm:$0xff]
      %v1310 = vld [vmem:[%s3 + $0x2d8] sm:$0xff]
      %v1311 = vld [vmem:[%s3 + $0x2e0] sm:$0xff]
      %v1312 = vld [vmem:[%s3 + $0x2e8] sm:$0xff]
      %v1313 = vld [vmem:[%s3 + $0x2f0] sm:$0xff]
      %v1314 = vld [vmem:[%s3 + $0x2f8] sm:$0xff]
      %v1315 = vld [vmem:[%s3 + $0x300] sm:$0xff]
      %v1316 = vld [vmem:[%s3 + $0x308] sm:$0xff]
      %v1317 = vld [vmem:[%s3 + $0x310] sm:$0xff]
      %v1318 = vld [vmem:[%s3 + $0x318] sm:$0xff]
      %v1319 = vld [vmem:[%s3 + $0x320] sm:$0xff]
      %v1320 = vld [vmem:[%s3 + $0x328] sm:$0xff]
      %v1321 = vld [vmem:[%s3 + $0x330] sm:$0xff]
      %v1322 = vld [vmem:[%s3 + $0x338] sm:$0xff]
      %v1323 = vld [vmem:[%s3 + $0x340] sm:$0xff]
      %v1324 = vld [vmem:[%s3 + $0x348] sm:$0xff]
      %v1325 = vld [vmem:[%s3 + $0x350] sm:$0xff]
      %v1326 = vld [vmem:[%s3 + $0x358] sm:$0xff]
      %v1327 = vld [vmem:[%s3 + $0x360] sm:$0xff]
      %v1328 = vld [vmem:[%s3 + $0x368] sm:$0xff]
      %v1329 = vld [vmem:[%s3 + $0x370] sm:$0xff]
      %v1330 = vld [vmem:[%s3 + $0x378] sm:$0xff]
      %v1331 = vld [vmem:[%s3 + $0x380] sm:$0xff]
      %v1332 = vld [vmem:[%s3 + $0x388] sm:$0xff]
      %v1333 = vld [vmem:[%s3 + $0x390] sm:$0xff]
      %v1334 = vld [vmem:[%s3 + $0x398] sm:$0xff]
      %v1335 = vld [vmem:[%s3 + $0x3a0] sm:$0xff]
      %v1336 = vld [vmem:[%s3 + $0x3a8] sm:$0xff]
      %v1337 = vld [vmem:[%s3 + $0x3b0] sm:$0xff]
      %v1338 = vld [vmem:[%s3 + $0x3b8] sm:$0xff]
      %v1339 = vld [vmem:[%s3 + $0x3c0] sm:$0xff]
      %v1340 = vld [vmem:[%s3 + $0x3c8] sm:$0xff]
      %v1341 = vld [vmem:[%s3 + $0x3d0] sm:$0xff]
      %v1342 = vld [vmem:[%s3 + $0x3d8] sm:$0xff]
      %v1343 = vld [vmem:[%s3 + $0x3e0] sm:$0xff]
      %v1344 = vld [vmem:[%s3 + $0x3e8] sm:$0xff]
      %v1345 = vld [vmem:[%s3 + $0x3f0] sm:$0xff]
      %v1346 = vld [vmem:[%s3 + $0x3f8] sm:$0xff]
      %v1347 = vld [vmem:[%s3 + $0x400] sm:$0xff]
      %v1348 = vld [vmem:[%s3 + $0x408] sm:$0xff]
      %v1349 = vld [vmem:[%s3 + $0x410] sm:$0xff]
      %v1350 = vld [vmem:[%s3 + $0x418] sm:$0xff]
      %v1351 = vld [vmem:[%s3 + $0x420] sm:$0xff]
      %v1352 = vld [vmem:[%s3 + $0x428] sm:$0xff]
      %v1353 = vld [vmem:[%s3 + $0x430] sm:$0xff]
      %v1354 = vld [vmem:[%s3 + $0x438] sm:$0xff]
      %v1355 = vld [vmem:[%s3 + $0x440] sm:$0xff]
      %v1356 = vld [vmem:[%s3 + $0x448] sm:$0xff]
      %v1357 = vld [vmem:[%s3 + $0x450] sm:$0xff]
      %v1358 = vld [vmem:[%s3 + $0x458] sm:$0xff]
      %v1359 = vld [vmem:[%s3 + $0x460] sm:$0xff]
      %v1360 = vld [vmem:[%s3 + $0x468] sm:$0xff]
      %v1361 = vld [vmem:[%s3 + $0x470] sm:$0xff]
      %v1362 = vld [vmem:[%s3 + $0x478] sm:$0xff]
      %v1363 = vld [vmem:[%s3 + $0x480] sm:$0xff]
      %v1364 = vld [vmem:[%s3 + $0x488] sm:$0xff]
      %v1365 = vld [vmem:[%s3 + $0x490] sm:$0xff]
      %v1366 = vld [vmem:[%s3 + $0x498] sm:$0xff]
      %v1367 = vld [vmem:[%s3 + $0x4a0] sm:$0xff]
      %v1368 = vld [vmem:[%s3 + $0x4a8] sm:$0xff]
      %v1369 = vld [vmem:[%s3 + $0x4b0] sm:$0xff]
      %v1370 = vld [vmem:[%s3 + $0x4b8] sm:$0xff]
      %v1371 = vld [vmem:[%s3 + $0x4c0] sm:$0xff]
      %v1372 = vld [vmem:[%s3 + $0x4c8] sm:$0xff]
      %v1373 = vld [vmem:[%s3 + $0x4d0] sm:$0xff]
      %v1374 = vld [vmem:[%s3 + $0x4d8] sm:$0xff]
      %v1375 = vld [vmem:[%s3 + $0x4e0] sm:$0xff]
      %v1376 = vld [vmem:[%s3 + $0x4e8] sm:$0xff]
      %v1377 = vld [vmem:[%s3 + $0x4f0] sm:$0xff]
      %v1378 = vld [vmem:[%s3 + $0x4f8] sm:$0xff]
      %v1539 = vunpack.c.l.b16 %v1219
      %v1540 = vunpack.c.h.b16 %v1219
      %v1541 = vunpack.c.l.b16 %v1220
      %v1542 = vunpack.c.h.b16 %v1220
      %v1543 = vunpack.c.l.b16 %v1221
      %v1544 = vunpack.c.h.b16 %v1221
      %v1545 = vunpack.c.l.b16 %v1222
      %v1546 = vunpack.c.h.b16 %v1222
      %v1547 = vunpack.c.l.b16 %v1223
      %v1548 = vunpack.c.h.b16 %v1223
      %v1549 = vunpack.c.l.b16 %v1224
      %v1550 = vunpack.c.h.b16 %v1224
      %v1551 = vunpack.c.l.b16 %v1225
      %v1552 = vunpack.c.h.b16 %v1225
      %v1553 = vunpack.c.l.b16 %v1226
      %v1554 = vunpack.c.h.b16 %v1226
      %v1555 = vunpack.c.l.b16 %v1227
      %v1556 = vunpack.c.h.b16 %v1227
      %v1557 = vunpack.c.l.b16 %v1228
      %v1558 = vunpack.c.h.b16 %v1228
      %v1559 = vunpack.c.l.b16 %v1229
      %v1560 = vunpack.c.h.b16 %v1229
      %v1561 = vunpack.c.l.b16 %v1230
      %v1562 = vunpack.c.h.b16 %v1230
      %v1563 = vunpack.c.l.b16 %v1231
      %v1564 = vunpack.c.h.b16 %v1231
      %v1565 = vunpack.c.l.b16 %v1232
      %v1566 = vunpack.c.h.b16 %v1232
      %v1567 = vunpack.c.l.b16 %v1233
      %v1568 = vunpack.c.h.b16 %v1233
      %v1569 = vunpack.c.l.b16 %v1234
      %v1570 = vunpack.c.h.b16 %v1234
      %v1571 = vunpack.c.l.b16 %v1235
      %v1572 = vunpack.c.h.b16 %v1235
      %v1573 = vunpack.c.l.b16 %v1236
      %v1574 = vunpack.c.h.b16 %v1236
      %v1575 = vunpack.c.l.b16 %v1237
      %v1576 = vunpack.c.h.b16 %v1237
      %v1577 = vunpack.c.l.b16 %v1238
      %v1578 = vunpack.c.h.b16 %v1238
      %v1579 = vunpack.c.l.b16 %v1239
      %v1580 = vunpack.c.h.b16 %v1239
      %v1581 = vunpack.c.l.b16 %v1240
      %v1582 = vunpack.c.h.b16 %v1240
      %v1583 = vunpack.c.l.b16 %v1241
      %v1584 = vunpack.c.h.b16 %v1241
      %v1585 = vunpack.c.l.b16 %v1242
      %v1586 = vunpack.c.h.b16 %v1242
      %v1587 = vunpack.c.l.b16 %v1243
      %v1588 = vunpack.c.h.b16 %v1243
      %v1589 = vunpack.c.l.b16 %v1244
      %v1590 = vunpack.c.h.b16 %v1244
      %v1591 = vunpack.c.l.b16 %v1245
      %v1592 = vunpack.c.h.b16 %v1245
      %v1593 = vunpack.c.l.b16 %v1246
      %v1594 = vunpack.c.h.b16 %v1246
      %v1595 = vunpack.c.l.b16 %v1247
      %v1596 = vunpack.c.h.b16 %v1247
      %v1597 = vunpack.c.l.b16 %v1248
      %v1598 = vunpack.c.h.b16 %v1248
      %v1599 = vunpack.c.l.b16 %v1249
      %v1600 = vunpack.c.h.b16 %v1249
      %v1601 = vunpack.c.l.b16 %v1250
      %v1602 = vunpack.c.h.b16 %v1250
      %v1603 = vunpack.c.l.b16 %v1251
      %v1604 = vunpack.c.h.b16 %v1251
      %v1605 = vunpack.c.l.b16 %v1252
      %v1606 = vunpack.c.h.b16 %v1252
      %v1607 = vunpack.c.l.b16 %v1253
      %v1608 = vunpack.c.h.b16 %v1253
      %v1609 = vunpack.c.l.b16 %v1254
      %v1610 = vunpack.c.h.b16 %v1254
      %v1611 = vunpack.c.l.b16 %v1255
      %v1612 = vunpack.c.h.b16 %v1255
      %v1613 = vunpack.c.l.b16 %v1256
      %v1614 = vunpack.c.h.b16 %v1256
      %v1615 = vunpack.c.l.b16 %v1257
      %v1616 = vunpack.c.h.b16 %v1257
      %v1617 = vunpack.c.l.b16 %v1258
      %v1618 = vunpack.c.h.b16 %v1258
      %v1619 = vunpack.c.l.b16 %v1259
      %v1620 = vunpack.c.h.b16 %v1259
      %v1621 = vunpack.c.l.b16 %v1260
      %v1622 = vunpack.c.h.b16 %v1260
      %v1623 = vunpack.c.l.b16 %v1261
      %v1624 = vunpack.c.h.b16 %v1261
      %v1625 = vunpack.c.l.b16 %v1262
      %v1626 = vunpack.c.h.b16 %v1262
      %v1627 = vunpack.c.l.b16 %v1263
      %v1628 = vunpack.c.h.b16 %v1263
      %v1629 = vunpack.c.l.b16 %v1264
      %v1630 = vunpack.c.h.b16 %v1264
      %v1631 = vunpack.c.l.b16 %v1265
      %v1632 = vunpack.c.h.b16 %v1265
      %v1633 = vunpack.c.l.b16 %v1266
      %v1634 = vunpack.c.h.b16 %v1266
      %v1635 = vunpack.c.l.b16 %v1267
      %v1636 = vunpack.c.h.b16 %v1267
      %v1637 = vunpack.c.l.b16 %v1268
      %v1638 = vunpack.c.h.b16 %v1268
      %v1639 = vunpack.c.l.b16 %v1269
      %v1640 = vunpack.c.h.b16 %v1269
      %v1641 = vunpack.c.l.b16 %v1270
      %v1642 = vunpack.c.h.b16 %v1270
      %v1643 = vunpack.c.l.b16 %v1271
      %v1644 = vunpack.c.h.b16 %v1271
      %v1645 = vunpack.c.l.b16 %v1272
      %v1646 = vunpack.c.h.b16 %v1272
      %v1647 = vunpack.c.l.b16 %v1273
      %v1648 = vunpack.c.h.b16 %v1273
      %v1649 = vunpack.c.l.b16 %v1274
      %v1650 = vunpack.c.h.b16 %v1274
      %v1651 = vunpack.c.l.b16 %v1275
      %v1652 = vunpack.c.h.b16 %v1275
      %v1653 = vunpack.c.l.b16 %v1276
      %v1654 = vunpack.c.h.b16 %v1276
      %v1655 = vunpack.c.l.b16 %v1277
      %v1656 = vunpack.c.h.b16 %v1277
      %v1657 = vunpack.c.l.b16 %v1278
      %v1658 = vunpack.c.h.b16 %v1278
      %v1659 = vunpack.c.l.b16 %v1279
      %v1660 = vunpack.c.h.b16 %v1279
      %v1661 = vunpack.c.l.b16 %v1280
      %v1662 = vunpack.c.h.b16 %v1280
      %v1663 = vunpack.c.l.b16 %v1281
      %v1664 = vunpack.c.h.b16 %v1281
      %v1665 = vunpack.c.l.b16 %v1282
      %v1666 = vunpack.c.h.b16 %v1282
      %v1667 = vunpack.c.l.b16 %v1283
      %v1668 = vunpack.c.h.b16 %v1283
      %v1669 = vunpack.c.l.b16 %v1284
      %v1670 = vunpack.c.h.b16 %v1284
      %v1671 = vunpack.c.l.b16 %v1285
      %v1672 = vunpack.c.h.b16 %v1285
      %v1673 = vunpack.c.l.b16 %v1286
      %v1674 = vunpack.c.h.b16 %v1286
      %v1675 = vunpack.c.l.b16 %v1287
      %v1676 = vunpack.c.h.b16 %v1287
      %v1677 = vunpack.c.l.b16 %v1288
      %v1678 = vunpack.c.h.b16 %v1288
      %v1679 = vunpack.c.l.b16 %v1289
      %v1680 = vunpack.c.h.b16 %v1289
      %v1681 = vunpack.c.l.b16 %v1290
      %v1682 = vunpack.c.h.b16 %v1290
      %v1683 = vunpack.c.l.b16 %v1291
      %v1684 = vunpack.c.h.b16 %v1291
      %v1685 = vunpack.c.l.b16 %v1292
      %v1686 = vunpack.c.h.b16 %v1292
      %v1687 = vunpack.c.l.b16 %v1293
      %v1688 = vunpack.c.h.b16 %v1293
      %v1689 = vunpack.c.l.b16 %v1294
      %v1690 = vunpack.c.h.b16 %v1294
      %v1691 = vunpack.c.l.b16 %v1295
      %v1692 = vunpack.c.h.b16 %v1295
      %v1693 = vunpack.c.l.b16 %v1296
      %v1694 = vunpack.c.h.b16 %v1296
      %v1695 = vunpack.c.l.b16 %v1297
      %v1696 = vunpack.c.h.b16 %v1297
      %v1697 = vunpack.c.l.b16 %v1298
      %v1698 = vunpack.c.h.b16 %v1298
      %v1699 = vunpack.c.l.b16 %v1299
      %v1700 = vunpack.c.h.b16 %v1299
      %v1701 = vunpack.c.l.b16 %v1300
      %v1702 = vunpack.c.h.b16 %v1300
      %v1703 = vunpack.c.l.b16 %v1301
      %v1704 = vunpack.c.h.b16 %v1301
      %v1705 = vunpack.c.l.b16 %v1302
      %v1706 = vunpack.c.h.b16 %v1302
      %v1707 = vunpack.c.l.b16 %v1303
      %v1708 = vunpack.c.h.b16 %v1303
      %v1709 = vunpack.c.l.b16 %v1304
      %v1710 = vunpack.c.h.b16 %v1304
      %v1711 = vunpack.c.l.b16 %v1305
      %v1712 = vunpack.c.h.b16 %v1305
      %v1713 = vunpack.c.l.b16 %v1306
      %v1714 = vunpack.c.h.b16 %v1306
      %v1715 = vunpack.c.l.b16 %v1307
      %v1716 = vunpack.c.h.b16 %v1307
      %v1717 = vunpack.c.l.b16 %v1308
      %v1718 = vunpack.c.h.b16 %v1308
      %v1719 = vunpack.c.l.b16 %v1309
      %v1720 = vunpack.c.h.b16 %v1309
      %v1721 = vunpack.c.l.b16 %v1310
      %v1722 = vunpack.c.h.b16 %v1310
      %v1723 = vunpack.c.l.b16 %v1311
      %v1724 = vunpack.c.h.b16 %v1311
      %v1725 = vunpack.c.l.b16 %v1312
      %v1726 = vunpack.c.h.b16 %v1312
      %v1727 = vunpack.c.l.b16 %v1313
      %v1728 = vunpack.c.h.b16 %v1313
      %v1729 = vunpack.c.l.b16 %v1314
      %v1730 = vunpack.c.h.b16 %v1314
      %v1731 = vunpack.c.l.b16 %v1315
      %v1732 = vunpack.c.h.b16 %v1315
      %v1733 = vunpack.c.l.b16 %v1316
      %v1734 = vunpack.c.h.b16 %v1316
      %v1735 = vunpack.c.l.b16 %v1317
      %v1736 = vunpack.c.h.b16 %v1317
      %v1737 = vunpack.c.l.b16 %v1318
      %v1738 = vunpack.c.h.b16 %v1318
      %v1739 = vunpack.c.l.b16 %v1319
      %v1740 = vunpack.c.h.b16 %v1319
      %v1741 = vunpack.c.l.b16 %v1320
      %v1742 = vunpack.c.h.b16 %v1320
      %v1743 = vunpack.c.l.b16 %v1321
      %v1744 = vunpack.c.h.b16 %v1321
      %v1745 = vunpack.c.l.b16 %v1322
      %v1746 = vunpack.c.h.b16 %v1322
      %v1747 = vunpack.c.l.b16 %v1323
      %v1748 = vunpack.c.h.b16 %v1323
      %v1749 = vunpack.c.l.b16 %v1324
      %v1750 = vunpack.c.h.b16 %v1324
      %v1751 = vunpack.c.l.b16 %v1325
      %v1752 = vunpack.c.h.b16 %v1325
      %v1753 = vunpack.c.l.b16 %v1326
      %v1754 = vunpack.c.h.b16 %v1326
      %v1755 = vunpack.c.l.b16 %v1327
      %v1756 = vunpack.c.h.b16 %v1327
      %v1757 = vunpack.c.l.b16 %v1328
      %v1758 = vunpack.c.h.b16 %v1328
      %v1759 = vunpack.c.l.b16 %v1329
      %v1760 = vunpack.c.h.b16 %v1329
      %v1761 = vunpack.c.l.b16 %v1330
      %v1762 = vunpack.c.h.b16 %v1330
      %v1763 = vunpack.c.l.b16 %v1331
      %v1764 = vunpack.c.h.b16 %v1331
      %v1765 = vunpack.c.l.b16 %v1332
      %v1766 = vunpack.c.h.b16 %v1332
      %v1767 = vunpack.c.l.b16 %v1333
      %v1768 = vunpack.c.h.b16 %v1333
      %v1769 = vunpack.c.l.b16 %v1334
      %v1770 = vunpack.c.h.b16 %v1334
      %v1771 = vunpack.c.l.b16 %v1335
      %v1772 = vunpack.c.h.b16 %v1335
      %v1773 = vunpack.c.l.b16 %v1336
      %v1774 = vunpack.c.h.b16 %v1336
      %v1775 = vunpack.c.l.b16 %v1337
      %v1776 = vunpack.c.h.b16 %v1337
      %v1777 = vunpack.c.l.b16 %v1338
      %v1778 = vunpack.c.h.b16 %v1338
      %v1779 = vunpack.c.l.b16 %v1339
      %v1780 = vunpack.c.h.b16 %v1339
      %v1781 = vunpack.c.l.b16 %v1340
      %v1782 = vunpack.c.h.b16 %v1340
      %v1783 = vunpack.c.l.b16 %v1341
      %v1784 = vunpack.c.h.b16 %v1341
      %v1785 = vunpack.c.l.b16 %v1342
      %v1786 = vunpack.c.h.b16 %v1342
      %v1787 = vunpack.c.l.b16 %v1343
      %v1788 = vunpack.c.h.b16 %v1343
      %v1789 = vunpack.c.l.b16 %v1344
      %v1790 = vunpack.c.h.b16 %v1344
      %v1791 = vunpack.c.l.b16 %v1345
      %v1792 = vunpack.c.h.b16 %v1345
      %v1793 = vunpack.c.l.b16 %v1346
      %v1794 = vunpack.c.h.b16 %v1346
      %v1795 = vunpack.c.l.b16 %v1347
      %v1796 = vunpack.c.h.b16 %v1347
      %v1797 = vunpack.c.l.b16 %v1348
      %v1798 = vunpack.c.h.b16 %v1348
      %v1799 = vunpack.c.l.b16 %v1349
      %v1800 = vunpack.c.h.b16 %v1349
      %v1801 = vunpack.c.l.b16 %v1350
      %v1802 = vunpack.c.h.b16 %v1350
      %v1803 = vunpack.c.l.b16 %v1351
      %v1804 = vunpack.c.h.b16 %v1351
      %v1805 = vunpack.c.l.b16 %v1352
      %v1806 = vunpack.c.h.b16 %v1352
      %v1807 = vunpack.c.l.b16 %v1353
      %v1808 = vunpack.c.h.b16 %v1353
      %v1809 = vunpack.c.l.b16 %v1354
      %v1810 = vunpack.c.h.b16 %v1354
      %v1811 = vunpack.c.l.b16 %v1355
      %v1812 = vunpack.c.h.b16 %v1355
      %v1813 = vunpack.c.l.b16 %v1356
      %v1814 = vunpack.c.h.b16 %v1356
      %v1815 = vunpack.c.l.b16 %v1357
      %v1816 = vunpack.c.h.b16 %v1357
      %v1817 = vunpack.c.l.b16 %v1358
      %v1818 = vunpack.c.h.b16 %v1358
      %v1819 = vunpack.c.l.b16 %v1359
      %v1820 = vunpack.c.h.b16 %v1359
      %v1821 = vunpack.c.l.b16 %v1360
      %v1822 = vunpack.c.h.b16 %v1360
      %v1823 = vunpack.c.l.b16 %v1361
      %v1824 = vunpack.c.h.b16 %v1361
      %v1825 = vunpack.c.l.b16 %v1362
      %v1826 = vunpack.c.h.b16 %v1362
      %v1827 = vunpack.c.l.b16 %v1363
      %v1828 = vunpack.c.h.b16 %v1363
      %v1829 = vunpack.c.l.b16 %v1364
      %v1830 = vunpack.c.h.b16 %v1364
      %v1831 = vunpack.c.l.b16 %v1365
      %v1832 = vunpack.c.h.b16 %v1365
      %v1833 = vunpack.c.l.b16 %v1366
      %v1834 = vunpack.c.h.b16 %v1366
      %v1835 = vunpack.c.l.b16 %v1367
      %v1836 = vunpack.c.h.b16 %v1367
      %v1837 = vunpack.c.l.b16 %v1368
      %v1838 = vunpack.c.h.b16 %v1368
      %v1839 = vunpack.c.l.b16 %v1369
      %v1840 = vunpack.c.h.b16 %v1369
      %v1841 = vunpack.c.l.b16 %v1370
      %v1842 = vunpack.c.h.b16 %v1370
      %v1843 = vunpack.c.l.b16 %v1371
      %v1844 = vunpack.c.h.b16 %v1371
      %v1845 = vunpack.c.l.b16 %v1372
      %v1846 = vunpack.c.h.b16 %v1372
      %v1847 = vunpack.c.l.b16 %v1373
      %v1848 = vunpack.c.h.b16 %v1373
      %v1849 = vunpack.c.l.b16 %v1374
      %v1850 = vunpack.c.h.b16 %v1374
      %v1851 = vunpack.c.l.b16 %v1375
      %v1852 = vunpack.c.h.b16 %v1375
      %v1853 = vunpack.c.l.b16 %v1376
      %v1854 = vunpack.c.h.b16 %v1376
      %v1855 = vunpack.c.l.b16 %v1377
      %v1856 = vunpack.c.h.b16 %v1377
      %v1857 = vunpack.c.l.b16 %v1378
      %v1858 = vunpack.c.h.b16 %v1378
      %v1859 = vpack.c.b16 %v1549, %v1539
      %v1860 = vpack.c.b16 %v1550, %v1540
      %v1861 = vpack.c.b16 %v1551, %v1541
      %v1862 = vpack.c.b16 %v1552, %v1542
      %v1863 = vpack.c.b16 %v1553, %v1543
      %v1864 = vpack.c.b16 %v1554, %v1544
      %v1865 = vpack.c.b16 %v1555, %v1545
      %v1866 = vpack.c.b16 %v1556, %v1546
      %v1867 = vpack.c.b16 %v1557, %v1547
      %v1868 = vpack.c.b16 %v1558, %v1548
      %v1869 = vpack.c.b16 %v1569, %v1559
      %v1870 = vpack.c.b16 %v1570, %v1560
      %v1871 = vpack.c.b16 %v1571, %v1561
      %v1872 = vpack.c.b16 %v1572, %v1562
      %v1873 = vpack.c.b16 %v1573, %v1563
      %v1874 = vpack.c.b16 %v1574, %v1564
      %v1875 = vpack.c.b16 %v1575, %v1565
      %v1876 = vpack.c.b16 %v1576, %v1566
      %v1877 = vpack.c.b16 %v1577, %v1567
      %v1878 = vpack.c.b16 %v1578, %v1568
      %v1879 = vpack.c.b16 %v1589, %v1579
      %v1880 = vpack.c.b16 %v1590, %v1580
      %v1881 = vpack.c.b16 %v1591, %v1581
      %v1882 = vpack.c.b16 %v1592, %v1582
      %v1883 = vpack.c.b16 %v1593, %v1583
      %v1884 = vpack.c.b16 %v1594, %v1584
      %v1885 = vpack.c.b16 %v1595, %v1585
      %v1886 = vpack.c.b16 %v1596, %v1586
      %v1887 = vpack.c.b16 %v1597, %v1587
      %v1888 = vpack.c.b16 %v1598, %v1588
      %v1889 = vpack.c.b16 %v1609, %v1599
      %v1890 = vpack.c.b16 %v1610, %v1600
      %v1891 = vpack.c.b16 %v1611, %v1601
      %v1892 = vpack.c.b16 %v1612, %v1602
      %v1893 = vpack.c.b16 %v1613, %v1603
      %v1894 = vpack.c.b16 %v1614, %v1604
      %v1895 = vpack.c.b16 %v1615, %v1605
      %v1896 = vpack.c.b16 %v1616, %v1606
      %v1897 = vpack.c.b16 %v1617, %v1607
      %v1898 = vpack.c.b16 %v1618, %v1608
      %v1899 = vpack.c.b16 %v1629, %v1619
      %v1900 = vpack.c.b16 %v1630, %v1620
      %v1901 = vpack.c.b16 %v1631, %v1621
      %v1902 = vpack.c.b16 %v1632, %v1622
      %v1903 = vpack.c.b16 %v1633, %v1623
      %v1904 = vpack.c.b16 %v1634, %v1624
      %v1905 = vpack.c.b16 %v1635, %v1625
      %v1906 = vpack.c.b16 %v1636, %v1626
      %v1907 = vpack.c.b16 %v1637, %v1627
      %v1908 = vpack.c.b16 %v1638, %v1628
      %v1909 = vpack.c.b16 %v1649, %v1639
      %v1910 = vpack.c.b16 %v1650, %v1640
      %v1911 = vpack.c.b16 %v1651, %v1641
      %v1912 = vpack.c.b16 %v1652, %v1642
      %v1913 = vpack.c.b16 %v1653, %v1643
      %v1914 = vpack.c.b16 %v1654, %v1644
      %v1915 = vpack.c.b16 %v1655, %v1645
      %v1916 = vpack.c.b16 %v1656, %v1646
      %v1917 = vpack.c.b16 %v1657, %v1647
      %v1918 = vpack.c.b16 %v1658, %v1648
      %v1919 = vpack.c.b16 %v1669, %v1659
      %v1920 = vpack.c.b16 %v1670, %v1660
      %v1921 = vpack.c.b16 %v1671, %v1661
      %v1922 = vpack.c.b16 %v1672, %v1662
      %v1923 = vpack.c.b16 %v1673, %v1663
      %v1924 = vpack.c.b16 %v1674, %v1664
      %v1925 = vpack.c.b16 %v1675, %v1665
      %v1926 = vpack.c.b16 %v1676, %v1666
      %v1927 = vpack.c.b16 %v1677, %v1667
      %v1928 = vpack.c.b16 %v1678, %v1668
      %v1929 = vpack.c.b16 %v1689, %v1679
      %v1930 = vpack.c.b16 %v1690, %v1680
      %v1931 = vpack.c.b16 %v1691, %v1681
      %v1932 = vpack.c.b16 %v1692, %v1682
      %v1933 = vpack.c.b16 %v1693, %v1683
      %v1934 = vpack.c.b16 %v1694, %v1684
      %v1935 = vpack.c.b16 %v1695, %v1685
      %v1936 = vpack.c.b16 %v1696, %v1686
      %v1937 = vpack.c.b16 %v1697, %v1687
      %v1938 = vpack.c.b16 %v1698, %v1688
      %v1939 = vpack.c.b16 %v1709, %v1699
      %v1940 = vpack.c.b16 %v1710, %v1700
      %v1941 = vpack.c.b16 %v1711, %v1701
      %v1942 = vpack.c.b16 %v1712, %v1702
      %v1943 = vpack.c.b16 %v1713, %v1703
      %v1944 = vpack.c.b16 %v1714, %v1704
      %v1945 = vpack.c.b16 %v1715, %v1705
      %v1946 = vpack.c.b16 %v1716, %v1706
      %v1947 = vpack.c.b16 %v1717, %v1707
      %v1948 = vpack.c.b16 %v1718, %v1708
      %v1949 = vpack.c.b16 %v1729, %v1719
      %v1950 = vpack.c.b16 %v1730, %v1720
      %v1951 = vpack.c.b16 %v1731, %v1721
      %v1952 = vpack.c.b16 %v1732, %v1722
      %v1953 = vpack.c.b16 %v1733, %v1723
      %v1954 = vpack.c.b16 %v1734, %v1724
      %v1955 = vpack.c.b16 %v1735, %v1725
      %v1956 = vpack.c.b16 %v1736, %v1726
      %v1957 = vpack.c.b16 %v1737, %v1727
      %v1958 = vpack.c.b16 %v1738, %v1728
      %v1959 = vpack.c.b16 %v1749, %v1739
      %v1960 = vpack.c.b16 %v1750, %v1740
      %v1961 = vpack.c.b16 %v1751, %v1741
      %v1962 = vpack.c.b16 %v1752, %v1742
      %v1963 = vpack.c.b16 %v1753, %v1743
      %v1964 = vpack.c.b16 %v1754, %v1744
      %v1965 = vpack.c.b16 %v1755, %v1745
      %v1966 = vpack.c.b16 %v1756, %v1746
      %v1967 = vpack.c.b16 %v1757, %v1747
      %v1968 = vpack.c.b16 %v1758, %v1748
      %v1969 = vpack.c.b16 %v1769, %v1759
      %v1970 = vpack.c.b16 %v1770, %v1760
      %v1971 = vpack.c.b16 %v1771, %v1761
      %v1972 = vpack.c.b16 %v1772, %v1762
      %v1973 = vpack.c.b16 %v1773, %v1763
      %v1974 = vpack.c.b16 %v1774, %v1764
      %v1975 = vpack.c.b16 %v1775, %v1765
      %v1976 = vpack.c.b16 %v1776, %v1766
      %v1977 = vpack.c.b16 %v1777, %v1767
      %v1978 = vpack.c.b16 %v1778, %v1768
      %v1979 = vpack.c.b16 %v1789, %v1779
      %v1980 = vpack.c.b16 %v1790, %v1780
      %v1981 = vpack.c.b16 %v1791, %v1781
      %v1982 = vpack.c.b16 %v1792, %v1782
      %v1983 = vpack.c.b16 %v1793, %v1783
      %v1984 = vpack.c.b16 %v1794, %v1784
      %v1985 = vpack.c.b16 %v1795, %v1785
      %v1986 = vpack.c.b16 %v1796, %v1786
      %v1987 = vpack.c.b16 %v1797, %v1787
      %v1988 = vpack.c.b16 %v1798, %v1788
      %v1989 = vpack.c.b16 %v1809, %v1799
      %v1990 = vpack.c.b16 %v1810, %v1800
      %v1991 = vpack.c.b16 %v1811, %v1801
      %v1992 = vpack.c.b16 %v1812, %v1802
      %v1993 = vpack.c.b16 %v1813, %v1803
      %v1994 = vpack.c.b16 %v1814, %v1804
      %v1995 = vpack.c.b16 %v1815, %v1805
      %v1996 = vpack.c.b16 %v1816, %v1806
      %v1997 = vpack.c.b16 %v1817, %v1807
      %v1998 = vpack.c.b16 %v1818, %v1808
      %v1999 = vpack.c.b16 %v1829, %v1819
      %v2000 = vpack.c.b16 %v1830, %v1820
      %v2001 = vpack.c.b16 %v1831, %v1821
      %v2002 = vpack.c.b16 %v1832, %v1822
      %v2003 = vpack.c.b16 %v1833, %v1823
      %v2004 = vpack.c.b16 %v1834, %v1824
      %v2005 = vpack.c.b16 %v1835, %v1825
      %v2006 = vpack.c.b16 %v1836, %v1826
      %v2007 = vpack.c.b16 %v1837, %v1827
      %v2008 = vpack.c.b16 %v1838, %v1828
      %v2009 = vpack.c.b16 %v1849, %v1839
      %v2010 = vpack.c.b16 %v1850, %v1840
      %v2011 = vpack.c.b16 %v1851, %v1841
      %v2012 = vpack.c.b16 %v1852, %v1842
      %v2013 = vpack.c.b16 %v1853, %v1843
      %v2014 = vpack.c.b16 %v1854, %v1844
      %v2015 = vpack.c.b16 %v1855, %v1845
      %v2016 = vpack.c.b16 %v1856, %v1846
      %v2017 = vpack.c.b16 %v1857, %v1847
      %v2018 = vpack.c.b16 %v1858, %v1848
      %2179 = vmatpush.bf16.msra.mxu0 %v1929
      %2180 = vmatpush.bf16.msra.mxu0 %v1919
      %2181 = vmatpush.bf16.msra.mxu0 %v1909
      %2182 = vmatpush.bf16.msra.mxu0 %v1899
      %2183 = vmatpush.bf16.msra.mxu0 %v1889
      %2184 = vmatpush.bf16.msra.mxu0 %v1879
      %2185 = vmatpush.bf16.msra.mxu0 %v1869
      %2186 = vmatpush.bf16.msra.mxu0 %v1859
      %2187 = vmatmul.bf16.gmra.mxu0 %v1203
      %v2188 = vpop.f32.mrf.mxu0
      %v2189 = vadd.f32 0.0, %v2188
      %v2190 = vpop.f32.mrf.mxu0
      %v2191 = vadd.f32 0.0, %v2190
      %2192 = vmatmul.bf16.gmra.mxu0 %v1205
      %v2193 = vpop.f32.mrf.mxu0
      %v2194 = vadd.f32 0.0, %v2193
      %v2195 = vpop.f32.mrf.mxu0
      %v2196 = vadd.f32 0.0, %v2195
      %2197 = vmatmul.bf16.gmra.mxu0 %v1207
      %v2198 = vpop.f32.mrf.mxu0
      %v2199 = vadd.f32 0.0, %v2198
      %v2200 = vpop.f32.mrf.mxu0
      %v2201 = vadd.f32 0.0, %v2200
      %2202 = vmatmul.bf16.gmra.mxu0 %v1209
      %v2203 = vpop.f32.mrf.mxu0
      %v2204 = vadd.f32 0.0, %v2203
      %v2205 = vpop.f32.mrf.mxu0
      %v2206 = vadd.f32 0.0, %v2205
      %2207 = vmatmul.bf16.gmra.mxu0 0
      %v2208 = vpop.f32.mrf.mxu0
      %v2209 = vadd.f32 0.0, %v2208
      %v2210 = vpop.f32.mrf.mxu0
      %2211 = vdwg.mxu0
      %2212 = vmatpush.bf16.msra.mxu0 %v2009
      %2213 = vmatpush.bf16.msra.mxu0 %v1999
      %2214 = vmatpush.bf16.msra.mxu0 %v1989
      %2215 = vmatpush.bf16.msra.mxu0 %v1979
      %2216 = vmatpush.bf16.msra.mxu0 %v1969
      %2217 = vmatpush.bf16.msra.mxu0 %v1959
      %2218 = vmatpush.bf16.msra.mxu0 %v1949
      %2219 = vmatpush.bf16.msra.mxu0 %v1939
      %2220 = vmatmul.bf16.gmra.mxu0 %v1204
      %v2221 = vpop.f32.mrf.mxu0
      %v2222 = vadd.f32 %v2189, %v2221
      %v2223 = vpop.f32.mrf.mxu0
      %v2224 = vadd.f32 %v2191, %v2223
      %2225 = vmatmul.bf16.gmra.mxu0 %v1206
      %v2226 = vpop.f32.mrf.mxu0
      %v2227 = vadd.f32 %v2194, %v2226
      %v2228 = vpop.f32.mrf.mxu0
      %v2229 = vadd.f32 %v2196, %v2228
      %2230 = vmatmul.bf16.gmra.mxu0 %v1208
      %v2231 = vpop.f32.mrf.mxu0
      %v2232 = vadd.f32 %v2199, %v2231
      %v2233 = vpop.f32.mrf.mxu0
      %v2234 = vadd.f32 %v2201, %v2233
      %2235 = vmatmul.bf16.gmra.mxu0 %v1210
      %v2236 = vpop.f32.mrf.mxu0
      %v2237 = vadd.f32 %v2204, %v2236
      %v2238 = vpop.f32.mrf.mxu0
      %v2239 = vadd.f32 %v2206, %v2238
      %2240 = vmatmul.bf16.gmra.mxu0 0
      %v2241 = vpop.f32.mrf.mxu0
      %v2242 = vadd.f32 %v2209, %v2241
      %v2243 = vpop.f32.mrf.mxu0
      %2244 = vdwg.mxu0
      %2245 = vmatpush.bf16.msra.mxu0 %v1930
      %2246 = vmatpush.bf16.msra.mxu0 %v1920
      %2247 = vmatpush.bf16.msra.mxu0 %v1910
      %2248 = vmatpush.bf16.msra.mxu0 %v1900
      %2249 = vmatpush.bf16.msra.mxu0 %v1890
      %2250 = vmatpush.bf16.msra.mxu0 %v1880
      %2251 = vmatpush.bf16.msra.mxu0 %v1870
      %2252 = vmatpush.bf16.msra.mxu0 %v1860
      %2253 = vmatmul.bf16.gmra.mxu0 %v1203
      %v2254 = vpop.f32.mrf.mxu0
      %v2255 = vadd.f32 0.0, %v2254
      %v2256 = vpop.f32.mrf.mxu0
      %v2257 = vadd.f32 0.0, %v2256
      %2258 = vmatmul.bf16.gmra.mxu0 %v1205
      %v2259 = vpop.f32.mrf.mxu0
      %v2260 = vadd.f32 0.0, %v2259
      %v2261 = vpop.f32.mrf.mxu0
      %v2262 = vadd.f32 0.0, %v2261
      %2263 = vmatmul.bf16.gmra.mxu0 %v1207
      %v2264 = vpop.f32.mrf.mxu0
      %v2265 = vadd.f32 0.0, %v2264
      %v2266 = vpop.f32.mrf.mxu0
      %v2267 = vadd.f32 0.0, %v2266
      %2268 = vmatmul.bf16.gmra.mxu0 %v1209
      %v2269 = vpop.f32.mrf.mxu0
      %v2270 = vadd.f32 0.0, %v2269
      %v2271 = vpop.f32.mrf.mxu0
      %v2272 = vadd.f32 0.0, %v2271
      %2273 = vmatmul.bf16.gmra.mxu0 0
      %v2274 = vpop.f32.mrf.mxu0
      %v2275 = vadd.f32 0.0, %v2274
      %v2276 = vpop.f32.mrf.mxu0
      %2277 = vdwg.mxu0
      %2278 = vmatpush.bf16.msra.mxu0 %v2010
      %2279 = vmatpush.bf16.msra.mxu0 %v2000
      %2280 = vmatpush.bf16.msra.mxu0 %v1990
      %2281 = vmatpush.bf16.msra.mxu0 %v1980
      %2282 = vmatpush.bf16.msra.mxu0 %v1970
      %2283 = vmatpush.bf16.msra.mxu0 %v1960
      %2284 = vmatpush.bf16.msra.mxu0 %v1950
      %2285 = vmatpush.bf16.msra.mxu0 %v1940
      %2286 = vmatmul.bf16.gmra.mxu0 %v1204
      %v2287 = vpop.f32.mrf.mxu0
      %v2288 = vadd.f32 %v2255, %v2287
      %v2289 = vpop.f32.mrf.mxu0
      %v2290 = vadd.f32 %v2257, %v2289
      %2291 = vmatmul.bf16.gmra.mxu0 %v1206
      %v2292 = vpop.f32.mrf.mxu0
      %v2293 = vadd.f32 %v2260, %v2292
      %v2294 = vpop.f32.mrf.mxu0
      %v2295 = vadd.f32 %v2262, %v2294
      %2296 = vmatmul.bf16.gmra.mxu0 %v1208
      %v2297 = vpop.f32.mrf.mxu0
      %v2298 = vadd.f32 %v2265, %v2297
      %v2299 = vpop.f32.mrf.mxu0
      %v2300 = vadd.f32 %v2267, %v2299
      %2301 = vmatmul.bf16.gmra.mxu0 %v1210
      %v2302 = vpop.f32.mrf.mxu0
      %v2303 = vadd.f32 %v2270, %v2302
      %v2304 = vpop.f32.mrf.mxu0
      %v2305 = vadd.f32 %v2272, %v2304
      %2306 = vmatmul.bf16.gmra.mxu0 0
      %v2307 = vpop.f32.mrf.mxu0
      %v2308 = vadd.f32 %v2275, %v2307
      %v2309 = vpop.f32.mrf.mxu0
      %2310 = vdwg.mxu0
      %2311 = vmatpush.bf16.msra.mxu0 %v1931
      %2312 = vmatpush.bf16.msra.mxu0 %v1921
      %2313 = vmatpush.bf16.msra.mxu0 %v1911
      %2314 = vmatpush.bf16.msra.mxu0 %v1901
      %2315 = vmatpush.bf16.msra.mxu0 %v1891
      %2316 = vmatpush.bf16.msra.mxu0 %v1881
      %2317 = vmatpush.bf16.msra.mxu0 %v1871
      %2318 = vmatpush.bf16.msra.mxu0 %v1861
      %2319 = vmatmul.bf16.gmra.mxu0 %v1203
      %v2320 = vpop.f32.mrf.mxu0
      %v2321 = vadd.f32 0.0, %v2320
      %v2322 = vpop.f32.mrf.mxu0
      %v2323 = vadd.f32 0.0, %v2322
      %2324 = vmatmul.bf16.gmra.mxu0 %v1205
      %v2325 = vpop.f32.mrf.mxu0
      %v2326 = vadd.f32 0.0, %v2325
      %v2327 = vpop.f32.mrf.mxu0
      %v2328 = vadd.f32 0.0, %v2327
      %2329 = vmatmul.bf16.gmra.mxu0 %v1207
      %v2330 = vpop.f32.mrf.mxu0
      %v2331 = vadd.f32 0.0, %v2330
      %v2332 = vpop.f32.mrf.mxu0
      %v2333 = vadd.f32 0.0, %v2332
      %2334 = vmatmul.bf16.gmra.mxu0 %v1209
      %v2335 = vpop.f32.mrf.mxu0
      %v2336 = vadd.f32 0.0, %v2335
      %v2337 = vpop.f32.mrf.mxu0
      %v2338 = vadd.f32 0.0, %v2337
      %2339 = vmatmul.bf16.gmra.mxu0 0
      %v2340 = vpop.f32.mrf.mxu0
      %v2341 = vadd.f32 0.0, %v2340
      %v2342 = vpop.f32.mrf.mxu0
      %2343 = vdwg.mxu0
      %2344 = vmatpush.bf16.msra.mxu0 %v2011
      %2345 = vmatpush.bf16.msra.mxu0 %v2001
      %2346 = vmatpush.bf16.msra.mxu0 %v1991
      %2347 = vmatpush.bf16.msra.mxu0 %v1981
      %2348 = vmatpush.bf16.msra.mxu0 %v1971
      %2349 = vmatpush.bf16.msra.mxu0 %v1961
      %2350 = vmatpush.bf16.msra.mxu0 %v1951
      %2351 = vmatpush.bf16.msra.mxu0 %v1941
      %2352 = vmatmul.bf16.gmra.mxu0 %v1204
      %v2353 = vpop.f32.mrf.mxu0
      %v2354 = vadd.f32 %v2321, %v2353
      %v2355 = vpop.f32.mrf.mxu0
      %v2356 = vadd.f32 %v2323, %v2355
      %2357 = vmatmul.bf16.gmra.mxu0 %v1206
      %v2358 = vpop.f32.mrf.mxu0
      %v2359 = vadd.f32 %v2326, %v2358
      %v2360 = vpop.f32.mrf.mxu0
      %v2361 = vadd.f32 %v2328, %v2360
      %2362 = vmatmul.bf16.gmra.mxu0 %v1208
      %v2363 = vpop.f32.mrf.mxu0
      %v2364 = vadd.f32 %v2331, %v2363
      %v2365 = vpop.f32.mrf.mxu0
      %v2366 = vadd.f32 %v2333, %v2365
      %2367 = vmatmul.bf16.gmra.mxu0 %v1210
      %v2368 = vpop.f32.mrf.mxu0
      %v2369 = vadd.f32 %v2336, %v2368
      %v2370 = vpop.f32.mrf.mxu0
      %v2371 = vadd.f32 %v2338, %v2370
      %2372 = vmatmul.bf16.gmra.mxu0 0
      %v2373 = vpop.f32.mrf.mxu0
      %v2374 = vadd.f32 %v2341, %v2373
      %v2375 = vpop.f32.mrf.mxu0
      %2376 = vdwg.mxu0
      %2377 = vmatpush.bf16.msra.mxu0 %v1932
      %2378 = vmatpush.bf16.msra.mxu0 %v1922
      %2379 = vmatpush.bf16.msra.mxu0 %v1912
      %2380 = vmatpush.bf16.msra.mxu0 %v1902
      %2381 = vmatpush.bf16.msra.mxu0 %v1892
      %2382 = vmatpush.bf16.msra.mxu0 %v1882
      %2383 = vmatpush.bf16.msra.mxu0 %v1872
      %2384 = vmatpush.bf16.msra.mxu0 %v1862
      %2385 = vmatmul.bf16.gmra.mxu0 %v1203
      %v2386 = vpop.f32.mrf.mxu0
      %v2387 = vadd.f32 0.0, %v2386
      %v2388 = vpop.f32.mrf.mxu0
      %v2389 = vadd.f32 0.0, %v2388
      %2390 = vmatmul.bf16.gmra.mxu0 %v1205
      %v2391 = vpop.f32.mrf.mxu0
      %v2392 = vadd.f32 0.0, %v2391
      %v2393 = vpop.f32.mrf.mxu0
      %v2394 = vadd.f32 0.0, %v2393
      %2395 = vmatmul.bf16.gmra.mxu0 %v1207
      %v2396 = vpop.f32.mrf.mxu0
      %v2397 = vadd.f32 0.0, %v2396
      %v2398 = vpop.f32.mrf.mxu0
      %v2399 = vadd.f32 0.0, %v2398
      %2400 = vmatmul.bf16.gmra.mxu0 %v1209
      %v2401 = vpop.f32.mrf.mxu0
      %v2402 = vadd.f32 0.0, %v2401
      %v2403 = vpop.f32.mrf.mxu0
      %v2404 = vadd.f32 0.0, %v2403
      %2405 = vmatmul.bf16.gmra.mxu0 0
      %v2406 = vpop.f32.mrf.mxu0
      %v2407 = vadd.f32 0.0, %v2406
      %v2408 = vpop.f32.mrf.mxu0
      %2409 = vdwg.mxu0
      %2410 = vmatpush.bf16.msra.mxu0 %v2012
      %2411 = vmatpush.bf16.msra.mxu0 %v2002
      %2412 = vmatpush.bf16.msra.mxu0 %v1992
      %2413 = vmatpush.bf16.msra.mxu0 %v1982
      %2414 = vmatpush.bf16.msra.mxu0 %v1972
      %2415 = vmatpush.bf16.msra.mxu0 %v1962
      %2416 = vmatpush.bf16.msra.mxu0 %v1952
      %2417 = vmatpush.bf16.msra.mxu0 %v1942
      %2418 = vmatmul.bf16.gmra.mxu0 %v1204
      %v2419 = vpop.f32.mrf.mxu0
      %v2420 = vadd.f32 %v2387, %v2419
      %v2421 = vpop.f32.mrf.mxu0
      %v2422 = vadd.f32 %v2389, %v2421
      %2423 = vmatmul.bf16.gmra.mxu0 %v1206
      %v2424 = vpop.f32.mrf.mxu0
      %v2425 = vadd.f32 %v2392, %v2424
      %v2426 = vpop.f32.mrf.mxu0
      %v2427 = vadd.f32 %v2394, %v2426
      %2428 = vmatmul.bf16.gmra.mxu0 %v1208
      %v2429 = vpop.f32.mrf.mxu0
      %v2430 = vadd.f32 %v2397, %v2429
      %v2431 = vpop.f32.mrf.mxu0
      %v2432 = vadd.f32 %v2399, %v2431
      %2433 = vmatmul.bf16.gmra.mxu0 %v1210
      %v2434 = vpop.f32.mrf.mxu0
      %v2435 = vadd.f32 %v2402, %v2434
      %v2436 = vpop.f32.mrf.mxu0
      %v2437 = vadd.f32 %v2404, %v2436
      %2438 = vmatmul.bf16.gmra.mxu0 0
      %v2439 = vpop.f32.mrf.mxu0
      %v2440 = vadd.f32 %v2407, %v2439
      %v2441 = vpop.f32.mrf.mxu0
      %2442 = vdwg.mxu0
      %2443 = vmatpush.bf16.msra.mxu0 %v1933
      %2444 = vmatpush.bf16.msra.mxu0 %v1923
      %2445 = vmatpush.bf16.msra.mxu0 %v1913
      %2446 = vmatpush.bf16.msra.mxu0 %v1903
      %2447 = vmatpush.bf16.msra.mxu0 %v1893
      %2448 = vmatpush.bf16.msra.mxu0 %v1883
      %2449 = vmatpush.bf16.msra.mxu0 %v1873
      %2450 = vmatpush.bf16.msra.mxu0 %v1863
      %2451 = vmatmul.bf16.gmra.mxu0 %v1203
      %v2452 = vpop.f32.mrf.mxu0
      %v2453 = vadd.f32 0.0, %v2452
      %v2454 = vpop.f32.mrf.mxu0
      %v2455 = vadd.f32 0.0, %v2454
      %2456 = vmatmul.bf16.gmra.mxu0 %v1205
      %v2457 = vpop.f32.mrf.mxu0
      %v2458 = vadd.f32 0.0, %v2457
      %v2459 = vpop.f32.mrf.mxu0
      %v2460 = vadd.f32 0.0, %v2459
      %2461 = vmatmul.bf16.gmra.mxu0 %v1207
      %v2462 = vpop.f32.mrf.mxu0
      %v2463 = vadd.f32 0.0, %v2462
      %v2464 = vpop.f32.mrf.mxu0
      %v2465 = vadd.f32 0.0, %v2464
      %2466 = vmatmul.bf16.gmra.mxu0 %v1209
      %v2467 = vpop.f32.mrf.mxu0
      %v2468 = vadd.f32 0.0, %v2467
      %v2469 = vpop.f32.mrf.mxu0
      %v2470 = vadd.f32 0.0, %v2469
      %2471 = vmatmul.bf16.gmra.mxu0 0
      %v2472 = vpop.f32.mrf.mxu0
      %v2473 = vadd.f32 0.0, %v2472
      %v2474 = vpop.f32.mrf.mxu0
      %2475 = vdwg.mxu0
      %2476 = vmatpush.bf16.msra.mxu0 %v2013
      %2477 = vmatpush.bf16.msra.mxu0 %v2003
      %2478 = vmatpush.bf16.msra.mxu0 %v1993
      %2479 = vmatpush.bf16.msra.mxu0 %v1983
      %2480 = vmatpush.bf16.msra.mxu0 %v1973
      %2481 = vmatpush.bf16.msra.mxu0 %v1963
      %2482 = vmatpush.bf16.msra.mxu0 %v1953
      %2483 = vmatpush.bf16.msra.mxu0 %v1943
      %2484 = vmatmul.bf16.gmra.mxu0 %v1204
      %v2485 = vpop.f32.mrf.mxu0
      %v2486 = vadd.f32 %v2453, %v2485
      %v2487 = vpop.f32.mrf.mxu0
      %v2488 = vadd.f32 %v2455, %v2487
      %2489 = vmatmul.bf16.gmra.mxu0 %v1206
      %v2490 = vpop.f32.mrf.mxu0
      %v2491 = vadd.f32 %v2458, %v2490
      %v2492 = vpop.f32.mrf.mxu0
      %v2493 = vadd.f32 %v2460, %v2492
      %2494 = vmatmul.bf16.gmra.mxu0 %v1208
      %v2495 = vpop.f32.mrf.mxu0
      %v2496 = vadd.f32 %v2463, %v2495
      %v2497 = vpop.f32.mrf.mxu0
      %v2498 = vadd.f32 %v2465, %v2497
      %2499 = vmatmul.bf16.gmra.mxu0 %v1210
      %v2500 = vpop.f32.mrf.mxu0
      %v2501 = vadd.f32 %v2468, %v2500
      %v2502 = vpop.f32.mrf.mxu0
      %v2503 = vadd.f32 %v2470, %v2502
      %2504 = vmatmul.bf16.gmra.mxu0 0
      %v2505 = vpop.f32.mrf.mxu0
      %v2506 = vadd.f32 %v2473, %v2505
      %v2507 = vpop.f32.mrf.mxu0
      %2508 = vdwg.mxu0
      %2509 = vmatpush.bf16.msra.mxu0 %v1934
      %2510 = vmatpush.bf16.msra.mxu0 %v1924
      %2511 = vmatpush.bf16.msra.mxu0 %v1914
      %2512 = vmatpush.bf16.msra.mxu0 %v1904
      %2513 = vmatpush.bf16.msra.mxu0 %v1894
      %2514 = vmatpush.bf16.msra.mxu0 %v1884
      %2515 = vmatpush.bf16.msra.mxu0 %v1874
      %2516 = vmatpush.bf16.msra.mxu0 %v1864
      %2517 = vmatmul.bf16.gmra.mxu0 %v1203
      %v2518 = vpop.f32.mrf.mxu0
      %v2519 = vadd.f32 0.0, %v2518
      %v2520 = vpop.f32.mrf.mxu0
      %v2521 = vadd.f32 0.0, %v2520
      %2522 = vmatmul.bf16.gmra.mxu0 %v1205
      %v2523 = vpop.f32.mrf.mxu0
      %v2524 = vadd.f32 0.0, %v2523
      %v2525 = vpop.f32.mrf.mxu0
      %v2526 = vadd.f32 0.0, %v2525
      %2527 = vmatmul.bf16.gmra.mxu0 %v1207
      %v2528 = vpop.f32.mrf.mxu0
      %v2529 = vadd.f32 0.0, %v2528
      %v2530 = vpop.f32.mrf.mxu0
      %v2531 = vadd.f32 0.0, %v2530
      %2532 = vmatmul.bf16.gmra.mxu0 %v1209
      %v2533 = vpop.f32.mrf.mxu0
      %v2534 = vadd.f32 0.0, %v2533
      %v2535 = vpop.f32.mrf.mxu0
      %v2536 = vadd.f32 0.0, %v2535
      %2537 = vmatmul.bf16.gmra.mxu0 0
      %v2538 = vpop.f32.mrf.mxu0
      %v2539 = vadd.f32 0.0, %v2538
      %v2540 = vpop.f32.mrf.mxu0
      %2541 = vdwg.mxu0
      %2542 = vmatpush.bf16.msra.mxu0 %v2014
      %2543 = vmatpush.bf16.msra.mxu0 %v2004
      %2544 = vmatpush.bf16.msra.mxu0 %v1994
      %2545 = vmatpush.bf16.msra.mxu0 %v1984
      %2546 = vmatpush.bf16.msra.mxu0 %v1974
      %2547 = vmatpush.bf16.msra.mxu0 %v1964
      %2548 = vmatpush.bf16.msra.mxu0 %v1954
      %2549 = vmatpush.bf16.msra.mxu0 %v1944
      %2550 = vmatmul.bf16.gmra.mxu0 %v1204
      %v2551 = vpop.f32.mrf.mxu0
      %v2552 = vadd.f32 %v2519, %v2551
      %v2553 = vpop.f32.mrf.mxu0
      %v2554 = vadd.f32 %v2521, %v2553
      %2555 = vmatmul.bf16.gmra.mxu0 %v1206
      %v2556 = vpop.f32.mrf.mxu0
      %v2557 = vadd.f32 %v2524, %v2556
      %v2558 = vpop.f32.mrf.mxu0
      %v2559 = vadd.f32 %v2526, %v2558
      %2560 = vmatmul.bf16.gmra.mxu0 %v1208
      %v2561 = vpop.f32.mrf.mxu0
      %v2562 = vadd.f32 %v2529, %v2561
      %v2563 = vpop.f32.mrf.mxu0
      %v2564 = vadd.f32 %v2531, %v2563
      %2565 = vmatmul.bf16.gmra.mxu0 %v1210
      %v2566 = vpop.f32.mrf.mxu0
      %v2567 = vadd.f32 %v2534, %v2566
      %v2568 = vpop.f32.mrf.mxu0
      %v2569 = vadd.f32 %v2536, %v2568
      %2570 = vmatmul.bf16.gmra.mxu0 0
      %v2571 = vpop.f32.mrf.mxu0
      %v2572 = vadd.f32 %v2539, %v2571
      %v2573 = vpop.f32.mrf.mxu0
      %2574 = vdwg.mxu0
      %2575 = vmatpush.bf16.msra.mxu0 %v1935
      %2576 = vmatpush.bf16.msra.mxu0 %v1925
      %2577 = vmatpush.bf16.msra.mxu0 %v1915
      %2578 = vmatpush.bf16.msra.mxu0 %v1905
      %2579 = vmatpush.bf16.msra.mxu0 %v1895
      %2580 = vmatpush.bf16.msra.mxu0 %v1885
      %2581 = vmatpush.bf16.msra.mxu0 %v1875
      %2582 = vmatpush.bf16.msra.mxu0 %v1865
      %2583 = vmatmul.bf16.gmra.mxu0 %v1203
      %v2584 = vpop.f32.mrf.mxu0
      %v2585 = vadd.f32 0.0, %v2584
      %v2586 = vpop.f32.mrf.mxu0
      %v2587 = vadd.f32 0.0, %v2586
      %2588 = vmatmul.bf16.gmra.mxu0 %v1205
      %v2589 = vpop.f32.mrf.mxu0
      %v2590 = vadd.f32 0.0, %v2589
      %v2591 = vpop.f32.mrf.mxu0
      %v2592 = vadd.f32 0.0, %v2591
      %2593 = vmatmul.bf16.gmra.mxu0 %v1207
      %v2594 = vpop.f32.mrf.mxu0
      %v2595 = vadd.f32 0.0, %v2594
      %v2596 = vpop.f32.mrf.mxu0
      %v2597 = vadd.f32 0.0, %v2596
      %2598 = vmatmul.bf16.gmra.mxu0 %v1209
      %v2599 = vpop.f32.mrf.mxu0
      %v2600 = vadd.f32 0.0, %v2599
      %v2601 = vpop.f32.mrf.mxu0
      %v2602 = vadd.f32 0.0, %v2601
      %2603 = vmatmul.bf16.gmra.mxu0 0
      %v2604 = vpop.f32.mrf.mxu0
      %v2605 = vadd.f32 0.0, %v2604
      %v2606 = vpop.f32.mrf.mxu0
      %2607 = vdwg.mxu0
      %2608 = vmatpush.bf16.msra.mxu0 %v2015
      %2609 = vmatpush.bf16.msra.mxu0 %v2005
      %2610 = vmatpush.bf16.msra.mxu0 %v1995
      %2611 = vmatpush.bf16.msra.mxu0 %v1985
      %2612 = vmatpush.bf16.msra.mxu0 %v1975
      %2613 = vmatpush.bf16.msra.mxu0 %v1965
      %2614 = vmatpush.bf16.msra.mxu0 %v1955
      %2615 = vmatpush.bf16.msra.mxu0 %v1945
      %2616 = vmatmul.bf16.gmra.mxu0 %v1204
      %v2617 = vpop.f32.mrf.mxu0
      %v2618 = vadd.f32 %v2585, %v2617
      %v2619 = vpop.f32.mrf.mxu0
      %v2620 = vadd.f32 %v2587, %v2619
      %2621 = vmatmul.bf16.gmra.mxu0 %v1206
      %v2622 = vpop.f32.mrf.mxu0
      %v2623 = vadd.f32 %v2590, %v2622
      %v2624 = vpop.f32.mrf.mxu0
      %v2625 = vadd.f32 %v2592, %v2624
      %2626 = vmatmul.bf16.gmra.mxu0 %v1208
      %v2627 = vpop.f32.mrf.mxu0
      %v2628 = vadd.f32 %v2595, %v2627
      %v2629 = vpop.f32.mrf.mxu0
      %v2630 = vadd.f32 %v2597, %v2629
      %2631 = vmatmul.bf16.gmra.mxu0 %v1210
      %v2632 = vpop.f32.mrf.mxu0
      %v2633 = vadd.f32 %v2600, %v2632
      %v2634 = vpop.f32.mrf.mxu0
      %v2635 = vadd.f32 %v2602, %v2634
      %2636 = vmatmul.bf16.gmra.mxu0 0
      %v2637 = vpop.f32.mrf.mxu0
      %v2638 = vadd.f32 %v2605, %v2637
      %v2639 = vpop.f32.mrf.mxu0
      %2640 = vdwg.mxu0
      %2641 = vmatpush.bf16.msra.mxu0 %v1936
      %2642 = vmatpush.bf16.msra.mxu0 %v1926
      %2643 = vmatpush.bf16.msra.mxu0 %v1916
      %2644 = vmatpush.bf16.msra.mxu0 %v1906
      %2645 = vmatpush.bf16.msra.mxu0 %v1896
      %2646 = vmatpush.bf16.msra.mxu0 %v1886
      %2647 = vmatpush.bf16.msra.mxu0 %v1876
      %2648 = vmatpush.bf16.msra.mxu0 %v1866
      %2649 = vmatmul.bf16.gmra.mxu0 %v1203
      %v2650 = vpop.f32.mrf.mxu0
      %v2651 = vadd.f32 0.0, %v2650
      %v2652 = vpop.f32.mrf.mxu0
      %v2653 = vadd.f32 0.0, %v2652
      %2654 = vmatmul.bf16.gmra.mxu0 %v1205
      %v2655 = vpop.f32.mrf.mxu0
      %v2656 = vadd.f32 0.0, %v2655
      %v2657 = vpop.f32.mrf.mxu0
      %v2658 = vadd.f32 0.0, %v2657
      %2659 = vmatmul.bf16.gmra.mxu0 %v1207
      %v2660 = vpop.f32.mrf.mxu0
      %v2661 = vadd.f32 0.0, %v2660
      %v2662 = vpop.f32.mrf.mxu0
      %v2663 = vadd.f32 0.0, %v2662
      %2664 = vmatmul.bf16.gmra.mxu0 %v1209
      %v2665 = vpop.f32.mrf.mxu0
      %v2666 = vadd.f32 0.0, %v2665
      %v2667 = vpop.f32.mrf.mxu0
      %v2668 = vadd.f32 0.0, %v2667
      %2669 = vmatmul.bf16.gmra.mxu0 0
      %v2670 = vpop.f32.mrf.mxu0
      %v2671 = vadd.f32 0.0, %v2670
      %v2672 = vpop.f32.mrf.mxu0
      %2673 = vdwg.mxu0
      %2674 = vmatpush.bf16.msra.mxu0 %v2016
      %2675 = vmatpush.bf16.msra.mxu0 %v2006
      %2676 = vmatpush.bf16.msra.mxu0 %v1996
      %2677 = vmatpush.bf16.msra.mxu0 %v1986
      %2678 = vmatpush.bf16.msra.mxu0 %v1976
      %2679 = vmatpush.bf16.msra.mxu0 %v1966
      %2680 = vmatpush.bf16.msra.mxu0 %v1956
      %2681 = vmatpush.bf16.msra.mxu0 %v1946
      %2682 = vmatmul.bf16.gmra.mxu0 %v1204
      %v2683 = vpop.f32.mrf.mxu0
      %v2684 = vadd.f32 %v2651, %v2683
      %v2685 = vpop.f32.mrf.mxu0
      %v2686 = vadd.f32 %v2653, %v2685
      %2687 = vmatmul.bf16.gmra.mxu0 %v1206
      %v2688 = vpop.f32.mrf.mxu0
      %v2689 = vadd.f32 %v2656, %v2688
      %v2690 = vpop.f32.mrf.mxu0
      %v2691 = vadd.f32 %v2658, %v2690
      %2692 = vmatmul.bf16.gmra.mxu0 %v1208
      %v2693 = vpop.f32.mrf.mxu0
      %v2694 = vadd.f32 %v2661, %v2693
      %v2695 = vpop.f32.mrf.mxu0
      %v2696 = vadd.f32 %v2663, %v2695
      %2697 = vmatmul.bf16.gmra.mxu0 %v1210
      %v2698 = vpop.f32.mrf.mxu0
      %v2699 = vadd.f32 %v2666, %v2698
      %v2700 = vpop.f32.mrf.mxu0
      %v2701 = vadd.f32 %v2668, %v2700
      %2702 = vmatmul.bf16.gmra.mxu0 0
      %v2703 = vpop.f32.mrf.mxu0
      %v2704 = vadd.f32 %v2671, %v2703
      %v2705 = vpop.f32.mrf.mxu0
      %2706 = vdwg.mxu0
      %2707 = vmatpush.bf16.msra.mxu0 %v1937
      %2708 = vmatpush.bf16.msra.mxu0 %v1927
      %2709 = vmatpush.bf16.msra.mxu0 %v1917
      %2710 = vmatpush.bf16.msra.mxu0 %v1907
      %2711 = vmatpush.bf16.msra.mxu0 %v1897
      %2712 = vmatpush.bf16.msra.mxu0 %v1887
      %2713 = vmatpush.bf16.msra.mxu0 %v1877
      %2714 = vmatpush.bf16.msra.mxu0 %v1867
      %2715 = vmatmul.bf16.gmra.mxu0 %v1203
      %v2716 = vpop.f32.mrf.mxu0
      %v2717 = vadd.f32 0.0, %v2716
      %v2718 = vpop.f32.mrf.mxu0
      %v2719 = vadd.f32 0.0, %v2718
      %2720 = vmatmul.bf16.gmra.mxu0 %v1205
      %v2721 = vpop.f32.mrf.mxu0
      %v2722 = vadd.f32 0.0, %v2721
      %v2723 = vpop.f32.mrf.mxu0
      %v2724 = vadd.f32 0.0, %v2723
      %2725 = vmatmul.bf16.gmra.mxu0 %v1207
      %v2726 = vpop.f32.mrf.mxu0
      %v2727 = vadd.f32 0.0, %v2726
      %v2728 = vpop.f32.mrf.mxu0
      %v2729 = vadd.f32 0.0, %v2728
      %2730 = vmatmul.bf16.gmra.mxu0 %v1209
      %v2731 = vpop.f32.mrf.mxu0
      %v2732 = vadd.f32 0.0, %v2731
      %v2733 = vpop.f32.mrf.mxu0
      %v2734 = vadd.f32 0.0, %v2733
      %2735 = vmatmul.bf16.gmra.mxu0 0
      %v2736 = vpop.f32.mrf.mxu0
      %v2737 = vadd.f32 0.0, %v2736
      %v2738 = vpop.f32.mrf.mxu0
      %2739 = vdwg.mxu0
      %2740 = vmatpush.bf16.msra.mxu0 %v2017
      %2741 = vmatpush.bf16.msra.mxu0 %v2007
      %2742 = vmatpush.bf16.msra.mxu0 %v1997
      %2743 = vmatpush.bf16.msra.mxu0 %v1987
      %2744 = vmatpush.bf16.msra.mxu0 %v1977
      %2745 = vmatpush.bf16.msra.mxu0 %v1967
      %2746 = vmatpush.bf16.msra.mxu0 %v1957
      %2747 = vmatpush.bf16.msra.mxu0 %v1947
      %2748 = vmatmul.bf16.gmra.mxu0 %v1204
      %v2749 = vpop.f32.mrf.mxu0
      %v2750 = vadd.f32 %v2717, %v2749
      %v2751 = vpop.f32.mrf.mxu0
      %v2752 = vadd.f32 %v2719, %v2751
      %2753 = vmatmul.bf16.gmra.mxu0 %v1206
      %v2754 = vpop.f32.mrf.mxu0
      %v2755 = vadd.f32 %v2722, %v2754
      %v2756 = vpop.f32.mrf.mxu0
      %v2757 = vadd.f32 %v2724, %v2756
      %2758 = vmatmul.bf16.gmra.mxu0 %v1208
      %v2759 = vpop.f32.mrf.mxu0
      %v2760 = vadd.f32 %v2727, %v2759
      %v2761 = vpop.f32.mrf.mxu0
      %v2762 = vadd.f32 %v2729, %v2761
      %2763 = vmatmul.bf16.gmra.mxu0 %v1210
      %v2764 = vpop.f32.mrf.mxu0
      %v2765 = vadd.f32 %v2732, %v2764
      %v2766 = vpop.f32.mrf.mxu0
      %v2767 = vadd.f32 %v2734, %v2766
      %2768 = vmatmul.bf16.gmra.mxu0 0
      %v2769 = vpop.f32.mrf.mxu0
      %v2770 = vadd.f32 %v2737, %v2769
      %v2771 = vpop.f32.mrf.mxu0
      %2772 = vdwg.mxu0
      %2773 = vmatpush.bf16.msra.mxu0 %v1938
      %2774 = vmatpush.bf16.msra.mxu0 %v1928
      %2775 = vmatpush.bf16.msra.mxu0 %v1918
      %2776 = vmatpush.bf16.msra.mxu0 %v1908
      %2777 = vmatpush.bf16.msra.mxu0 %v1898
      %2778 = vmatpush.bf16.msra.mxu0 %v1888
      %2779 = vmatpush.bf16.msra.mxu0 %v1878
      %2780 = vmatpush.bf16.msra.mxu0 %v1868
      %2781 = vmatmul.bf16.gmra.mxu0 %v1203
      %v2782 = vpop.f32.mrf.mxu0
      %v2783 = vadd.f32 0.0, %v2782
      %v2784 = vpop.f32.mrf.mxu0
      %v2785 = vadd.f32 0.0, %v2784
      %2786 = vmatmul.bf16.gmra.mxu0 %v1205
      %v2787 = vpop.f32.mrf.mxu0
      %v2788 = vadd.f32 0.0, %v2787
      %v2789 = vpop.f32.mrf.mxu0
      %v2790 = vadd.f32 0.0, %v2789
      %2791 = vmatmul.bf16.gmra.mxu0 %v1207
      %v2792 = vpop.f32.mrf.mxu0
      %v2793 = vadd.f32 0.0, %v2792
      %v2794 = vpop.f32.mrf.mxu0
      %v2795 = vadd.f32 0.0, %v2794
      %2796 = vmatmul.bf16.gmra.mxu0 %v1209
      %v2797 = vpop.f32.mrf.mxu0
      %v2798 = vadd.f32 0.0, %v2797
      %v2799 = vpop.f32.mrf.mxu0
      %v2800 = vadd.f32 0.0, %v2799
      %2801 = vmatmul.bf16.gmra.mxu0 0
      %v2802 = vpop.f32.mrf.mxu0
      %v2803 = vadd.f32 0.0, %v2802
      %v2804 = vpop.f32.mrf.mxu0
      %2805 = vdwg.mxu0
      %2806 = vmatpush.bf16.msra.mxu0 %v2018
      %2807 = vmatpush.bf16.msra.mxu0 %v2008
      %2808 = vmatpush.bf16.msra.mxu0 %v1998
      %2809 = vmatpush.bf16.msra.mxu0 %v1988
      %2810 = vmatpush.bf16.msra.mxu0 %v1978
      %2811 = vmatpush.bf16.msra.mxu0 %v1968
      %2812 = vmatpush.bf16.msra.mxu0 %v1958
      %2813 = vmatpush.bf16.msra.mxu0 %v1948
      %2814 = vmatmul.bf16.gmra.mxu0 %v1204
      %v2815 = vpop.f32.mrf.mxu0
      %v2816 = vadd.f32 %v2783, %v2815
      %v2817 = vpop.f32.mrf.mxu0
      %v2818 = vadd.f32 %v2785, %v2817
      %2819 = vmatmul.bf16.gmra.mxu0 %v1206
      %v2820 = vpop.f32.mrf.mxu0
      %v2821 = vadd.f32 %v2788, %v2820
      %v2822 = vpop.f32.mrf.mxu0
      %v2823 = vadd.f32 %v2790, %v2822
      %2824 = vmatmul.bf16.gmra.mxu0 %v1208
      %v2825 = vpop.f32.mrf.mxu0
      %v2826 = vadd.f32 %v2793, %v2825
      %v2827 = vpop.f32.mrf.mxu0
      %v2828 = vadd.f32 %v2795, %v2827
      %2829 = vmatmul.bf16.gmra.mxu0 %v1210
      %v2830 = vpop.f32.mrf.mxu0
      %v2831 = vadd.f32 %v2798, %v2830
      %v2832 = vpop.f32.mrf.mxu0
      %v2833 = vadd.f32 %v2800, %v2832
      %2834 = vmatmul.bf16.gmra.mxu0 0
      %v2835 = vpop.f32.mrf.mxu0
      %v2836 = vadd.f32 %v2803, %v2835
      %v2837 = vpop.f32.mrf.mxu0
      %2838 = vdwg.mxu0
      %vm2857 = vcmask 1046528
      %v2858 = vrot.slane %v2354, 1
      %v2859 = vrot.slane %v2356, 1
      %v2860 = vsel %vm2857, %v2858, %v2859
      %v2861 = vrot.slane %v2420, 1
      %v2862 = vrot.slane %v2422, 1
      %v2863 = vsel %vm2857, %v2861, %v2862
      %v2864 = vrot.slane %v2359, 1
      %v2865 = vsel %vm2857, %v2859, %v2864
      %v2866 = vrot.slane %v2425, 1
      %v2867 = vsel %vm2857, %v2862, %v2866
      %v2868 = vrot.slane %v2361, 1
      %v2869 = vsel %vm2857, %v2864, %v2868
      %v2870 = vrot.slane %v2427, 1
      %v2871 = vsel %vm2857, %v2866, %v2870
      %v2872 = vrot.slane %v2364, 1
      %v2873 = vsel %vm2857, %v2868, %v2872
      %v2874 = vrot.slane %v2430, 1
      %v2875 = vsel %vm2857, %v2870, %v2874
      %v2876 = vrot.slane %v2366, 1
      %v2877 = vsel %vm2857, %v2872, %v2876
      %v2878 = vrot.slane %v2432, 1
      %v2879 = vsel %vm2857, %v2874, %v2878
      %v2880 = vrot.slane %v2369, 1
      %v2881 = vsel %vm2857, %v2876, %v2880
      %v2882 = vrot.slane %v2435, 1
      %v2883 = vsel %vm2857, %v2878, %v2882
      %v2884 = vrot.slane %v2371, 1
      %v2885 = vsel %vm2857, %v2880, %v2884
      %v2886 = vrot.slane %v2437, 1
      %v2887 = vsel %vm2857, %v2882, %v2886
      %v2888 = vrot.slane %v2374, 1
      %v2889 = vsel %vm2857, %v2884, %v2888
      %v2890 = vrot.slane %v2440, 1
      %v2891 = vsel %vm2857, %v2886, %v2890
      %v2910 = vadd.f32 %v2222, %v2860
      %v2911 = vadd.f32 %v2288, %v2863
      %v2912 = vadd.f32 %v2224, %v2865
      %v2913 = vadd.f32 %v2290, %v2867
      %v2914 = vadd.f32 %v2227, %v2869
      %v2915 = vadd.f32 %v2293, %v2871
      %v2916 = vadd.f32 %v2229, %v2873
      %v2917 = vadd.f32 %v2295, %v2875
      %v2918 = vadd.f32 %v2232, %v2877
      %v2919 = vadd.f32 %v2298, %v2879
      %v2920 = vadd.f32 %v2234, %v2881
      %v2921 = vadd.f32 %v2300, %v2883
      %v2922 = vadd.f32 %v2237, %v2885
      %v2923 = vadd.f32 %v2303, %v2887
      %v2924 = vadd.f32 %v2239, %v2889
      %v2925 = vadd.f32 %v2305, %v2891
      %v2926 = vadd.f32 %v2242, %v2888
      %v2927 = vadd.f32 %v2308, %v2890
      %vm2946 = vcmask 1045504
      %v2947 = vrot.slane %v2486, 2
      %v2948 = vrot.slane %v2488, 2
      %v2949 = vsel %vm2946, %v2947, %v2948
      %v2950 = vrot.slane %v2552, 2
      %v2951 = vrot.slane %v2554, 2
      %v2952 = vsel %vm2946, %v2950, %v2951
      %v2953 = vrot.slane %v2491, 2
      %v2954 = vsel %vm2946, %v2948, %v2953
      %v2955 = vrot.slane %v2557, 2
      %v2956 = vsel %vm2946, %v2951, %v2955
      %v2957 = vrot.slane %v2493, 2
      %v2958 = vsel %vm2946, %v2953, %v2957
      %v2959 = vrot.slane %v2559, 2
      %v2960 = vsel %vm2946, %v2955, %v2959
      %v2961 = vrot.slane %v2496, 2
      %v2962 = vsel %vm2946, %v2957, %v2961
      %v2963 = vrot.slane %v2562, 2
      %v2964 = vsel %vm2946, %v2959, %v2963
      %v2965 = vrot.slane %v2498, 2
      %v2966 = vsel %vm2946, %v2961, %v2965
      %v2967 = vrot.slane %v2564, 2
      %v2968 = vsel %vm2946, %v2963, %v2967
      %v2969 = vrot.slane %v2501, 2
      %v2970 = vsel %vm2946, %v2965, %v2969
      %v2971 = vrot.slane %v2567, 2
      %v2972 = vsel %vm2946, %v2967, %v2971
      %v2973 = vrot.slane %v2503, 2
      %v2974 = vsel %vm2946, %v2969, %v2973
      %v2975 = vrot.slane %v2569, 2
      %v2976 = vsel %vm2946, %v2971, %v2975
      %v2977 = vrot.slane %v2506, 2
      %v2978 = vsel %vm2946, %v2973, %v2977
      %v2979 = vrot.slane %v2572, 2
      %v2980 = vsel %vm2946, %v2975, %v2979
      %v2999 = vadd.f32 %v2910, %v2949
      %v3000 = vadd.f32 %v2911, %v2952
      %v3001 = vadd.f32 %v2912, %v2954
      %v3002 = vadd.f32 %v2913, %v2956
      %v3003 = vadd.f32 %v2914, %v2958
      %v3004 = vadd.f32 %v2915, %v2960
      %v3005 = vadd.f32 %v2916, %v2962
      %v3006 = vadd.f32 %v2917, %v2964
      %v3007 = vadd.f32 %v2918, %v2966
      %v3008 = vadd.f32 %v2919, %v2968
      %v3009 = vadd.f32 %v2920, %v2970
      %v3010 = vadd.f32 %v2921, %v2972
      %v3011 = vadd.f32 %v2922, %v2974
      %v3012 = vadd.f32 %v2923, %v2976
      %v3013 = vadd.f32 %v2924, %v2978
      %v3014 = vadd.f32 %v2925, %v2980
      %v3015 = vadd.f32 %v2926, %v2977
      %v3016 = vadd.f32 %v2927, %v2979
      %vm3035 = vcmask 1044480
      %v3036 = vrot.slane %v2618, 3
      %v3037 = vrot.slane %v2620, 3
      %v3038 = vsel %vm3035, %v3036, %v3037
      %v3039 = vrot.slane %v2684, 3
      %v3040 = vrot.slane %v2686, 3
      %v3041 = vsel %vm3035, %v3039, %v3040
      %v3042 = vrot.slane %v2623, 3
      %v3043 = vsel %vm3035, %v3037, %v3042
      %v3044 = vrot.slane %v2689, 3
      %v3045 = vsel %vm3035, %v3040, %v3044
      %v3046 = vrot.slane %v2625, 3
      %v3047 = vsel %vm3035, %v3042, %v3046
      %v3048 = vrot.slane %v2691, 3
      %v3049 = vsel %vm3035, %v3044, %v3048
      %v3050 = vrot.slane %v2628, 3
      %v3051 = vsel %vm3035, %v3046, %v3050
      %v3052 = vrot.slane %v2694, 3
      %v3053 = vsel %vm3035, %v3048, %v3052
      %v3054 = vrot.slane %v2630, 3
      %v3055 = vsel %vm3035, %v3050, %v3054
      %v3056 = vrot.slane %v2696, 3
      %v3057 = vsel %vm3035, %v3052, %v3056
      %v3058 = vrot.slane %v2633, 3
      %v3059 = vsel %vm3035, %v3054, %v3058
      %v3060 = vrot.slane %v2699, 3
      %v3061 = vsel %vm3035, %v3056, %v3060
      %v3062 = vrot.slane %v2635, 3
      %v3063 = vsel %vm3035, %v3058, %v3062
      %v3064 = vrot.slane %v2701, 3
      %v3065 = vsel %vm3035, %v3060, %v3064
      %v3066 = vrot.slane %v2638, 3
      %v3067 = vsel %vm3035, %v3062, %v3066
      %v3068 = vrot.slane %v2704, 3
      %v3069 = vsel %vm3035, %v3064, %v3068
      %v3088 = vadd.f32 %v2999, %v3038
      %v3089 = vadd.f32 %v3000, %v3041
      %v3090 = vadd.f32 %v3001, %v3043
      %v3091 = vadd.f32 %v3002, %v3045
      %v3092 = vadd.f32 %v3003, %v3047
      %v3093 = vadd.f32 %v3004, %v3049
      %v3094 = vadd.f32 %v3005, %v3051
      %v3095 = vadd.f32 %v3006, %v3053
      %v3096 = vadd.f32 %v3007, %v3055
      %v3097 = vadd.f32 %v3008, %v3057
      %v3098 = vadd.f32 %v3009, %v3059
      %v3099 = vadd.f32 %v3010, %v3061
      %v3100 = vadd.f32 %v3011, %v3063
      %v3101 = vadd.f32 %v3012, %v3065
      %v3102 = vadd.f32 %v3013, %v3067
      %v3103 = vadd.f32 %v3014, %v3069
      %v3104 = vadd.f32 %v3015, %v3066
      %v3105 = vadd.f32 %v3016, %v3068
      %vm3124 = vcmask 1043456
      %v3125 = vrot.slane %v2750, 4
      %v3126 = vrot.slane %v2752, 4
      %v3127 = vsel %vm3124, %v3125, %v3126
      %v3128 = vrot.slane %v2816, 4
      %v3129 = vrot.slane %v2818, 4
      %v3130 = vsel %vm3124, %v3128, %v3129
      %v3131 = vrot.slane %v2755, 4
      %v3132 = vsel %vm3124, %v3126, %v3131
      %v3133 = vrot.slane %v2821, 4
      %v3134 = vsel %vm3124, %v3129, %v3133
      %v3135 = vrot.slane %v2757, 4
      %v3136 = vsel %vm3124, %v3131, %v3135
      %v3137 = vrot.slane %v2823, 4
      %v3138 = vsel %vm3124, %v3133, %v3137
      %v3139 = vrot.slane %v2760, 4
      %v3140 = vsel %vm3124, %v3135, %v3139
      %v3141 = vrot.slane %v2826, 4
      %v3142 = vsel %vm3124, %v3137, %v3141
      %v3143 = vrot.slane %v2762, 4
      %v3144 = vsel %vm3124, %v3139, %v3143
      %v3145 = vrot.slane %v2828, 4
      %v3146 = vsel %vm3124, %v3141, %v3145
      %v3147 = vrot.slane %v2765, 4
      %v3148 = vsel %vm3124, %v3143, %v3147
      %v3149 = vrot.slane %v2831, 4
      %v3150 = vsel %vm3124, %v3145, %v3149
      %v3151 = vrot.slane %v2767, 4
      %v3152 = vsel %vm3124, %v3147, %v3151
      %v3153 = vrot.slane %v2833, 4
      %v3154 = vsel %vm3124, %v3149, %v3153
      %v3155 = vrot.slane %v2770, 4
      %v3156 = vsel %vm3124, %v3151, %v3155
      %v3157 = vrot.slane %v2836, 4
      %v3158 = vsel %vm3124, %v3153, %v3157
      %v3177 = vadd.f32 %v3088, %v3127
      %v3178 = vadd.f32 %v3089, %v3130
      %v3179 = vadd.f32 %v3090, %v3132
      %v3180 = vadd.f32 %v3091, %v3134
      %v3181 = vadd.f32 %v3092, %v3136
      %v3182 = vadd.f32 %v3093, %v3138
      %v3183 = vadd.f32 %v3094, %v3140
      %v3184 = vadd.f32 %v3095, %v3142
      %v3185 = vadd.f32 %v3096, %v3144
      %v3186 = vadd.f32 %v3097, %v3146
      %v3187 = vadd.f32 %v3098, %v3148
      %v3188 = vadd.f32 %v3099, %v3150
      %v3189 = vadd.f32 %v3100, %v3152
      %v3190 = vadd.f32 %v3101, %v3154
      %v3191 = vadd.f32 %v3102, %v3156
      %v3192 = vadd.f32 %v3103, %v3158
      %v3193 = vadd.f32 %v3104, %v3155
      %v3194 = vadd.f32 %v3105, %v3157
      %v3195 = vmax.f32 %v3177, %v3178
      %v3196 = vmax.f32 %v3179, %v3180
      %v3197 = vmax.f32 %v3181, %v3182
      %v3198 = vmax.f32 %v3183, %v3184
      %v3199 = vmax.f32 %v3185, %v3186
      %v3200 = vmax.f32 %v3187, %v3188
      %v3201 = vmax.f32 %v3189, %v3190
      %v3202 = vmax.f32 %v3191, %v3192
      %v3203 = vmax.f32 %v3193, %v3194
      %v3213 = vrot.slane %v3195, 1
      %v3214 = vrot.slane %v3196, 1
      %v3215 = vsel %vm2857, %v3213, %v3214
      %v3216 = vrot.slane %v3197, 1
      %v3217 = vsel %vm2857, %v3214, %v3216
      %v3218 = vrot.slane %v3198, 1
      %v3219 = vsel %vm2857, %v3216, %v3218
      %v3220 = vrot.slane %v3199, 1
      %v3221 = vsel %vm2857, %v3218, %v3220
      %v3222 = vrot.slane %v3200, 1
      %v3223 = vsel %vm2857, %v3220, %v3222
      %v3224 = vrot.slane %v3201, 1
      %v3225 = vsel %vm2857, %v3222, %v3224
      %v3226 = vrot.slane %v3202, 1
      %v3227 = vsel %vm2857, %v3224, %v3226
      %v3228 = vrot.slane %v3203, 1
      %v3229 = vsel %vm2857, %v3226, %v3228
      %v3239 = vmax.f32 %v3195, %v3215
      %v3240 = vmax.f32 %v3196, %v3217
      %v3241 = vmax.f32 %v3197, %v3219
      %v3242 = vmax.f32 %v3198, %v3221
      %v3243 = vmax.f32 %v3199, %v3223
      %v3244 = vmax.f32 %v3200, %v3225
      %v3245 = vmax.f32 %v3201, %v3227
      %v3246 = vmax.f32 %v3202, %v3229
      %v3247 = vmax.f32 %v3203, %v3228
      %v3248 = vld [vmem:[%s4] sm:$0x1]
      %v3250 = vperm.slane %v3248, 0
      %v3252 = vadd.f32 %v3239, %v3250
      %v3253 = vadd.f32 %v3240, %v3250
      %v3254 = vadd.f32 %v3241, %v3250
      %v3255 = vadd.f32 %v3242, %v3250
      %v3256 = vadd.f32 %v3243, %v3250
      %v3257 = vadd.f32 %v3244, %v3250
      %v3258 = vadd.f32 %v3245, %v3250
      %v3259 = vadd.f32 %v3246, %v3250
      %v3260 = vadd.f32 %v3247, %v3250
      %v3261 = vmax.f32 %v3252, 0.0
      %v3262 = vmax.f32 %v3253, 0.0
      %v3263 = vmax.f32 %v3254, 0.0
      %v3264 = vmax.f32 %v3255, 0.0
      %v3265 = vmax.f32 %v3256, 0.0
      %v3266 = vmax.f32 %v3257, 0.0
      %v3267 = vmax.f32 %v3258, 0.0
      %v3268 = vmax.f32 %v3259, 0.0
      %v3269 = vmax.f32 %v3260, 0.0
      %v3279 = vrot.slane %v3261, 2
      %v3280 = vrot.slane %v3262, 2
      %v3281 = vsel %vm2946, %v3279, %v3280
      %v3282 = vrot.slane %v3263, 2
      %v3283 = vsel %vm2946, %v3280, %v3282
      %v3284 = vrot.slane %v3264, 2
      %v3285 = vsel %vm2946, %v3282, %v3284
      %v3286 = vrot.slane %v3265, 2
      %v3287 = vsel %vm2946, %v3284, %v3286
      %v3288 = vrot.slane %v3266, 2
      %v3289 = vsel %vm2946, %v3286, %v3288
      %v3290 = vrot.slane %v3267, 2
      %v3291 = vsel %vm2946, %v3288, %v3290
      %v3292 = vrot.slane %v3268, 2
      %v3293 = vsel %vm2946, %v3290, %v3292
      %v3294 = vrot.slane %v3269, 2
      %v3295 = vsel %vm2946, %v3292, %v3294
      %v3304 = vpack.c.bf16 %v3262, %v3261
      %v3305 = vpack.c.bf16 %v3283, %v3281
      %v3306 = vpack.c.bf16 %v3264, %v3263
      %v3307 = vpack.c.bf16 %v3287, %v3285
      %v3308 = vpack.c.bf16 %v3266, %v3265
      %v3309 = vpack.c.bf16 %v3291, %v3289
      %v3310 = vpack.c.bf16 %v3268, %v3267
      %v3311 = vpack.c.bf16 %v3295, %v3293
      %v3312 = vld [vmem:[%s5] sm:$0xf]
      %v3313 = vld [vmem:[%s5 + $0x4] sm:$0xf]
      %v3314 = vld [vmem:[%s5 + $0x8] sm:$0xf]
      %v3315 = vld [vmem:[%s5 + $0xc] sm:$0xf]
      %v3316 = vld [vmem:[%s5 + $0x10] sm:$0xf]
      %v3317 = vld [vmem:[%s5 + $0x14] sm:$0xf]
      %v3318 = vld [vmem:[%s5 + $0x18] sm:$0xf]
      %v3319 = vld [vmem:[%s5 + $0x1c] sm:$0xf]
      %v3320 = vld [vmem:[%s5 + $0x20] sm:$0xf]
      %v3321 = vld [vmem:[%s5 + $0x24] sm:$0xf]
      %v3322 = vld [vmem:[%s5 + $0x28] sm:$0xf]
      %v3323 = vld [vmem:[%s5 + $0x2c] sm:$0xf]
      %v3324 = vld [vmem:[%s5 + $0x30] sm:$0xf]
      %v3325 = vld [vmem:[%s5 + $0x34] sm:$0xf]
      %v3326 = vld [vmem:[%s5 + $0x38] sm:$0xf]
      %v3327 = vld [vmem:[%s5 + $0x3c] sm:$0xf]
      %v3328 = vld [vmem:[%s5 + $0x40] sm:$0xf]
      %v3329 = vld [vmem:[%s5 + $0x44] sm:$0xf]
      %v3330 = vld [vmem:[%s5 + $0x48] sm:$0xf]
      %v3331 = vld [vmem:[%s5 + $0x4c] sm:$0xf]
      %v3332 = vld [vmem:[%s5 + $0x50] sm:$0xf]
      %v3333 = vld [vmem:[%s5 + $0x54] sm:$0xf]
      %v3334 = vld [vmem:[%s5 + $0x58] sm:$0xf]
      %v3335 = vld [vmem:[%s5 + $0x5c] sm:$0xf]
      %v3336 = vld [vmem:[%s5 + $0x60] sm:$0xf]
      %v3337 = vld [vmem:[%s5 + $0x64] sm:$0xf]
      %v3338 = vld [vmem:[%s5 + $0x68] sm:$0xf]
      %v3339 = vld [vmem:[%s5 + $0x6c] sm:$0xf]
      %v3340 = vld [vmem:[%s5 + $0x70] sm:$0xf]
      %v3341 = vld [vmem:[%s5 + $0x74] sm:$0xf]
      %v3342 = vld [vmem:[%s5 + $0x78] sm:$0xf]
      %v3343 = vld [vmem:[%s5 + $0x7c] sm:$0xf]
      %v3344 = vld [vmem:[%s6] sm:$0x1]
      %v3346 = vperm.slane %v3344, 0
      %v3380 = vunpack.c.l.b16 %v3312
      %v3381 = vunpack.c.l.b16 %v3313
      %v3382 = vunpack.c.l.b16 %v3314
      %v3383 = vunpack.c.l.b16 %v3315
      %v3384 = vunpack.c.l.b16 %v3316
      %v3385 = vunpack.c.l.b16 %v3317
      %v3386 = vunpack.c.l.b16 %v3318
      %v3387 = vunpack.c.l.b16 %v3319
      %v3388 = vunpack.c.l.b16 %v3320
      %v3389 = vunpack.c.l.b16 %v3321
      %v3390 = vunpack.c.l.b16 %v3322
      %v3391 = vunpack.c.l.b16 %v3323
      %v3392 = vunpack.c.l.b16 %v3324
      %v3393 = vunpack.c.l.b16 %v3325
      %v3394 = vunpack.c.l.b16 %v3326
      %v3395 = vunpack.c.l.b16 %v3327
      %v3396 = vunpack.c.l.b16 %v3328
      %v3397 = vunpack.c.l.b16 %v3329
      %v3398 = vunpack.c.l.b16 %v3330
      %v3399 = vunpack.c.l.b16 %v3331
      %v3400 = vunpack.c.l.b16 %v3332
      %v3401 = vunpack.c.l.b16 %v3333
      %v3402 = vunpack.c.l.b16 %v3334
      %v3403 = vunpack.c.l.b16 %v3335
      %v3404 = vunpack.c.l.b16 %v3336
      %v3405 = vunpack.c.l.b16 %v3337
      %v3406 = vunpack.c.l.b16 %v3338
      %v3407 = vunpack.c.l.b16 %v3339
      %v3408 = vunpack.c.l.b16 %v3340
      %v3409 = vunpack.c.l.b16 %v3341
      %v3410 = vunpack.c.l.b16 %v3342
      %v3411 = vunpack.c.l.b16 %v3343
      %v3412 = vpack.c.b16 %v3381, %v3380
      %v3413 = vpack.c.b16 %v3383, %v3382
      %v3414 = vpack.c.b16 %v3385, %v3384
      %v3415 = vpack.c.b16 %v3387, %v3386
      %v3416 = vpack.c.b16 %v3389, %v3388
      %v3417 = vpack.c.b16 %v3391, %v3390
      %v3418 = vpack.c.b16 %v3393, %v3392
      %v3419 = vpack.c.b16 %v3395, %v3394
      %v3420 = vpack.c.b16 %v3397, %v3396
      %v3421 = vpack.c.b16 %v3399, %v3398
      %v3422 = vpack.c.b16 %v3401, %v3400
      %v3423 = vpack.c.b16 %v3403, %v3402
      %v3424 = vpack.c.b16 %v3405, %v3404
      %v3425 = vpack.c.b16 %v3407, %v3406
      %v3426 = vpack.c.b16 %v3409, %v3408
      %v3427 = vpack.c.b16 %v3411, %v3410
      %3444 = vmatpush.bf16.msra.mxu0 %v3419
      %3445 = vmatpush.bf16.msra.mxu0 %v3418
      %3446 = vmatpush.bf16.msra.mxu0 %v3417
      %3447 = vmatpush.bf16.msra.mxu0 %v3416
      %3448 = vmatpush.bf16.msra.mxu0 %v3415
      %3449 = vmatpush.bf16.msra.mxu0 %v3414
      %3450 = vmatpush.bf16.msra.mxu0 %v3413
      %3451 = vmatpush.bf16.msra.mxu0 %v3412
      %3452 = vmatmul.bf16.gmra.mxu0 %v3304
      %v3453 = vpop.f32.mrf.mxu0
      %v3454 = vadd.f32 %v3346, %v3453
      %v3455 = vpop.f32.mrf.mxu0
      %v3456 = vadd.f32 %v3346, %v3455
      %3457 = vmatmul.bf16.gmra.mxu0 %v3306
      %v3458 = vpop.f32.mrf.mxu0
      %v3459 = vadd.f32 %v3346, %v3458
      %v3460 = vpop.f32.mrf.mxu0
      %v3461 = vadd.f32 %v3346, %v3460
      %3462 = vmatmul.bf16.gmra.mxu0 %v3308
      %v3463 = vpop.f32.mrf.mxu0
      %v3464 = vadd.f32 %v3346, %v3463
      %v3465 = vpop.f32.mrf.mxu0
      %v3466 = vadd.f32 %v3346, %v3465
      %3467 = vmatmul.bf16.gmra.mxu0 %v3310
      %v3468 = vpop.f32.mrf.mxu0
      %v3469 = vadd.f32 %v3346, %v3468
      %v3470 = vpop.f32.mrf.mxu0
      %v3471 = vadd.f32 %v3346, %v3470
      %3472 = vdwg.mxu0
      %3473 = vmatpush.bf16.msra.mxu0 %v3427
      %3474 = vmatpush.bf16.msra.mxu0 %v3426
      %3475 = vmatpush.bf16.msra.mxu0 %v3425
      %3476 = vmatpush.bf16.msra.mxu0 %v3424
      %3477 = vmatpush.bf16.msra.mxu0 %v3423
      %3478 = vmatpush.bf16.msra.mxu0 %v3422
      %3479 = vmatpush.bf16.msra.mxu0 %v3421
      %3480 = vmatpush.bf16.msra.mxu0 %v3420
      %3481 = vmatmul.bf16.gmra.mxu0 %v3305
      %v3482 = vpop.f32.mrf.mxu0
      %v3483 = vadd.f32 %v3454, %v3482
      %v3484 = vpop.f32.mrf.mxu0
      %v3485 = vadd.f32 %v3456, %v3484
      %3486 = vmatmul.bf16.gmra.mxu0 %v3307
      %v3487 = vpop.f32.mrf.mxu0
      %v3488 = vadd.f32 %v3459, %v3487
      %v3489 = vpop.f32.mrf.mxu0
      %v3490 = vadd.f32 %v3461, %v3489
      %3491 = vmatmul.bf16.gmra.mxu0 %v3309
      %v3492 = vpop.f32.mrf.mxu0
      %v3493 = vadd.f32 %v3464, %v3492
      %v3494 = vpop.f32.mrf.mxu0
      %v3495 = vadd.f32 %v3466, %v3494
      %3496 = vmatmul.bf16.gmra.mxu0 %v3311
      %v3497 = vpop.f32.mrf.mxu0
      %v3498 = vadd.f32 %v3469, %v3497
      %v3499 = vpop.f32.mrf.mxu0
      %v3500 = vadd.f32 %v3471, %v3499
      %3501 = vdwg.mxu0
      %v3502 = vmax.f32 %v3483, 0.0
      %v3503 = vmax.f32 %v3485, 0.0
      %v3504 = vmax.f32 %v3488, 0.0
      %v3505 = vmax.f32 %v3490, 0.0
      %v3506 = vmax.f32 %v3493, 0.0
      %v3507 = vmax.f32 %v3495, 0.0
      %v3508 = vmax.f32 %v3498, 0.0
      %v3509 = vmax.f32 %v3500, 0.0
      %v3510 = vpack.c.bf16 %v3503, %v3502
      %v3511 = vpack.c.bf16 %v3505, %v3504
      %v3512 = vpack.c.bf16 %v3507, %v3506
      %v3513 = vpack.c.bf16 %v3509, %v3508
      %v3514 = vld [vmem:[%s7] sm:$0xf]
      %v3515 = vld [vmem:[%s7 + $0x4] sm:$0xf]
      %v3516 = vld [vmem:[%s7 + $0x8] sm:$0xf]
      %v3517 = vld [vmem:[%s7 + $0xc] sm:$0xf]
      %v3518 = vld [vmem:[%s7 + $0x10] sm:$0xf]
      %v3519 = vld [vmem:[%s7 + $0x14] sm:$0xf]
      %v3520 = vld [vmem:[%s7 + $0x18] sm:$0xf]
      %v3521 = vld [vmem:[%s7 + $0x1c] sm:$0xf]
      %v3522 = vld [vmem:[%s7 + $0x20] sm:$0xf]
      %v3523 = vld [vmem:[%s7 + $0x24] sm:$0xf]
      %v3524 = vld [vmem:[%s7 + $0x28] sm:$0xf]
      %v3525 = vld [vmem:[%s7 + $0x2c] sm:$0xf]
      %v3526 = vld [vmem:[%s7 + $0x30] sm:$0xf]
      %v3527 = vld [vmem:[%s7 + $0x34] sm:$0xf]
      %v3528 = vld [vmem:[%s7 + $0x38] sm:$0xf]
      %v3529 = vld [vmem:[%s7 + $0x3c] sm:$0xf]
      %v3530 = vld [vmem:[%s8] sm:$0x1]
      %v3532 = vperm.slane %v3530, 0
      %v3550 = vunpack.c.l.b16 %v3514
      %v3551 = vunpack.c.l.b16 %v3515
      %v3552 = vunpack.c.l.b16 %v3516
      %v3553 = vunpack.c.l.b16 %v3517
      %v3554 = vunpack.c.l.b16 %v3518
      %v3555 = vunpack.c.l.b16 %v3519
      %v3556 = vunpack.c.l.b16 %v3520
      %v3557 = vunpack.c.l.b16 %v3521
      %v3558 = vunpack.c.l.b16 %v3522
      %v3559 = vunpack.c.l.b16 %v3523
      %v3560 = vunpack.c.l.b16 %v3524
      %v3561 = vunpack.c.l.b16 %v3525
      %v3562 = vunpack.c.l.b16 %v3526
      %v3563 = vunpack.c.l.b16 %v3527
      %v3564 = vunpack.c.l.b16 %v3528
      %v3565 = vunpack.c.l.b16 %v3529
      %v3566 = vpack.c.b16 %v3551, %v3550
      %v3567 = vpack.c.b16 %v3553, %v3552
      %v3568 = vpack.c.b16 %v3555, %v3554
      %v3569 = vpack.c.b16 %v3557, %v3556
      %v3570 = vpack.c.b16 %v3559, %v3558
      %v3571 = vpack.c.b16 %v3561, %v3560
      %v3572 = vpack.c.b16 %v3563, %v3562
      %v3573 = vpack.c.b16 %v3565, %v3564
      %3582 = vmatpush.bf16.msra.mxu0 %v3573
      %3583 = vmatpush.bf16.msra.mxu0 %v3572
      %3584 = vmatpush.bf16.msra.mxu0 %v3571
      %3585 = vmatpush.bf16.msra.mxu0 %v3570
      %3586 = vmatpush.bf16.msra.mxu0 %v3569
      %3587 = vmatpush.bf16.msra.mxu0 %v3568
      %3588 = vmatpush.bf16.msra.mxu0 %v3567
      %3589 = vmatpush.bf16.msra.mxu0 %v3566
      %3590 = vmatmul.bf16.gmra.mxu0 %v3510
      %v3591 = vpop.f32.mrf.mxu0
      %v3592 = vadd.f32 %v3532, %v3591
      %v3593 = vpop.f32.mrf.mxu0
      %v3594 = vadd.f32 %v3532, %v3593
      %3595 = vmatmul.bf16.gmra.mxu0 %v3511
      %v3596 = vpop.f32.mrf.mxu0
      %v3597 = vadd.f32 %v3532, %v3596
      %v3598 = vpop.f32.mrf.mxu0
      %v3599 = vadd.f32 %v3532, %v3598
      %3600 = vmatmul.bf16.gmra.mxu0 %v3512
      %v3601 = vpop.f32.mrf.mxu0
      %v3602 = vadd.f32 %v3532, %v3601
      %v3603 = vpop.f32.mrf.mxu0
      %v3604 = vadd.f32 %v3532, %v3603
      %3605 = vmatmul.bf16.gmra.mxu0 %v3513
      %v3606 = vpop.f32.mrf.mxu0
      %v3607 = vadd.f32 %v3532, %v3606
      %v3608 = vpop.f32.mrf.mxu0
      %v3609 = vadd.f32 %v3532, %v3608
      %3610 = vdwg.mxu0
      %3611 = vmax.xlane.f32.xlu0 %v3592
      %v3612 = vpop.xlane.xlu0 %3611
      %3613 = vmax.xlane.f32.xlu0 %v3594
      %v3614 = vpop.xlane.xlu0 %3613
      %3615 = vmax.xlane.f32.xlu0 %v3597
      %v3616 = vpop.xlane.xlu0 %3615
      %3617 = vmax.xlane.f32.xlu0 %v3599
      %v3618 = vpop.xlane.xlu0 %3617
      %3619 = vmax.xlane.f32.xlu0 %v3602
      %v3620 = vpop.xlane.xlu0 %3619
      %3621 = vmax.xlane.f32.xlu0 %v3604
      %v3622 = vpop.xlane.xlu0 %3621
      %3623 = vmax.xlane.f32.xlu0 %v3607
      %v3624 = vpop.xlane.xlu0 %3623
      %3625 = vmax.xlane.f32.xlu0 %v3609
      %v3626 = vpop.xlane.xlu0 %3625
      %v3627 = vsub.f32 %v3592, %v3612
      %v3628 = vsub.f32 %v3594, %v3614
      %v3629 = vsub.f32 %v3597, %v3616
      %v3630 = vsub.f32 %v3599, %v3618
      %v3631 = vsub.f32 %v3602, %v3620
      %v3632 = vsub.f32 %v3604, %v3622
      %v3633 = vsub.f32 %v3607, %v3624
      %v3634 = vsub.f32 %v3609, %v3626
      %v3635 = vmul.f32 %v3627, 1.442695
      %v3636 = vpow.pop %v3635
      %v3637 = vmul.f32 %v3628, 1.442695
      %v3638 = vpow.pop %v3637
      %v3639 = vmul.f32 %v3629, 1.442695
      %v3640 = vpow.pop %v3639
      %v3641 = vmul.f32 %v3630, 1.442695
      %v3642 = vpow.pop %v3641
      %v3643 = vmul.f32 %v3631, 1.442695
      %v3644 = vpow.pop %v3643
      %v3645 = vmul.f32 %v3632, 1.442695
      %v3646 = vpow.pop %v3645
      %v3647 = vmul.f32 %v3633, 1.442695
      %v3648 = vpow.pop %v3647
      %v3649 = vmul.f32 %v3634, 1.442695
      %v3650 = vpow.pop %v3649
      %3651 = vadd.xlane.f32.xlu0 %v3636
      %v3652 = vpop.xlane.xlu0 %3651
      %3653 = vadd.xlane.f32.xlu0 %v3638
      %v3654 = vpop.xlane.xlu0 %3653
      %3655 = vadd.xlane.f32.xlu0 %v3640
      %v3656 = vpop.xlane.xlu0 %3655
      %3657 = vadd.xlane.f32.xlu0 %v3642
      %v3658 = vpop.xlane.xlu0 %3657
      %3659 = vadd.xlane.f32.xlu0 %v3644
      %v3660 = vpop.xlane.xlu0 %3659
      %3661 = vadd.xlane.f32.xlu0 %v3646
      %v3662 = vpop.xlane.xlu0 %3661
      %3663 = vadd.xlane.f32.xlu0 %v3648
      %v3664 = vpop.xlane.xlu0 %3663
      %3665 = vadd.xlane.f32.xlu0 %v3650
      %v3666 = vpop.xlane.xlu0 %3665
      %v3667 = vlog2.pop %v3652
      %v3668 = vmul.f32 %v3667, 0.6931472
      %v3669 = vlog2.pop %v3654
      %v3670 = vmul.f32 %v3669, 0.6931472
      %v3671 = vlog2.pop %v3656
      %v3672 = vmul.f32 %v3671, 0.6931472
      %v3673 = vlog2.pop %v3658
      %v3674 = vmul.f32 %v3673, 0.6931472
      %v3675 = vlog2.pop %v3660
      %v3676 = vmul.f32 %v3675, 0.6931472
      %v3677 = vlog2.pop %v3662
      %v3678 = vmul.f32 %v3677, 0.6931472
      %v3679 = vlog2.pop %v3664
      %v3680 = vmul.f32 %v3679, 0.6931472
      %v3681 = vlog2.pop %v3666
      %v3682 = vmul.f32 %v3681, 0.6931472
      %v3683 = vsub.f32 %v3627, %v3668
      %v3684 = vsub.f32 %v3628, %v3670
      %v3685 = vsub.f32 %v3629, %v3672
      %v3686 = vsub.f32 %v3630, %v3674
      %v3687 = vsub.f32 %v3631, %v3676
      %v3688 = vsub.f32 %v3632, %v3678
      %v3689 = vsub.f32 %v3633, %v3680
      %v3690 = vsub.f32 %v3634, %v3682
      %3691 = vst [vmem:[%s337] sm:$0xff] %v3683
      %3692 = vst [vmem:[%s337 + $0x8] sm:$0xff] %v3684
      %3693 = vst [vmem:[%s337 + $0x10] sm:$0xff] %v3685
      %3694 = vst [vmem:[%s337 + $0x18] sm:$0xff] %v3686
      %3695 = vst [vmem:[%s337 + $0x20] sm:$0xff] %v3687
      %3696 = vst [vmem:[%s337 + $0x28] sm:$0xff] %v3688
      %3697 = vst [vmem:[%s337 + $0x30] sm:$0xff] %v3689
      %3698 = vst [vmem:[%s337 + $0x38] sm:$0xff] %v3690
      %s3699 = smul.u32 8, %s20
      %p3700 = scmp.lt.s32.totalorder %s3699, 15
      %s3701 = scalar_select %p3700, %s3699, 15
      %s3702 = smul.addr %s3701, 8
      %s3703 = scalar_lea.vmem %s9, %s3702
      // Predicated region
      $region57: #{cnn_mnist_forward.1} parent=55 // pred_check
        %p3704 = pneg %p232
      $region58: #{cnn_mnist_forward.1} parent=55 // pred_check_branch
        %3706 = sbr.rel (%p3704) target = $region60
      $region59: #{cnn_mnist_forward.1} parent=55 // pred_region
        %s3707 = smul.u32 8, %s20
      $region60: #{cnn_mnist_forward.1} parent=55 // pred_fallthru
        _
    $region56: #{cnn_mnist_forward.1} parent=5 // pred_fallthru
      _
    %p3708 = scmp.le.s32.totalorder 2, %s15
    // Predicated region
    $region61: #{cnn_mnist_forward.1} parent=5 // pred_check
      %p3709 = pneg %p3708
    $region62: #{cnn_mnist_forward.1} parent=5 // pred_check_branch
      %3711 = sbr.rel (%p3709) target = $region64
    $region63: #{cnn_mnist_forward.1} parent=5 // pred_region
      %s3712 = ssub.s32 %s15, 2
      // Predicated region
      $region65: #{cnn_mnist_forward.1} parent=63 // pred_check
        %p3713 = pneg %p238
      $region66: #{cnn_mnist_forward.1} parent=63 // pred_check_branch
        %3715 = sbr.rel (%p3713) target = $region68
      $region67: #{cnn_mnist_forward.1} parent=63 // pred_region
        %s3716 = smul.u32 8, %s21
        %p3717 = scmp.lt.s32.totalorder %s3716, 15
        %s3718 = scalar_select %p3717, %s3716, 15
        %s3719 = smul.addr %s3718, 8
        %s3720 = scalar_lea.vmem %s9, %s3719
      $region68: #{cnn_mnist_forward.1} parent=63 // pred_fallthru
        _
    $region64: #{cnn_mnist_forward.1} parent=5 // pred_fallthru
      _
  $region6: #{cnn_mnist_forward.1} parent=0 // loop_footer
    %s19 = sadd.s32 1, %s15
  $region7: #{cnn_mnist_forward.1} parent=0 // loop_footer_branch
    %14 = sbr.rel target = $region3
  $region8: #{cnn_mnist_forward.1} parent=0 // loop_exit
    _

</llo_original>
